<compile_context>
chip_gen: v5e
topology: v5e:2x2
jax: 0.10.0
libtpu: 0.0.40
codegen_flags: <defaults>
</compile_context>

<pallas_src>
import functools

import jax
import jax.numpy as jnp
from jax.experimental import pallas as pl

CIN_PAD = 8  # zero-pad input channels so layer-1 im2col K = 4*4*8 = 128 lanes


# ---------------------------------------------------------------------------
# Pallas kernels (each call = one conv layer, whole layer resident in VMEM)
# ---------------------------------------------------------------------------
def _conv_bias_act_kernel(p_ref, w_ref, b_ref, o_ref, *, act):
    # p_ref: (M, K) bf16   w_ref: (K, Cout) bf16
    # b_ref: (1, Cout) f32 o_ref: (M, Cout) bf16 / f32
    y = jnp.dot(p_ref[...], w_ref[...], preferred_element_type=jnp.float32)
    y = y + b_ref[...]
    if act == "leaky":
        y = jnp.where(y > 0, y, 0.2 * y)
    else:  # sigmoid -- exact reciprocal (output may feed a BCE loss)
        y = 1.0 / (1.0 + jnp.exp(-y))
    o_ref[...] = y.astype(o_ref.dtype)


def _conv_bn_leaky_kernel(p_ref, w_ref, g_ref, bt_ref, o_ref):
    # Fused Conv(no bias) + BatchNorm2d (training-mode batch stats, biased
    # variance, eps=1e-5) + LeakyReLU(0.2).  Needs all M rows in one block so
    # the statistics are global; variance is two-pass (shifted) for stability.
    # p_ref: (M, K) bf16   w_ref: (K, Cout) bf16
    # g_ref / bt_ref: (1, Cout) f32   o_ref: (M, Cout) bf16
    y = jnp.dot(p_ref[...], w_ref[...], preferred_element_type=jnp.float32)
    inv_m = 1.0 / y.shape[0]
    mean = jnp.sum(y, axis=0, keepdims=True) * inv_m
    d = y - mean
    var = jnp.sum(d * d, axis=0, keepdims=True) * inv_m       # biased (torch)
    z = d * (g_ref[...] * jax.lax.rsqrt(var + 1e-5)) + bt_ref[...]
    o_ref[...] = jnp.where(z > 0, z, 0.2 * z).astype(o_ref.dtype)


# ---------------------------------------------------------------------------
# Kernel wrappers: one pallas_call, single full-array VMEM block per operand
# ---------------------------------------------------------------------------
def _full_block_call(kernel, patches, w_mat, row_params, out_dtype):
    M, K = patches.shape
    Cout = w_mat.shape[1]
    in_specs = [pl.BlockSpec((M, K), lambda i: (0, 0)),
                pl.BlockSpec((K, Cout), lambda i: (0, 0))]
    in_specs += [pl.BlockSpec((1, Cout), lambda i: (0, 0)) for _ in row_params]
    return pl.pallas_call(
        kernel,
        out_shape=jax.ShapeDtypeStruct((M, Cout), out_dtype),
        grid=(1,),
        in_specs=in_specs,
        out_specs=pl.BlockSpec((M, Cout), lambda i: (0, 0)),
    )(patches, w_mat, *row_params)


def conv_bias_act(patches, w_mat, bias, act, out_dtype):
    kernel = functools.partial(_conv_bias_act_kernel, act=act)
    return _full_block_call(kernel, patches, w_mat, (bias,), out_dtype)


def conv_bn_leaky(patches, w_mat, gamma, beta):
    return _full_block_call(_conv_bn_leaky_kernel, patches, w_mat,
                            (gamma, beta), jnp.bfloat16)


# ---------------------------------------------------------------------------
# JAX glue: im2col + parameter setup + full forward
# ---------------------------------------------------------------------------
def im2col(x_nhwc, k, stride, pad):
    """(N,H,W,C) -> (N*Ho*Wo, k*k*C) patches; K index = (i*k + j)*C + c."""
    N, H, W, C = x_nhwc.shape
    xp = jnp.pad(x_nhwc, ((0, 0), (pad, pad), (pad, pad), (0, 0)))
    Ho = (H + 2 * pad - k) // stride + 1
    Wo = (W + 2 * pad - k) // stride + 1
    taps = [xp[:, i:i + stride * Ho:stride, j:j + stride * Wo:stride, :]
            for i in range(k) for j in range(k)]
    patches = jnp.concatenate(taps, axis=-1)            # (N, Ho, Wo, k*k*C)
    return patches.reshape(N * Ho * Wo, k * k * C), Ho, Wo


def _conv_w(key, cout, cin, k, cin_pad=None):
    # DCGAN-style N(0, 0.02) init in PyTorch layout (Cout, Cin, kH, kW),
    # re-laid out to the (kH, kW, Cin) flattening used by im2col above.
    w = 0.02 * jax.random.normal(key, (cout, cin, k, k), jnp.float32)
    if cin_pad is not None and cin_pad != cin:
        w = jnp.pad(w, ((0, 0), (0, cin_pad - cin), (0, 0), (0, 0)))
        cin = cin_pad
    w = jnp.transpose(w, (2, 3, 1, 0)).reshape(k * k * cin, cout)
    return w.astype(jnp.bfloat16)


def init_params(key, channels_img, features_d):
    ks = jax.random.split(key, 7)
    fd = features_d
    p = {}
    # layer 1: Conv2d(channels_img, fd, 4, 2, 1) + bias (Cin zero-padded)
    p["w1"] = _conv_w(ks[0], fd, channels_img, 4, cin_pad=CIN_PAD)
    p["b1"] = 0.01 * jax.random.normal(ks[1], (1, fd), jnp.float32)
    # blocks 2-4: Conv2d(no bias) + BatchNorm2d(gamma=1, beta=0)
    cins = [fd, fd * 2, fd * 4]
    couts = [fd * 2, fd * 4, fd * 8]
    for idx, (ci, co, wk) in enumerate(zip(cins, couts, ks[2:5]), start=2):
        p[f"w{idx}"] = _conv_w(wk, co, ci, 4)
        p[f"g{idx}"] = jnp.ones((1, co), jnp.float32)
        p[f"beta{idx}"] = jnp.zeros((1, co), jnp.float32)
    # layer 5: Conv2d(fd*8, 1, 4, 2, 0) + bias
    p["w5"] = _conv_w(ks[5], 1, fd * 8, 4)
    p["b5"] = 0.01 * jax.random.normal(ks[6], (1, 1), jnp.float32)
    return p


def discriminator_forward(x_nchw, params):
    x = jnp.transpose(x_nchw, (0, 2, 3, 1))                    # NCHW -> NHWC
    N, H, W, C = x.shape
    x = jnp.pad(x, ((0, 0), (0, 0), (0, 0), (0, CIN_PAD - C)))  # lane-dense K
    x = x.astype(jnp.bfloat16)

    # layer 1: Conv(k4,s2,p1) + bias + LeakyReLU(0.2)
    p, Ho, Wo = im2col(x, 4, 2, 1)
    y = conv_bias_act(p, params["w1"], params["b1"], "leaky", jnp.bfloat16)
    x = y.reshape(N, Ho, Wo, -1)

    # blocks 2-4: fused Conv(no bias) + BatchNorm2d(batch stats) + LeakyReLU
    for i in (2, 3, 4):
        p, Ho, Wo = im2col(x, 4, 2, 1)
        y = conv_bn_leaky(p, params[f"w{i}"], params[f"g{i}"],
                          params[f"beta{i}"])
        x = y.reshape(N, Ho, Wo, -1)

    # layer 5: Conv(k4,s2,p0) + bias + Sigmoid
    p, Ho, Wo = im2col(x, 4, 2, 0)
    y = conv_bias_act(p, params["w5"], params["b5"], "sigmoid", jnp.float32)
    return y.reshape(N, 1, Ho, Wo)                       # NCHW: (N, 1, 1, 1)


if __name__ == "__main__":
    key = jax.random.PRNGKey(0)
    k_x, k_p = jax.random.split(key)

    channels_img, features_d = 3, 8
    batch = 2
    # DCGAN discriminator requires 64x64 spatial input (64->32->16->8->4->1)
    x = jax.random.normal(k_x, (batch, channels_img, 64, 64), jnp.float32)

    params = init_params(k_p, channels_img, features_d)

    fwd = jax.jit(discriminator_forward)
    out = jax.block_until_ready(fwd(x, params))

    assert out.shape == (batch, 1, 1, 1), out.shape
    assert bool(jnp.all(jnp.isfinite(out)))
    assert bool(jnp.all((out >= 0.0) & (out <= 1.0)))  # sigmoid range
    print("KERNEL_OK")
</pallas_src>

<mosaic_0001>
module attributes {stable_mosaic.version = 11 : i64} {
  func.func @_conv_bias_act_kernel(%arg0: i32, %arg1: memref<2048x128xbf16, #tpu.memory_space<vmem>>, %arg2: memref<128x8xbf16, #tpu.memory_space<vmem>>, %arg3: memref<1x8xf32, #tpu.memory_space<vmem>>, %arg4: memref<2048x8xbf16, #tpu.memory_space<vmem>>) attributes {dimension_semantics = [#tpu.dimension_semantics<arbitrary>], iteration_bounds = array<i64: 1>, scalar_prefetch = 0 : i64, scratch_operands = 0 : i64, tpu.core_type = #tpu.core_type<tc>, window_params = [{pipeline_mode = #tpu.pipeline_mode<synchronous>, transform_indices = @transform_0, window_bounds = array<i64: 2048, 128>}, {pipeline_mode = #tpu.pipeline_mode<synchronous>, transform_indices = @transform_1, window_bounds = array<i64: 128, 8>}, {pipeline_mode = #tpu.pipeline_mode<synchronous>, transform_indices = @transform_2, window_bounds = array<i64: 1, 8>}, {pipeline_mode = #tpu.pipeline_mode<synchronous>, transform_indices = @transform_3, window_bounds = array<i64: 2048, 8>}]} {
    %c0 = arith.constant 0 : index
    %c0_0 = arith.constant 0 : index
    %0 = vector.load %arg1[%c0, %c0_0] : memref<2048x128xbf16, #tpu.memory_space<vmem>>, vector<2048x128xbf16>
    %c0_1 = arith.constant 0 : index
    %c0_2 = arith.constant 0 : index
    %1 = vector.load %arg2[%c0_1, %c0_2] : memref<128x8xbf16, #tpu.memory_space<vmem>>, vector<128x8xbf16>
    %cst = arith.constant dense<0.000000e+00> : vector<2048x8xf32>
    %2 = tpu.matmul %0, %1, %cst {dimension_numbers = #tpu.dot_dimension_numbers<[1], [0], [0], [1], [0, 0, 1, 1], [], []>} : vector<2048x128xbf16>, vector<128x8xbf16>, vector<2048x8xf32> -> vector<2048x8xf32>
    %c0_3 = arith.constant 0 : index
    %c0_4 = arith.constant 0 : index
    %3 = vector.load %arg3[%c0_3, %c0_4] : memref<1x8xf32, #tpu.memory_space<vmem>>, vector<1x8xf32>
    %4 = vector.broadcast %3 : vector<1x8xf32> to vector<2048x8xf32>
    %5 = arith.addf %2, %4 : vector<2048x8xf32>
    %cst_5 = arith.constant 0.000000e+00 : f32
    %6 = vector.broadcast %cst_5 : f32 to vector<2048x8xf32>
    %7 = arith.cmpf ogt, %5, %6 : vector<2048x8xf32>
    %cst_6 = arith.constant 2.000000e-01 : f32
    %8 = vector.broadcast %cst_6 : f32 to vector<2048x8xf32>
    %9 = arith.mulf %8, %5 : vector<2048x8xf32>
    %10 = arith.select %7, %5, %9 : vector<2048x8xi1>, vector<2048x8xf32>
    %11 = arith.truncf %10 : vector<2048x8xf32> to vector<2048x8xbf16>
    %c0_7 = arith.constant 0 : index
    %c0_8 = arith.constant 0 : index
    %12 = vector.load %arg4[%c0_7, %c0_8] : memref<2048x8xbf16, #tpu.memory_space<vmem>>, vector<2048x8xbf16>
    tpu.vector_store %arg4[%c0_7, %c0_8], %11 {strides = array<i32>} : memref<2048x8xbf16, #tpu.memory_space<vmem>>, vector<2048x8xbf16>,
    return
  }
  func.func @transform_0(%arg0: i32) -> (i32, i32) {
    %c0_i32 = arith.constant 0 : i32
    %c0_i32_0 = arith.constant 0 : i32
    %c0_i32_1 = arith.constant 0 : i32
    return %c0_i32, %c0_i32_0 : i32, i32
  }
  func.func @transform_1(%arg0: i32) -> (i32, i32) {
    %c0_i32 = arith.constant 0 : i32
    %c0_i32_0 = arith.constant 0 : i32
    %c0_i32_1 = arith.constant 0 : i32
    return %c0_i32, %c0_i32_0 : i32, i32
  }
  func.func @transform_2(%arg0: i32) -> (i32, i32) {
    %c0_i32 = arith.constant 0 : i32
    %c0_i32_0 = arith.constant 0 : i32
    %c0_i32_1 = arith.constant 0 : i32
    return %c0_i32, %c0_i32_0 : i32, i32
  }
  func.func @transform_3(%arg0: i32) -> (i32, i32) {
    %c0_i32 = arith.constant 0 : i32
    %c0_i32_0 = arith.constant 0 : i32
    %c0_i32_1 = arith.constant 0 : i32
    return %c0_i32, %c0_i32_0 : i32, i32
  }
}

module attributes {stable_mosaic.version = 11 : i64} {
  func.func @_conv_bn_leaky_kernel(%arg0: i32, %arg1: memref<512x128xbf16, #tpu.memory_space<vmem>>, %arg2: memref<128x16xbf16, #tpu.memory_space<vmem>>, %arg3: memref<1x16xf32, #tpu.memory_space<vmem>>, %arg4: memref<1x16xf32, #tpu.memory_space<vmem>>, %arg5: memref<512x16xbf16, #tpu.memory_space<vmem>>) attributes {dimension_semantics = [#tpu.dimension_semantics<arbitrary>], iteration_bounds = array<i64: 1>, scalar_prefetch = 0 : i64, scratch_operands = 0 : i64, tpu.core_type = #tpu.core_type<tc>, window_params = [{pipeline_mode = #tpu.pipeline_mode<synchronous>, transform_indices = @transform_0, window_bounds = array<i64: 512, 128>}, {pipeline_mode = #tpu.pipeline_mode<synchronous>, transform_indices = @transform_1, window_bounds = array<i64: 128, 16>}, {pipeline_mode = #tpu.pipeline_mode<synchronous>, transform_indices = @transform_2, window_bounds = array<i64: 1, 16>}, {pipeline_mode = #tpu.pipeline_mode<synchronous>, transform_indices = @transform_3, window_bounds = array<i64: 1, 16>}, {pipeline_mode = #tpu.pipeline_mode<synchronous>, transform_indices = @transform_4, window_bounds = array<i64: 512, 16>}]} {
    %c0 = arith.constant 0 : index
    %c0_0 = arith.constant 0 : index
    %0 = vector.load %arg1[%c0, %c0_0] : memref<512x128xbf16, #tpu.memory_space<vmem>>, vector<512x128xbf16>
    %c0_1 = arith.constant 0 : index
    %c0_2 = arith.constant 0 : index
    %1 = vector.load %arg2[%c0_1, %c0_2] : memref<128x16xbf16, #tpu.memory_space<vmem>>, vector<128x16xbf16>
    %cst = arith.constant dense<0.000000e+00> : vector<512x16xf32>
    %2 = tpu.matmul %0, %1, %cst {dimension_numbers = #tpu.dot_dimension_numbers<[1], [0], [0], [1], [0, 0, 1, 1], [], []>} : vector<512x128xbf16>, vector<128x16xbf16>, vector<512x16xf32> -> vector<512x16xf32>
    %cst_3 = arith.constant dense<0.000000e+00> : vector<16xf32>
    %3 = vector.multi_reduction <add>, %2, %cst_3 [0] : vector<512x16xf32> to vector<16xf32>
    %4 = vector.shape_cast %3 : vector<16xf32> to vector<1x16xf32>
    %cst_4 = arith.constant 0.001953125 : f32
    %5 = vector.broadcast %cst_4 : f32 to vector<1x16xf32>
    %6 = arith.mulf %4, %5 : vector<1x16xf32>
    %7 = vector.broadcast %6 : vector<1x16xf32> to vector<512x16xf32>
    %8 = arith.subf %2, %7 : vector<512x16xf32>
    %9 = arith.mulf %8, %8 : vector<512x16xf32>
    %cst_5 = arith.constant dense<0.000000e+00> : vector<16xf32>
    %10 = vector.multi_reduction <add>, %9, %cst_5 [0] : vector<512x16xf32> to vector<16xf32>
    %11 = vector.shape_cast %10 : vector<16xf32> to vector<1x16xf32>
    %cst_6 = arith.constant 0.001953125 : f32
    %12 = vector.broadcast %cst_6 : f32 to vector<1x16xf32>
    %13 = arith.mulf %11, %12 : vector<1x16xf32>
    %c0_7 = arith.constant 0 : index
    %c0_8 = arith.constant 0 : index
    %14 = vector.load %arg3[%c0_7, %c0_8] : memref<1x16xf32, #tpu.memory_space<vmem>>, vector<1x16xf32>
    %cst_9 = arith.constant 9.99999974E-6 : f32
    %15 = vector.broadcast %cst_9 : f32 to vector<1x16xf32>
    %16 = arith.addf %13, %15 : vector<1x16xf32>
    %17 = math.rsqrt %16 : vector<1x16xf32>
    %18 = arith.mulf %14, %17 : vector<1x16xf32>
    %19 = vector.broadcast %18 : vector<1x16xf32> to vector<512x16xf32>
    %20 = arith.mulf %8, %19 : vector<512x16xf32>
    %c0_10 = arith.constant 0 : index
    %c0_11 = arith.constant 0 : index
    %21 = vector.load %arg4[%c0_10, %c0_11] : memref<1x16xf32, #tpu.memory_space<vmem>>, vector<1x16xf32>
    %22 = vector.broadcast %21 : vector<1x16xf32> to vector<512x16xf32>
    %23 = arith.addf %20, %22 : vector<512x16xf32>
    %cst_12 = arith.constant 0.000000e+00 : f32
    %24 = vector.broadcast %cst_12 : f32 to vector<512x16xf32>
    %25 = arith.cmpf ogt, %23, %24 : vector<512x16xf32>
    %cst_13 = arith.constant 2.000000e-01 : f32
    %26 = vector.broadcast %cst_13 : f32 to vector<512x16xf32>
    %27 = arith.mulf %26, %23 : vector<512x16xf32>
    %28 = arith.select %25, %23, %27 : vector<512x16xi1>, vector<512x16xf32>
    %29 = arith.truncf %28 : vector<512x16xf32> to vector<512x16xbf16>
    %c0_14 = arith.constant 0 : index
    %c0_15 = arith.constant 0 : index
    %30 = vector.load %arg5[%c0_14, %c0_15] : memref<512x16xbf16, #tpu.memory_space<vmem>>, vector<512x16xbf16>
    tpu.vector_store %arg5[%c0_14, %c0_15], %29 {strides = array<i32>} : memref<512x16xbf16, #tpu.memory_space<vmem>>, vector<512x16xbf16>,
    return
  }
  func.func @transform_0(%arg0: i32) -> (i32, i32) {
    %c0_i32 = arith.constant 0 : i32
    %c0_i32_0 = arith.constant 0 : i32
    %c0_i32_1 = arith.constant 0 : i32
    return %c0_i32, %c0_i32_0 : i32, i32
  }
  func.func @transform_1(%arg0: i32) -> (i32, i32) {
    %c0_i32 = arith.constant 0 : i32
    %c0_i32_0 = arith.constant 0 : i32
    %c0_i32_1 = arith.constant 0 : i32
    return %c0_i32, %c0_i32_0 : i32, i32
  }
  func.func @transform_2(%arg0: i32) -> (i32, i32) {
    %c0_i32 = arith.constant 0 : i32
    %c0_i32_0 = arith.constant 0 : i32
    %c0_i32_1 = arith.constant 0 : i32
    return %c0_i32, %c0_i32_0 : i32, i32
  }
  func.func @transform_3(%arg0: i32) -> (i32, i32) {
    %c0_i32 = arith.constant 0 : i32
    %c0_i32_0 = arith.constant 0 : i32
    %c0_i32_1 = arith.constant 0 : i32
    return %c0_i32, %c0_i32_0 : i32, i32
  }
  func.func @transform_4(%arg0: i32) -> (i32, i32) {
    %c0_i32 = arith.constant 0 : i32
    %c0_i32_0 = arith.constant 0 : i32
    %c0_i32_1 = arith.constant 0 : i32
    return %c0_i32, %c0_i32_0 : i32, i32
  }
}

module attributes {stable_mosaic.version = 11 : i64} {
  func.func @_conv_bn_leaky_kernel(%arg0: i32, %arg1: memref<128x256xbf16, #tpu.memory_space<vmem>>, %arg2: memref<256x32xbf16, #tpu.memory_space<vmem>>, %arg3: memref<1x32xf32, #tpu.memory_space<vmem>>, %arg4: memref<1x32xf32, #tpu.memory_space<vmem>>, %arg5: memref<128x32xbf16, #tpu.memory_space<vmem>>) attributes {dimension_semantics = [#tpu.dimension_semantics<arbitrary>], iteration_bounds = array<i64: 1>, scalar_prefetch = 0 : i64, scratch_operands = 0 : i64, tpu.core_type = #tpu.core_type<tc>, window_params = [{pipeline_mode = #tpu.pipeline_mode<synchronous>, transform_indices = @transform_0, window_bounds = array<i64: 128, 256>}, {pipeline_mode = #tpu.pipeline_mode<synchronous>, transform_indices = @transform_1, window_bounds = array<i64: 256, 32>}, {pipeline_mode = #tpu.pipeline_mode<synchronous>, transform_indices = @transform_2, window_bounds = array<i64: 1, 32>}, {pipeline_mode = #tpu.pipeline_mode<synchronous>, transform_indices = @transform_3, window_bounds = array<i64: 1, 32>}, {pipeline_mode = #tpu.pipeline_mode<synchronous>, transform_indices = @transform_4, window_bounds = array<i64: 128, 32>}]} {
    %c0 = arith.constant 0 : index
    %c0_0 = arith.constant 0 : index
    %0 = vector.load %arg1[%c0, %c0_0] : memref<128x256xbf16, #tpu.memory_space<vmem>>, vector<128x256xbf16>
    %c0_1 = arith.constant 0 : index
    %c0_2 = arith.constant 0 : index
    %1 = vector.load %arg2[%c0_1, %c0_2] : memref<256x32xbf16, #tpu.memory_space<vmem>>, vector<256x32xbf16>
    %cst = arith.constant dense<0.000000e+00> : vector<128x32xf32>
    %2 = tpu.matmul %0, %1, %cst {dimension_numbers = #tpu.dot_dimension_numbers<[1], [0], [0], [1], [0, 0, 1, 1], [], []>} : vector<128x256xbf16>, vector<256x32xbf16>, vector<128x32xf32> -> vector<128x32xf32>
    %cst_3 = arith.constant dense<0.000000e+00> : vector<32xf32>
    %3 = vector.multi_reduction <add>, %2, %cst_3 [0] : vector<128x32xf32> to vector<32xf32>
    %4 = vector.shape_cast %3 : vector<32xf32> to vector<1x32xf32>
    %cst_4 = arith.constant 7.812500e-03 : f32
    %5 = vector.broadcast %cst_4 : f32 to vector<1x32xf32>
    %6 = arith.mulf %4, %5 : vector<1x32xf32>
    %7 = vector.broadcast %6 : vector<1x32xf32> to vector<128x32xf32>
    %8 = arith.subf %2, %7 : vector<128x32xf32>
    %9 = arith.mulf %8, %8 : vector<128x32xf32>
    %cst_5 = arith.constant dense<0.000000e+00> : vector<32xf32>
    %10 = vector.multi_reduction <add>, %9, %cst_5 [0] : vector<128x32xf32> to vector<32xf32>
    %11 = vector.shape_cast %10 : vector<32xf32> to vector<1x32xf32>
    %cst_6 = arith.constant 7.812500e-03 : f32
    %12 = vector.broadcast %cst_6 : f32 to vector<1x32xf32>
    %13 = arith.mulf %11, %12 : vector<1x32xf32>
    %c0_7 = arith.constant 0 : index
    %c0_8 = arith.constant 0 : index
    %14 = vector.load %arg3[%c0_7, %c0_8] : memref<1x32xf32, #tpu.memory_space<vmem>>, vector<1x32xf32>
    %cst_9 = arith.constant 9.99999974E-6 : f32
    %15 = vector.broadcast %cst_9 : f32 to vector<1x32xf32>
    %16 = arith.addf %13, %15 : vector<1x32xf32>
    %17 = math.rsqrt %16 : vector<1x32xf32>
    %18 = arith.mulf %14, %17 : vector<1x32xf32>
    %19 = vector.broadcast %18 : vector<1x32xf32> to vector<128x32xf32>
    %20 = arith.mulf %8, %19 : vector<128x32xf32>
    %c0_10 = arith.constant 0 : index
    %c0_11 = arith.constant 0 : index
    %21 = vector.load %arg4[%c0_10, %c0_11] : memref<1x32xf32, #tpu.memory_space<vmem>>, vector<1x32xf32>
    %22 = vector.broadcast %21 : vector<1x32xf32> to vector<128x32xf32>
    %23 = arith.addf %20, %22 : vector<128x32xf32>
    %cst_12 = arith.constant 0.000000e+00 : f32
    %24 = vector.broadcast %cst_12 : f32 to vector<128x32xf32>
    %25 = arith.cmpf ogt, %23, %24 : vector<128x32xf32>
    %cst_13 = arith.constant 2.000000e-01 : f32
    %26 = vector.broadcast %cst_13 : f32 to vector<128x32xf32>
    %27 = arith.mulf %26, %23 : vector<128x32xf32>
    %28 = arith.select %25, %23, %27 : vector<128x32xi1>, vector<128x32xf32>
    %29 = arith.truncf %28 : vector<128x32xf32> to vector<128x32xbf16>
    %c0_14 = arith.constant 0 : index
    %c0_15 = arith.constant 0 : index
    %30 = vector.load %arg5[%c0_14, %c0_15] : memref<128x32xbf16, #tpu.memory_space<vmem>>, vector<128x32xbf16>
    tpu.vector_store %arg5[%c0_14, %c0_15], %29 {strides = array<i32>} : memref<128x32xbf16, #tpu.memory_space<vmem>>, vector<128x32xbf16>,
    return
  }
  func.func @transform_0(%arg0: i32) -> (i32, i32) {
    %c0_i32 = arith.constant 0 : i32
    %c0_i32_0 = arith.constant 0 : i32
    %c0_i32_1 = arith.constant 0 : i32
    return %c0_i32, %c0_i32_0 : i32, i32
  }
  func.func @transform_1(%arg0: i32) -> (i32, i32) {
    %c0_i32 = arith.constant 0 : i32
    %c0_i32_0 = arith.constant 0 : i32
    %c0_i32_1 = arith.constant 0 : i32
    return %c0_i32, %c0_i32_0 : i32, i32
  }
  func.func @transform_2(%arg0: i32) -> (i32, i32) {
    %c0_i32 = arith.constant 0 : i32
    %c0_i32_0 = arith.constant 0 : i32
    %c0_i32_1 = arith.constant 0 : i32
    return %c0_i32, %c0_i32_0 : i32, i32
  }
  func.func @transform_3(%arg0: i32) -> (i32, i32) {
    %c0_i32 = arith.constant 0 : i32
    %c0_i32_0 = arith.constant 0 : i32
    %c0_i32_1 = arith.constant 0 : i32
    return %c0_i32, %c0_i32_0 : i32, i32
  }
  func.func @transform_4(%arg0: i32) -> (i32, i32) {
    %c0_i32 = arith.constant 0 : i32
    %c0_i32_0 = arith.constant 0 : i32
    %c0_i32_1 = arith.constant 0 : i32
    return %c0_i32, %c0_i32_0 : i32, i32
  }
}

module attributes {stable_mosaic.version = 11 : i64} {
  func.func @_conv_bn_leaky_kernel(%arg0: i32, %arg1: memref<32x512xbf16, #tpu.memory_space<vmem>>, %arg2: memref<512x64xbf16, #tpu.memory_space<vmem>>, %arg3: memref<1x64xf32, #tpu.memory_space<vmem>>, %arg4: memref<1x64xf32, #tpu.memory_space<vmem>>, %arg5: memref<32x64xbf16, #tpu.memory_space<vmem>>) attributes {dimension_semantics = [#tpu.dimension_semantics<arbitrary>], iteration_bounds = array<i64: 1>, scalar_prefetch = 0 : i64, scratch_operands = 0 : i64, tpu.core_type = #tpu.core_type<tc>, window_params = [{pipeline_mode = #tpu.pipeline_mode<synchronous>, transform_indices = @transform_0, window_bounds = array<i64: 32, 512>}, {pipeline_mode = #tpu.pipeline_mode<synchronous>, transform_indices = @transform_1, window_bounds = array<i64: 512, 64>}, {pipeline_mode = #tpu.pipeline_mode<synchronous>, transform_indices = @transform_2, window_bounds = array<i64: 1, 64>}, {pipeline_mode = #tpu.pipeline_mode<synchronous>, transform_indices = @transform_3, window_bounds = array<i64: 1, 64>}, {pipeline_mode = #tpu.pipeline_mode<synchronous>, transform_indices = @transform_4, window_bounds = array<i64: 32, 64>}]} {
    %c0 = arith.constant 0 : index
    %c0_0 = arith.constant 0 : index
    %0 = vector.load %arg1[%c0, %c0_0] : memref<32x512xbf16, #tpu.memory_space<vmem>>, vector<32x512xbf16>
    %c0_1 = arith.constant 0 : index
    %c0_2 = arith.constant 0 : index
    %1 = vector.load %arg2[%c0_1, %c0_2] : memref<512x64xbf16, #tpu.memory_space<vmem>>, vector<512x64xbf16>
    %cst = arith.constant dense<0.000000e+00> : vector<32x64xf32>
    %2 = tpu.matmul %0, %1, %cst {dimension_numbers = #tpu.dot_dimension_numbers<[1], [0], [0], [1], [0, 0, 1, 1], [], []>} : vector<32x512xbf16>, vector<512x64xbf16>, vector<32x64xf32> -> vector<32x64xf32>
    %cst_3 = arith.constant dense<0.000000e+00> : vector<64xf32>
    %3 = vector.multi_reduction <add>, %2, %cst_3 [0] : vector<32x64xf32> to vector<64xf32>
    %4 = vector.shape_cast %3 : vector<64xf32> to vector<1x64xf32>
    %cst_4 = arith.constant 3.125000e-02 : f32
    %5 = vector.broadcast %cst_4 : f32 to vector<1x64xf32>
    %6 = arith.mulf %4, %5 : vector<1x64xf32>
    %7 = vector.broadcast %6 : vector<1x64xf32> to vector<32x64xf32>
    %8 = arith.subf %2, %7 : vector<32x64xf32>
    %9 = arith.mulf %8, %8 : vector<32x64xf32>
    %cst_5 = arith.constant dense<0.000000e+00> : vector<64xf32>
    %10 = vector.multi_reduction <add>, %9, %cst_5 [0] : vector<32x64xf32> to vector<64xf32>
    %11 = vector.shape_cast %10 : vector<64xf32> to vector<1x64xf32>
    %cst_6 = arith.constant 3.125000e-02 : f32
    %12 = vector.broadcast %cst_6 : f32 to vector<1x64xf32>
    %13 = arith.mulf %11, %12 : vector<1x64xf32>
    %c0_7 = arith.constant 0 : index
    %c0_8 = arith.constant 0 : index
    %14 = vector.load %arg3[%c0_7, %c0_8] : memref<1x64xf32, #tpu.memory_space<vmem>>, vector<1x64xf32>
    %cst_9 = arith.constant 9.99999974E-6 : f32
    %15 = vector.broadcast %cst_9 : f32 to vector<1x64xf32>
    %16 = arith.addf %13, %15 : vector<1x64xf32>
    %17 = math.rsqrt %16 : vector<1x64xf32>
    %18 = arith.mulf %14, %17 : vector<1x64xf32>
    %19 = vector.broadcast %18 : vector<1x64xf32> to vector<32x64xf32>
    %20 = arith.mulf %8, %19 : vector<32x64xf32>
    %c0_10 = arith.constant 0 : index
    %c0_11 = arith.constant 0 : index
    %21 = vector.load %arg4[%c0_10, %c0_11] : memref<1x64xf32, #tpu.memory_space<vmem>>, vector<1x64xf32>
    %22 = vector.broadcast %21 : vector<1x64xf32> to vector<32x64xf32>
    %23 = arith.addf %20, %22 : vector<32x64xf32>
    %cst_12 = arith.constant 0.000000e+00 : f32
    %24 = vector.broadcast %cst_12 : f32 to vector<32x64xf32>
    %25 = arith.cmpf ogt, %23, %24 : vector<32x64xf32>
    %cst_13 = arith.constant 2.000000e-01 : f32
    %26 = vector.broadcast %cst_13 : f32 to vector<32x64xf32>
    %27 = arith.mulf %26, %23 : vector<32x64xf32>
    %28 = arith.select %25, %23, %27 : vector<32x64xi1>, vector<32x64xf32>
    %29 = arith.truncf %28 : vector<32x64xf32> to vector<32x64xbf16>
    %c0_14 = arith.constant 0 : index
    %c0_15 = arith.constant 0 : index
    %30 = vector.load %arg5[%c0_14, %c0_15] : memref<32x64xbf16, #tpu.memory_space<vmem>>, vector<32x64xbf16>
    tpu.vector_store %arg5[%c0_14, %c0_15], %29 {strides = array<i32>} : memref<32x64xbf16, #tpu.memory_space<vmem>>, vector<32x64xbf16>,
    return
  }
  func.func @transform_0(%arg0: i32) -> (i32, i32) {
    %c0_i32 = arith.constant 0 : i32
    %c0_i32_0 = arith.constant 0 : i32
    %c0_i32_1 = arith.constant 0 : i32
    return %c0_i32, %c0_i32_0 : i32, i32
  }
  func.func @transform_1(%arg0: i32) -> (i32, i32) {
    %c0_i32 = arith.constant 0 : i32
    %c0_i32_0 = arith.constant 0 : i32
    %c0_i32_1 = arith.constant 0 : i32
    return %c0_i32, %c0_i32_0 : i32, i32
  }
  func.func @transform_2(%arg0: i32) -> (i32, i32) {
    %c0_i32 = arith.constant 0 : i32
    %c0_i32_0 = arith.constant 0 : i32
    %c0_i32_1 = arith.constant 0 : i32
    return %c0_i32, %c0_i32_0 : i32, i32
  }
  func.func @transform_3(%arg0: i32) -> (i32, i32) {
    %c0_i32 = arith.constant 0 : i32
    %c0_i32_0 = arith.constant 0 : i32
    %c0_i32_1 = arith.constant 0 : i32
    return %c0_i32, %c0_i32_0 : i32, i32
  }
  func.func @transform_4(%arg0: i32) -> (i32, i32) {
    %c0_i32 = arith.constant 0 : i32
    %c0_i32_0 = arith.constant 0 : i32
    %c0_i32_1 = arith.constant 0 : i32
    return %c0_i32, %c0_i32_0 : i32, i32
  }
}

module attributes {stable_mosaic.version = 11 : i64} {
  func.func @_conv_bias_act_kernel(%arg0: i32, %arg1: memref<2x1024xbf16, #tpu.memory_space<vmem>>, %arg2: memref<1024x1xbf16, #tpu.memory_space<vmem>>, %arg3: memref<1x1xf32, #tpu.memory_space<vmem>>, %arg4: memref<2x1xf32, #tpu.memory_space<vmem>>) attributes {dimension_semantics = [#tpu.dimension_semantics<arbitrary>], iteration_bounds = array<i64: 1>, scalar_prefetch = 0 : i64, scratch_operands = 0 : i64, tpu.core_type = #tpu.core_type<tc>, window_params = [{pipeline_mode = #tpu.pipeline_mode<synchronous>, transform_indices = @transform_0, window_bounds = array<i64: 2, 1024>}, {pipeline_mode = #tpu.pipeline_mode<synchronous>, transform_indices = @transform_1, window_bounds = array<i64: 1024, 1>}, {pipeline_mode = #tpu.pipeline_mode<synchronous>, transform_indices = @transform_2, window_bounds = array<i64: 1, 1>}, {pipeline_mode = #tpu.pipeline_mode<synchronous>, transform_indices = @transform_3, window_bounds = array<i64: 2, 1>}]} {
    %c0 = arith.constant 0 : index
    %c0_0 = arith.constant 0 : index
    %0 = vector.load %arg1[%c0, %c0_0] : memref<2x1024xbf16, #tpu.memory_space<vmem>>, vector<2x1024xbf16>
    %c0_1 = arith.constant 0 : index
    %c0_2 = arith.constant 0 : index
    %1 = vector.load %arg2[%c0_1, %c0_2] : memref<1024x1xbf16, #tpu.memory_space<vmem>>, vector<1024x1xbf16>
    %cst = arith.constant dense<0.000000e+00> : vector<2x1xf32>
    %2 = tpu.matmul %0, %1, %cst {dimension_numbers = #tpu.dot_dimension_numbers<[1], [0], [0], [1], [0, 0, 1, 1], [], []>} : vector<2x1024xbf16>, vector<1024x1xbf16>, vector<2x1xf32> -> vector<2x1xf32>
    %c0_3 = arith.constant 0 : index
    %c0_4 = arith.constant 0 : index
    %3 = vector.load %arg3[%c0_3, %c0_4] : memref<1x1xf32, #tpu.memory_space<vmem>>, vector<1x1xf32>
    %4 = vector.broadcast %3 : vector<1x1xf32> to vector<2x1xf32>
    %5 = arith.addf %2, %4 : vector<2x1xf32>
    %cst_5 = arith.constant 0.000000e+00 : f32
    %6 = vector.broadcast %cst_5 : f32 to vector<2x1xf32>
    %7 = arith.subf %6, %5 : vector<2x1xf32>
    %8 = math.exp %7 : vector<2x1xf32>
    %cst_6 = arith.constant 1.000000e+00 : f32
    %9 = vector.broadcast %cst_6 : f32 to vector<2x1xf32>
    %10 = arith.addf %9, %8 : vector<2x1xf32>
    %cst_7 = arith.constant 1.000000e+00 : f32
    %11 = vector.broadcast %cst_7 : f32 to vector<2x1xf32>
    %12 = arith.divf %11, %10 : vector<2x1xf32>
    %c0_8 = arith.constant 0 : index
    %c0_9 = arith.constant 0 : index
    %13 = vector.load %arg4[%c0_8, %c0_9] : memref<2x1xf32, #tpu.memory_space<vmem>>, vector<2x1xf32>
    tpu.vector_store %arg4[%c0_8, %c0_9], %12 {strides = array<i32>} : memref<2x1xf32, #tpu.memory_space<vmem>>, vector<2x1xf32>,
    return
  }
  func.func @transform_0(%arg0: i32) -> (i32, i32) {
    %c0_i32 = arith.constant 0 : i32
    %c0_i32_0 = arith.constant 0 : i32
    %c0_i32_1 = arith.constant 0 : i32
    return %c0_i32, %c0_i32_0 : i32, i32
  }
  func.func @transform_1(%arg0: i32) -> (i32, i32) {
    %c0_i32 = arith.constant 0 : i32
    %c0_i32_0 = arith.constant 0 : i32
    %c0_i32_1 = arith.constant 0 : i32
    return %c0_i32, %c0_i32_0 : i32, i32
  }
  func.func @transform_2(%arg0: i32) -> (i32, i32) {
    %c0_i32 = arith.constant 0 : i32
    %c0_i32_0 = arith.constant 0 : i32
    %c0_i32_1 = arith.constant 0 : i32
    return %c0_i32, %c0_i32_0 : i32, i32
  }
  func.func @transform_3(%arg0: i32) -> (i32, i32) {
    %c0_i32 = arith.constant 0 : i32
    %c0_i32_0 = arith.constant 0 : i32
    %c0_i32_1 = arith.constant 0 : i32
    return %c0_i32, %c0_i32_0 : i32, i32
  }
}

</mosaic_0001>

<llo_original>
// kernel: discriminator_forward.5
$region0: #{discriminator_forward.5}
  #allocation0 [shape = 'u32[]', space=smem, size = 0x4, offset = 0x4, fixed_abs, tag = 'smem constant byte address 0x4 - core index']
  #allocation1 [shape = 'u32[72,128]{1,0:T(1,128)}', space=vmem, size = 0x9000, scoped, tag = 'internal scratch']
  %s0 = inlined_call_operand.vmem [shape: bf16[2048,128], index: 0, kind: input, shape index: {}]
  %s1 = inlined_call_operand.vmem [shape: bf16[128,8], index: 1, kind: input, shape index: {}]
  %s2 = inlined_call_operand.vmem [shape: f32[1,8], index: 2, kind: input, shape index: {}]
  %s3 = inlined_call_operand.vmem [shape: bf16[2048,8], index: 3, kind: output, shape index: {}]
  %s4 = sld [smem:[#allocation0]]
  $region22: #{discriminator_forward.5} parent=0
    _
  %s6 = ssub.s32 1, %s4
  %s7 = scalar_select 0, %s6, %s4
  // Predicated region
  $region2: #{discriminator_forward.5} parent=0 // pred_check
    _
  $region3: #{discriminator_forward.5} parent=0 // pred_check_branch
    %9 = sbr.rel (0) target = $region5
  $region4: #{discriminator_forward.5} parent=0 // pred_region
    _
  $region5: #{discriminator_forward.5} parent=0 // pred_fallthru
    _
  // Predicated region
  $region6: #{discriminator_forward.5} parent=0 // pred_check
    _
  $region7: #{discriminator_forward.5} parent=0 // pred_check_branch
    %11 = sbr.rel (0) target = $region9
  $region8: #{discriminator_forward.5} parent=0 // pred_region
    _
  $region9: #{discriminator_forward.5} parent=0 // pred_fallthru
    _
  // Predicated region
  $region10: #{discriminator_forward.5} parent=0 // pred_check
    _
  $region11: #{discriminator_forward.5} parent=0 // pred_check_branch
    %13 = sbr.rel (0) target = $region13
  $region12: #{discriminator_forward.5} parent=0 // pred_region
    _
  $region13: #{discriminator_forward.5} parent=0 // pred_fallthru
    _
  %v14 = vld [vmem:[%s0] sm:$0xf]
  %v15 = vld [vmem:[%s0 + $0x4] sm:$0xf]
  %v16 = vld [vmem:[%s0 + $0x8] sm:$0xf]
  %v17 = vld [vmem:[%s0 + $0xc] sm:$0xf]
  %v18 = vld [vmem:[%s0 + $0x10] sm:$0xf]
  %v19 = vld [vmem:[%s0 + $0x14] sm:$0xf]
  %v20 = vld [vmem:[%s0 + $0x18] sm:$0xf]
  %v21 = vld [vmem:[%s0 + $0x1c] sm:$0xf]
  %v22 = vld [vmem:[%s0 + $0x20] sm:$0xf]
  %v23 = vld [vmem:[%s0 + $0x24] sm:$0xf]
  %v24 = vld [vmem:[%s0 + $0x28] sm:$0xf]
  %v25 = vld [vmem:[%s0 + $0x2c] sm:$0xf]
  %v26 = vld [vmem:[%s0 + $0x30] sm:$0xf]
  %v27 = vld [vmem:[%s0 + $0x34] sm:$0xf]
  %v28 = vld [vmem:[%s0 + $0x38] sm:$0xf]
  %v29 = vld [vmem:[%s0 + $0x3c] sm:$0xf]
  %v30 = vld [vmem:[%s0 + $0x40] sm:$0xf]
  %v31 = vld [vmem:[%s0 + $0x44] sm:$0xf]
  %v32 = vld [vmem:[%s0 + $0x48] sm:$0xf]
  %v33 = vld [vmem:[%s0 + $0x4c] sm:$0xf]
  %v34 = vld [vmem:[%s0 + $0x50] sm:$0xf]
  %v35 = vld [vmem:[%s0 + $0x54] sm:$0xf]
  %v36 = vld [vmem:[%s0 + $0x58] sm:$0xf]
  %v37 = vld [vmem:[%s0 + $0x5c] sm:$0xf]
  %v38 = vld [vmem:[%s0 + $0x60] sm:$0xf]
  %v39 = vld [vmem:[%s0 + $0x64] sm:$0xf]
  %v40 = vld [vmem:[%s0 + $0x68] sm:$0xf]
  %v41 = vld [vmem:[%s0 + $0x6c] sm:$0xf]
  %v42 = vld [vmem:[%s0 + $0x70] sm:$0xf]
  %v43 = vld [vmem:[%s0 + $0x74] sm:$0xf]
  %v44 = vld [vmem:[%s0 + $0x78] sm:$0xf]
  %v45 = vld [vmem:[%s0 + $0x7c] sm:$0xf]
  %v46 = vld [vmem:[%s0 + $0x80] sm:$0xf]
  %v47 = vld [vmem:[%s0 + $0x84] sm:$0xf]
  %v48 = vld [vmem:[%s0 + $0x88] sm:$0xf]
  %v49 = vld [vmem:[%s0 + $0x8c] sm:$0xf]
  %v50 = vld [vmem:[%s0 + $0x90] sm:$0xf]
  %v51 = vld [vmem:[%s0 + $0x94] sm:$0xf]
  %v52 = vld [vmem:[%s0 + $0x98] sm:$0xf]
  %v53 = vld [vmem:[%s0 + $0x9c] sm:$0xf]
  %v54 = vld [vmem:[%s0 + $0xa0] sm:$0xf]
  %v55 = vld [vmem:[%s0 + $0xa4] sm:$0xf]
  %v56 = vld [vmem:[%s0 + $0xa8] sm:$0xf]
  %v57 = vld [vmem:[%s0 + $0xac] sm:$0xf]
  %v58 = vld [vmem:[%s0 + $0xb0] sm:$0xf]
  %v59 = vld [vmem:[%s0 + $0xb4] sm:$0xf]
  %v60 = vld [vmem:[%s0 + $0xb8] sm:$0xf]
  %v61 = vld [vmem:[%s0 + $0xbc] sm:$0xf]
  %v62 = vld [vmem:[%s0 + $0xc0] sm:$0xf]
  %v63 = vld [vmem:[%s0 + $0xc4] sm:$0xf]
  %v64 = vld [vmem:[%s0 + $0xc8] sm:$0xf]
  %v65 = vld [vmem:[%s0 + $0xcc] sm:$0xf]
  %v66 = vld [vmem:[%s0 + $0xd0] sm:$0xf]
  %v67 = vld [vmem:[%s0 + $0xd4] sm:$0xf]
  %v68 = vld [vmem:[%s0 + $0xd8] sm:$0xf]
  %v69 = vld [vmem:[%s0 + $0xdc] sm:$0xf]
  %v70 = vld [vmem:[%s0 + $0xe0] sm:$0xf]
  %v71 = vld [vmem:[%s0 + $0xe4] sm:$0xf]
  %v72 = vld [vmem:[%s0 + $0xe8] sm:$0xf]
  %v73 = vld [vmem:[%s0 + $0xec] sm:$0xf]
  %v74 = vld [vmem:[%s0 + $0xf0] sm:$0xf]
  %v75 = vld [vmem:[%s0 + $0xf4] sm:$0xf]
  %v76 = vld [vmem:[%s0 + $0xf8] sm:$0xf]
  %v77 = vld [vmem:[%s0 + $0xfc] sm:$0xf]
  %v78 = vld [vmem:[%s0 + $0x100] sm:$0xf]
  %v79 = vld [vmem:[%s0 + $0x104] sm:$0xf]
  %v80 = vld [vmem:[%s0 + $0x108] sm:$0xf]
  %v81 = vld [vmem:[%s0 + $0x10c] sm:$0xf]
  %v82 = vld [vmem:[%s0 + $0x110] sm:$0xf]
  %v83 = vld [vmem:[%s0 + $0x114] sm:$0xf]
  %v84 = vld [vmem:[%s0 + $0x118] sm:$0xf]
  %v85 = vld [vmem:[%s0 + $0x11c] sm:$0xf]
  %v86 = vld [vmem:[%s0 + $0x120] sm:$0xf]
  %v87 = vld [vmem:[%s0 + $0x124] sm:$0xf]
  %v88 = vld [vmem:[%s0 + $0x128] sm:$0xf]
  %v89 = vld [vmem:[%s0 + $0x12c] sm:$0xf]
  %v90 = vld [vmem:[%s0 + $0x130] sm:$0xf]
  %v91 = vld [vmem:[%s0 + $0x134] sm:$0xf]
  %v92 = vld [vmem:[%s0 + $0x138] sm:$0xf]
  %v93 = vld [vmem:[%s0 + $0x13c] sm:$0xf]
  %v94 = vld [vmem:[%s0 + $0x140] sm:$0xf]
  %v95 = vld [vmem:[%s0 + $0x144] sm:$0xf]
  %v96 = vld [vmem:[%s0 + $0x148] sm:$0xf]
  %v97 = vld [vmem:[%s0 + $0x14c] sm:$0xf]
  %v98 = vld [vmem:[%s0 + $0x150] sm:$0xf]
  %v99 = vld [vmem:[%s0 + $0x154] sm:$0xf]
  %v100 = vld [vmem:[%s0 + $0x158] sm:$0xf]
  %v101 = vld [vmem:[%s0 + $0x15c] sm:$0xf]
  %v102 = vld [vmem:[%s0 + $0x160] sm:$0xf]
  %v103 = vld [vmem:[%s0 + $0x164] sm:$0xf]
  %v104 = vld [vmem:[%s0 + $0x168] sm:$0xf]
  %v105 = vld [vmem:[%s0 + $0x16c] sm:$0xf]
  %v106 = vld [vmem:[%s0 + $0x170] sm:$0xf]
  %v107 = vld [vmem:[%s0 + $0x174] sm:$0xf]
  %v108 = vld [vmem:[%s0 + $0x178] sm:$0xf]
  %v109 = vld [vmem:[%s0 + $0x17c] sm:$0xf]
  %v110 = vld [vmem:[%s0 + $0x180] sm:$0xf]
  %v111 = vld [vmem:[%s0 + $0x184] sm:$0xf]
  %v112 = vld [vmem:[%s0 + $0x188] sm:$0xf]
  %v113 = vld [vmem:[%s0 + $0x18c] sm:$0xf]
  %v114 = vld [vmem:[%s0 + $0x190] sm:$0xf]
  %v115 = vld [vmem:[%s0 + $0x194] sm:$0xf]
  %v116 = vld [vmem:[%s0 + $0x198] sm:$0xf]
  %v117 = vld [vmem:[%s0 + $0x19c] sm:$0xf]
  %v118 = vld [vmem:[%s0 + $0x1a0] sm:$0xf]
  %v119 = vld [vmem:[%s0 + $0x1a4] sm:$0xf]
  %v120 = vld [vmem:[%s0 + $0x1a8] sm:$0xf]
  %v121 = vld [vmem:[%s0 + $0x1ac] sm:$0xf]
  %v122 = vld [vmem:[%s0 + $0x1b0] sm:$0xf]
  %v123 = vld [vmem:[%s0 + $0x1b4] sm:$0xf]
  %v124 = vld [vmem:[%s0 + $0x1b8] sm:$0xf]
  %v125 = vld [vmem:[%s0 + $0x1bc] sm:$0xf]
  %v126 = vld [vmem:[%s0 + $0x1c0] sm:$0xf]
  %v127 = vld [vmem:[%s0 + $0x1c4] sm:$0xf]
  %v128 = vld [vmem:[%s0 + $0x1c8] sm:$0xf]
  %v129 = vld [vmem:[%s0 + $0x1cc] sm:$0xf]
  %v130 = vld [vmem:[%s0 + $0x1d0] sm:$0xf]
  %v131 = vld [vmem:[%s0 + $0x1d4] sm:$0xf]
  %v132 = vld [vmem:[%s0 + $0x1d8] sm:$0xf]
  %v133 = vld [vmem:[%s0 + $0x1dc] sm:$0xf]
  %v134 = vld [vmem:[%s0 + $0x1e0] sm:$0xf]
  %v135 = vld [vmem:[%s0 + $0x1e4] sm:$0xf]
  %v136 = vld [vmem:[%s0 + $0x1e8] sm:$0xf]
  %v137 = vld [vmem:[%s0 + $0x1ec] sm:$0xf]
  %v138 = vld [vmem:[%s0 + $0x1f0] sm:$0xf]
  %v139 = vld [vmem:[%s0 + $0x1f4] sm:$0xf]
  %v140 = vld [vmem:[%s0 + $0x1f8] sm:$0xf]
  %v141 = vld [vmem:[%s0 + $0x1fc] sm:$0xf]
  %v142 = vld [vmem:[%s0 + $0x200] sm:$0xf]
  %v143 = vld [vmem:[%s0 + $0x204] sm:$0xf]
  %v144 = vld [vmem:[%s0 + $0x208] sm:$0xf]
  %v145 = vld [vmem:[%s0 + $0x20c] sm:$0xf]
  %v146 = vld [vmem:[%s0 + $0x210] sm:$0xf]
  %v147 = vld [vmem:[%s0 + $0x214] sm:$0xf]
  %v148 = vld [vmem:[%s0 + $0x218] sm:$0xf]
  %v149 = vld [vmem:[%s0 + $0x21c] sm:$0xf]
  %v150 = vld [vmem:[%s0 + $0x220] sm:$0xf]
  %v151 = vld [vmem:[%s0 + $0x224] sm:$0xf]
  %v152 = vld [vmem:[%s0 + $0x228] sm:$0xf]
  %v153 = vld [vmem:[%s0 + $0x22c] sm:$0xf]
  %v154 = vld [vmem:[%s0 + $0x230] sm:$0xf]
  %v155 = vld [vmem:[%s0 + $0x234] sm:$0xf]
  %v156 = vld [vmem:[%s0 + $0x238] sm:$0xf]
  %v157 = vld [vmem:[%s0 + $0x23c] sm:$0xf]
  %v158 = vld [vmem:[%s0 + $0x240] sm:$0xf]
  %v159 = vld [vmem:[%s0 + $0x244] sm:$0xf]
  %v160 = vld [vmem:[%s0 + $0x248] sm:$0xf]
  %v161 = vld [vmem:[%s0 + $0x24c] sm:$0xf]
  %v162 = vld [vmem:[%s0 + $0x250] sm:$0xf]
  %v163 = vld [vmem:[%s0 + $0x254] sm:$0xf]
  %v164 = vld [vmem:[%s0 + $0x258] sm:$0xf]
  %v165 = vld [vmem:[%s0 + $0x25c] sm:$0xf]
  %v166 = vld [vmem:[%s0 + $0x260] sm:$0xf]
  %v167 = vld [vmem:[%s0 + $0x264] sm:$0xf]
  %v168 = vld [vmem:[%s0 + $0x268] sm:$0xf]
  %v169 = vld [vmem:[%s0 + $0x26c] sm:$0xf]
  %v170 = vld [vmem:[%s0 + $0x270] sm:$0xf]
  %v171 = vld [vmem:[%s0 + $0x274] sm:$0xf]
  %v172 = vld [vmem:[%s0 + $0x278] sm:$0xf]
  %v173 = vld [vmem:[%s0 + $0x27c] sm:$0xf]
  %v174 = vld [vmem:[%s0 + $0x280] sm:$0xf]
  %v175 = vld [vmem:[%s0 + $0x284] sm:$0xf]
  %v176 = vld [vmem:[%s0 + $0x288] sm:$0xf]
  %v177 = vld [vmem:[%s0 + $0x28c] sm:$0xf]
  %v178 = vld [vmem:[%s0 + $0x290] sm:$0xf]
  %v179 = vld [vmem:[%s0 + $0x294] sm:$0xf]
  %v180 = vld [vmem:[%s0 + $0x298] sm:$0xf]
  %v181 = vld [vmem:[%s0 + $0x29c] sm:$0xf]
  %v182 = vld [vmem:[%s0 + $0x2a0] sm:$0xf]
  %v183 = vld [vmem:[%s0 + $0x2a4] sm:$0xf]
  %v184 = vld [vmem:[%s0 + $0x2a8] sm:$0xf]
  %v185 = vld [vmem:[%s0 + $0x2ac] sm:$0xf]
  %v186 = vld [vmem:[%s0 + $0x2b0] sm:$0xf]
  %v187 = vld [vmem:[%s0 + $0x2b4] sm:$0xf]
  %v188 = vld [vmem:[%s0 + $0x2b8] sm:$0xf]
  %v189 = vld [vmem:[%s0 + $0x2bc] sm:$0xf]
  %v190 = vld [vmem:[%s0 + $0x2c0] sm:$0xf]
  %v191 = vld [vmem:[%s0 + $0x2c4] sm:$0xf]
  %v192 = vld [vmem:[%s0 + $0x2c8] sm:$0xf]
  %v193 = vld [vmem:[%s0 + $0x2cc] sm:$0xf]
  %v194 = vld [vmem:[%s0 + $0x2d0] sm:$0xf]
  %v195 = vld [vmem:[%s0 + $0x2d4] sm:$0xf]
  %v196 = vld [vmem:[%s0 + $0x2d8] sm:$0xf]
  %v197 = vld [vmem:[%s0 + $0x2dc] sm:$0xf]
  %v198 = vld [vmem:[%s0 + $0x2e0] sm:$0xf]
  %v199 = vld [vmem:[%s0 + $0x2e4] sm:$0xf]
  %v200 = vld [vmem:[%s0 + $0x2e8] sm:$0xf]
  %v201 = vld [vmem:[%s0 + $0x2ec] sm:$0xf]
  %v202 = vld [vmem:[%s0 + $0x2f0] sm:$0xf]
  %v203 = vld [vmem:[%s0 + $0x2f4] sm:$0xf]
  %v204 = vld [vmem:[%s0 + $0x2f8] sm:$0xf]
  %v205 = vld [vmem:[%s0 + $0x2fc] sm:$0xf]
  %v206 = vld [vmem:[%s0 + $0x300] sm:$0xf]
  %v207 = vld [vmem:[%s0 + $0x304] sm:$0xf]
  %v208 = vld [vmem:[%s0 + $0x308] sm:$0xf]
  %v209 = vld [vmem:[%s0 + $0x30c] sm:$0xf]
  %v210 = vld [vmem:[%s0 + $0x310] sm:$0xf]
  %v211 = vld [vmem:[%s0 + $0x314] sm:$0xf]
  %v212 = vld [vmem:[%s0 + $0x318] sm:$0xf]
  %v213 = vld [vmem:[%s0 + $0x31c] sm:$0xf]
  %v214 = vld [vmem:[%s0 + $0x320] sm:$0xf]
  %v215 = vld [vmem:[%s0 + $0x324] sm:$0xf]
  %v216 = vld [vmem:[%s0 + $0x328] sm:$0xf]
  %v217 = vld [vmem:[%s0 + $0x32c] sm:$0xf]
  %v218 = vld [vmem:[%s0 + $0x330] sm:$0xf]
  %v219 = vld [vmem:[%s0 + $0x334] sm:$0xf]
  %v220 = vld [vmem:[%s0 + $0x338] sm:$0xf]
  %v221 = vld [vmem:[%s0 + $0x33c] sm:$0xf]
  %v222 = vld [vmem:[%s0 + $0x340] sm:$0xf]
  %v223 = vld [vmem:[%s0 + $0x344] sm:$0xf]
  %v224 = vld [vmem:[%s0 + $0x348] sm:$0xf]
  %v225 = vld [vmem:[%s0 + $0x34c] sm:$0xf]
  %v226 = vld [vmem:[%s0 + $0x350] sm:$0xf]
  %v227 = vld [vmem:[%s0 + $0x354] sm:$0xf]
  %v228 = vld [vmem:[%s0 + $0x358] sm:$0xf]
  %v229 = vld [vmem:[%s0 + $0x35c] sm:$0xf]
  %v230 = vld [vmem:[%s0 + $0x360] sm:$0xf]
  %v231 = vld [vmem:[%s0 + $0x364] sm:$0xf]
  %v232 = vld [vmem:[%s0 + $0x368] sm:$0xf]
  %v233 = vld [vmem:[%s0 + $0x36c] sm:$0xf]
  %v234 = vld [vmem:[%s0 + $0x370] sm:$0xf]
  %v235 = vld [vmem:[%s0 + $0x374] sm:$0xf]
  %v236 = vld [vmem:[%s0 + $0x378] sm:$0xf]
  %v237 = vld [vmem:[%s0 + $0x37c] sm:$0xf]
  %v238 = vld [vmem:[%s0 + $0x380] sm:$0xf]
  %v239 = vld [vmem:[%s0 + $0x384] sm:$0xf]
  %v240 = vld [vmem:[%s0 + $0x388] sm:$0xf]
  %v241 = vld [vmem:[%s0 + $0x38c] sm:$0xf]
  %v242 = vld [vmem:[%s0 + $0x390] sm:$0xf]
  %v243 = vld [vmem:[%s0 + $0x394] sm:$0xf]
  %v244 = vld [vmem:[%s0 + $0x398] sm:$0xf]
  %v245 = vld [vmem:[%s0 + $0x39c] sm:$0xf]
  %v246 = vld [vmem:[%s0 + $0x3a0] sm:$0xf]
  %v247 = vld [vmem:[%s0 + $0x3a4] sm:$0xf]
  %v248 = vld [vmem:[%s0 + $0x3a8] sm:$0xf]
  %v249 = vld [vmem:[%s0 + $0x3ac] sm:$0xf]
  %v250 = vld [vmem:[%s0 + $0x3b0] sm:$0xf]
  %v251 = vld [vmem:[%s0 + $0x3b4] sm:$0xf]
  %v252 = vld [vmem:[%s0 + $0x3b8] sm:$0xf]
  %v253 = vld [vmem:[%s0 + $0x3bc] sm:$0xf]
  %v254 = vld [vmem:[%s0 + $0x3c0] sm:$0xf]
  %v255 = vld [vmem:[%s0 + $0x3c4] sm:$0xf]
  %v256 = vld [vmem:[%s0 + $0x3c8] sm:$0xf]
  %v257 = vld [vmem:[%s0 + $0x3cc] sm:$0xf]
  %v258 = vld [vmem:[%s0 + $0x3d0] sm:$0xf]
  %v259 = vld [vmem:[%s0 + $0x3d4] sm:$0xf]
  %v260 = vld [vmem:[%s0 + $0x3d8] sm:$0xf]
  %v261 = vld [vmem:[%s0 + $0x3dc] sm:$0xf]
  %v262 = vld [vmem:[%s0 + $0x3e0] sm:$0xf]
  %v263 = vld [vmem:[%s0 + $0x3e4] sm:$0xf]
  %v264 = vld [vmem:[%s0 + $0x3e8] sm:$0xf]
  %v265 = vld [vmem:[%s0 + $0x3ec] sm:$0xf]
  %v266 = vld [vmem:[%s0 + $0x3f0] sm:$0xf]
  %v267 = vld [vmem:[%s0 + $0x3f4] sm:$0xf]
  %v268 = vld [vmem:[%s0 + $0x3f8] sm:$0xf]
  %v269 = vld [vmem:[%s0 + $0x3fc] sm:$0xf]
  %v270 = vld [vmem:[%s1] sm:$0xf]
  %v271 = vld [vmem:[%s1 + $0x4] sm:$0xf]
  %v272 = vld [vmem:[%s1 + $0x8] sm:$0xf]
  %v273 = vld [vmem:[%s1 + $0xc] sm:$0xf]
  %v274 = vld [vmem:[%s1 + $0x10] sm:$0xf]
  %v275 = vld [vmem:[%s1 + $0x14] sm:$0xf]
  %v276 = vld [vmem:[%s1 + $0x18] sm:$0xf]
  %v277 = vld [vmem:[%s1 + $0x1c] sm:$0xf]
  %v278 = vld [vmem:[%s1 + $0x20] sm:$0xf]
  %v279 = vld [vmem:[%s1 + $0x24] sm:$0xf]
  %v280 = vld [vmem:[%s1 + $0x28] sm:$0xf]
  %v281 = vld [vmem:[%s1 + $0x2c] sm:$0xf]
  %v282 = vld [vmem:[%s1 + $0x30] sm:$0xf]
  %v283 = vld [vmem:[%s1 + $0x34] sm:$0xf]
  %v284 = vld [vmem:[%s1 + $0x38] sm:$0xf]
  %v285 = vld [vmem:[%s1 + $0x3c] sm:$0xf]
  %v286 = vld [vmem:[%s2] sm:$0x1]
  %v288 = vperm.slane %v286, 0
  %v546 = vunpack.c.l.b16 %v14
  %v547 = vunpack.c.l.b16 %v15
  %v548 = vunpack.c.l.b16 %v16
  %v549 = vunpack.c.l.b16 %v17
  %v550 = vunpack.c.l.b16 %v18
  %v551 = vunpack.c.l.b16 %v19
  %v552 = vunpack.c.l.b16 %v20
  %v553 = vunpack.c.l.b16 %v21
  %v554 = vunpack.c.l.b16 %v22
  %v555 = vunpack.c.l.b16 %v23
  %v556 = vunpack.c.l.b16 %v24
  %v557 = vunpack.c.l.b16 %v25
  %v558 = vunpack.c.l.b16 %v26
  %v559 = vunpack.c.l.b16 %v27
  %v560 = vunpack.c.l.b16 %v28
  %v561 = vunpack.c.l.b16 %v29
  %v562 = vunpack.c.l.b16 %v30
  %v563 = vunpack.c.l.b16 %v31
  %v564 = vunpack.c.l.b16 %v32
  %v565 = vunpack.c.l.b16 %v33
  %v566 = vunpack.c.l.b16 %v34
  %v567 = vunpack.c.l.b16 %v35
  %v568 = vunpack.c.l.b16 %v36
  %v569 = vunpack.c.l.b16 %v37
  %v570 = vunpack.c.l.b16 %v38
  %v571 = vunpack.c.l.b16 %v39
  %v572 = vunpack.c.l.b16 %v40
  %v573 = vunpack.c.l.b16 %v41
  %v574 = vunpack.c.l.b16 %v42
  %v575 = vunpack.c.l.b16 %v43
  %v576 = vunpack.c.l.b16 %v44
  %v577 = vunpack.c.l.b16 %v45
  %v578 = vunpack.c.l.b16 %v46
  %v579 = vunpack.c.l.b16 %v47
  %v580 = vunpack.c.l.b16 %v48
  %v581 = vunpack.c.l.b16 %v49
  %v582 = vunpack.c.l.b16 %v50
  %v583 = vunpack.c.l.b16 %v51
  %v584 = vunpack.c.l.b16 %v52
  %v585 = vunpack.c.l.b16 %v53
  %v586 = vunpack.c.l.b16 %v54
  %v587 = vunpack.c.l.b16 %v55
  %v588 = vunpack.c.l.b16 %v56
  %v589 = vunpack.c.l.b16 %v57
  %v590 = vunpack.c.l.b16 %v58
  %v591 = vunpack.c.l.b16 %v59
  %v592 = vunpack.c.l.b16 %v60
  %v593 = vunpack.c.l.b16 %v61
  %v594 = vunpack.c.l.b16 %v62
  %v595 = vunpack.c.l.b16 %v63
  %v596 = vunpack.c.l.b16 %v64
  %v597 = vunpack.c.l.b16 %v65
  %v598 = vunpack.c.l.b16 %v66
  %v599 = vunpack.c.l.b16 %v67
  %v600 = vunpack.c.l.b16 %v68
  %v601 = vunpack.c.l.b16 %v69
  %v602 = vunpack.c.l.b16 %v70
  %v603 = vunpack.c.l.b16 %v71
  %v604 = vunpack.c.l.b16 %v72
  %v605 = vunpack.c.l.b16 %v73
  %v606 = vunpack.c.l.b16 %v74
  %v607 = vunpack.c.l.b16 %v75
  %v608 = vunpack.c.l.b16 %v76
  %v609 = vunpack.c.l.b16 %v77
  %v610 = vunpack.c.l.b16 %v78
  %v611 = vunpack.c.l.b16 %v79
  %v612 = vunpack.c.l.b16 %v80
  %v613 = vunpack.c.l.b16 %v81
  %v614 = vunpack.c.l.b16 %v82
  %v615 = vunpack.c.l.b16 %v83
  %v616 = vunpack.c.l.b16 %v84
  %v617 = vunpack.c.l.b16 %v85
  %v618 = vunpack.c.l.b16 %v86
  %v619 = vunpack.c.l.b16 %v87
  %v620 = vunpack.c.l.b16 %v88
  %v621 = vunpack.c.l.b16 %v89
  %v622 = vunpack.c.l.b16 %v90
  %v623 = vunpack.c.l.b16 %v91
  %v624 = vunpack.c.l.b16 %v92
  %v625 = vunpack.c.l.b16 %v93
  %v626 = vunpack.c.l.b16 %v94
  %v627 = vunpack.c.l.b16 %v95
  %v628 = vunpack.c.l.b16 %v96
  %v629 = vunpack.c.l.b16 %v97
  %v630 = vunpack.c.l.b16 %v98
  %v631 = vunpack.c.l.b16 %v99
  %v632 = vunpack.c.l.b16 %v100
  %v633 = vunpack.c.l.b16 %v101
  %v634 = vunpack.c.l.b16 %v102
  %v635 = vunpack.c.l.b16 %v103
  %v636 = vunpack.c.l.b16 %v104
  %v637 = vunpack.c.l.b16 %v105
  %v638 = vunpack.c.l.b16 %v106
  %v639 = vunpack.c.l.b16 %v107
  %v640 = vunpack.c.l.b16 %v108
  %v641 = vunpack.c.l.b16 %v109
  %v642 = vunpack.c.l.b16 %v110
  %v643 = vunpack.c.l.b16 %v111
  %v644 = vunpack.c.l.b16 %v112
  %v645 = vunpack.c.l.b16 %v113
  %v646 = vunpack.c.l.b16 %v114
  %v647 = vunpack.c.l.b16 %v115
  %v648 = vunpack.c.l.b16 %v116
  %v649 = vunpack.c.l.b16 %v117
  %v650 = vunpack.c.l.b16 %v118
  %v651 = vunpack.c.l.b16 %v119
  %v652 = vunpack.c.l.b16 %v120
  %v653 = vunpack.c.l.b16 %v121
  %v654 = vunpack.c.l.b16 %v122
  %v655 = vunpack.c.l.b16 %v123
  %v656 = vunpack.c.l.b16 %v124
  %v657 = vunpack.c.l.b16 %v125
  %v658 = vunpack.c.l.b16 %v126
  %v659 = vunpack.c.l.b16 %v127
  %v660 = vunpack.c.l.b16 %v128
  %v661 = vunpack.c.l.b16 %v129
  %v662 = vunpack.c.l.b16 %v130
  %v663 = vunpack.c.l.b16 %v131
  %v664 = vunpack.c.l.b16 %v132
  %v665 = vunpack.c.l.b16 %v133
  %v666 = vunpack.c.l.b16 %v134
  %v667 = vunpack.c.l.b16 %v135
  %v668 = vunpack.c.l.b16 %v136
  %v669 = vunpack.c.l.b16 %v137
  %v670 = vunpack.c.l.b16 %v138
  %v671 = vunpack.c.l.b16 %v139
  %v672 = vunpack.c.l.b16 %v140
  %v673 = vunpack.c.l.b16 %v141
  %v674 = vunpack.c.l.b16 %v142
  %v675 = vunpack.c.l.b16 %v143
  %v676 = vunpack.c.l.b16 %v144
  %v677 = vunpack.c.l.b16 %v145
  %v678 = vunpack.c.l.b16 %v146
  %v679 = vunpack.c.l.b16 %v147
  %v680 = vunpack.c.l.b16 %v148
  %v681 = vunpack.c.l.b16 %v149
  %v682 = vunpack.c.l.b16 %v150
  %v683 = vunpack.c.l.b16 %v151
  %v684 = vunpack.c.l.b16 %v152
  %v685 = vunpack.c.l.b16 %v153
  %v686 = vunpack.c.l.b16 %v154
  %v687 = vunpack.c.l.b16 %v155
  %v688 = vunpack.c.l.b16 %v156
  %v689 = vunpack.c.l.b16 %v157
  %v690 = vunpack.c.l.b16 %v158
  %v691 = vunpack.c.l.b16 %v159
  %v692 = vunpack.c.l.b16 %v160
  %v693 = vunpack.c.l.b16 %v161
  %v694 = vunpack.c.l.b16 %v162
  %v695 = vunpack.c.l.b16 %v163
  %v696 = vunpack.c.l.b16 %v164
  %v697 = vunpack.c.l.b16 %v165
  %v698 = vunpack.c.l.b16 %v166
  %v699 = vunpack.c.l.b16 %v167
  %v700 = vunpack.c.l.b16 %v168
  %v701 = vunpack.c.l.b16 %v169
  %v702 = vunpack.c.l.b16 %v170
  %v703 = vunpack.c.l.b16 %v171
  %v704 = vunpack.c.l.b16 %v172
  %v705 = vunpack.c.l.b16 %v173
  %v706 = vunpack.c.l.b16 %v174
  %v707 = vunpack.c.l.b16 %v175
  %v708 = vunpack.c.l.b16 %v176
  %v709 = vunpack.c.l.b16 %v177
  %v710 = vunpack.c.l.b16 %v178
  %v711 = vunpack.c.l.b16 %v179
  %v712 = vunpack.c.l.b16 %v180
  %v713 = vunpack.c.l.b16 %v181
  %v714 = vunpack.c.l.b16 %v182
  %v715 = vunpack.c.l.b16 %v183
  %v716 = vunpack.c.l.b16 %v184
  %v717 = vunpack.c.l.b16 %v185
  %v718 = vunpack.c.l.b16 %v186
  %v719 = vunpack.c.l.b16 %v187
  %v720 = vunpack.c.l.b16 %v188
  %v721 = vunpack.c.l.b16 %v189
  %v722 = vunpack.c.l.b16 %v190
  %v723 = vunpack.c.l.b16 %v191
  %v724 = vunpack.c.l.b16 %v192
  %v725 = vunpack.c.l.b16 %v193
  %v726 = vunpack.c.l.b16 %v194
  %v727 = vunpack.c.l.b16 %v195
  %v728 = vunpack.c.l.b16 %v196
  %v729 = vunpack.c.l.b16 %v197
  %v730 = vunpack.c.l.b16 %v198
  %v731 = vunpack.c.l.b16 %v199
  %v732 = vunpack.c.l.b16 %v200
  %v733 = vunpack.c.l.b16 %v201
  %v734 = vunpack.c.l.b16 %v202
  %v735 = vunpack.c.l.b16 %v203
  %v736 = vunpack.c.l.b16 %v204
  %v737 = vunpack.c.l.b16 %v205
  %v738 = vunpack.c.l.b16 %v206
  %v739 = vunpack.c.l.b16 %v207
  %v740 = vunpack.c.l.b16 %v208
  %v741 = vunpack.c.l.b16 %v209
  %v742 = vunpack.c.l.b16 %v210
  %v743 = vunpack.c.l.b16 %v211
  %v744 = vunpack.c.l.b16 %v212
  %v745 = vunpack.c.l.b16 %v213
  %v746 = vunpack.c.l.b16 %v214
  %v747 = vunpack.c.l.b16 %v215
  %v748 = vunpack.c.l.b16 %v216
  %v749 = vunpack.c.l.b16 %v217
  %v750 = vunpack.c.l.b16 %v218
  %v751 = vunpack.c.l.b16 %v219
  %v752 = vunpack.c.l.b16 %v220
  %v753 = vunpack.c.l.b16 %v221
  %v754 = vunpack.c.l.b16 %v222
  %v755 = vunpack.c.l.b16 %v223
  %v756 = vunpack.c.l.b16 %v224
  %v757 = vunpack.c.l.b16 %v225
  %v758 = vunpack.c.l.b16 %v226
  %v759 = vunpack.c.l.b16 %v227
  %v760 = vunpack.c.l.b16 %v228
  %v761 = vunpack.c.l.b16 %v229
  %v762 = vunpack.c.l.b16 %v230
  %v763 = vunpack.c.l.b16 %v231
  %v764 = vunpack.c.l.b16 %v232
  %v765 = vunpack.c.l.b16 %v233
  %v766 = vunpack.c.l.b16 %v234
  %v767 = vunpack.c.l.b16 %v235
  %v768 = vunpack.c.l.b16 %v236
  %v769 = vunpack.c.l.b16 %v237
  %v770 = vunpack.c.l.b16 %v238
  %v771 = vunpack.c.l.b16 %v239
  %v772 = vunpack.c.l.b16 %v240
  %v773 = vunpack.c.l.b16 %v241
  %v774 = vunpack.c.l.b16 %v242
  %v775 = vunpack.c.l.b16 %v243
  %v776 = vunpack.c.l.b16 %v244
  %v777 = vunpack.c.l.b16 %v245
  %v778 = vunpack.c.l.b16 %v246
  %v779 = vunpack.c.l.b16 %v247
  %v780 = vunpack.c.l.b16 %v248
  %v781 = vunpack.c.l.b16 %v249
  %v782 = vunpack.c.l.b16 %v250
  %v783 = vunpack.c.l.b16 %v251
  %v784 = vunpack.c.l.b16 %v252
  %v785 = vunpack.c.l.b16 %v253
  %v786 = vunpack.c.l.b16 %v254
  %v787 = vunpack.c.l.b16 %v255
  %v788 = vunpack.c.l.b16 %v256
  %v789 = vunpack.c.l.b16 %v257
  %v790 = vunpack.c.l.b16 %v258
  %v791 = vunpack.c.l.b16 %v259
  %v792 = vunpack.c.l.b16 %v260
  %v793 = vunpack.c.l.b16 %v261
  %v794 = vunpack.c.l.b16 %v262
  %v795 = vunpack.c.l.b16 %v263
  %v796 = vunpack.c.l.b16 %v264
  %v797 = vunpack.c.l.b16 %v265
  %v798 = vunpack.c.l.b16 %v266
  %v799 = vunpack.c.l.b16 %v267
  %v800 = vunpack.c.l.b16 %v268
  %v801 = vunpack.c.l.b16 %v269
  %v802 = vpack.c.b16 %v547, %v546
  %v803 = vpack.c.b16 %v549, %v548
  %v804 = vpack.c.b16 %v551, %v550
  %v805 = vpack.c.b16 %v553, %v552
  %v806 = vpack.c.b16 %v555, %v554
  %v807 = vpack.c.b16 %v557, %v556
  %v808 = vpack.c.b16 %v559, %v558
  %v809 = vpack.c.b16 %v561, %v560
  %v810 = vpack.c.b16 %v563, %v562
  %v811 = vpack.c.b16 %v565, %v564
  %v812 = vpack.c.b16 %v567, %v566
  %v813 = vpack.c.b16 %v569, %v568
  %v814 = vpack.c.b16 %v571, %v570
  %v815 = vpack.c.b16 %v573, %v572
  %v816 = vpack.c.b16 %v575, %v574
  %v817 = vpack.c.b16 %v577, %v576
  %v818 = vpack.c.b16 %v579, %v578
  %v819 = vpack.c.b16 %v581, %v580
  %v820 = vpack.c.b16 %v583, %v582
  %v821 = vpack.c.b16 %v585, %v584
  %v822 = vpack.c.b16 %v587, %v586
  %v823 = vpack.c.b16 %v589, %v588
  %v824 = vpack.c.b16 %v591, %v590
  %v825 = vpack.c.b16 %v593, %v592
  %v826 = vpack.c.b16 %v595, %v594
  %v827 = vpack.c.b16 %v597, %v596
  %v828 = vpack.c.b16 %v599, %v598
  %v829 = vpack.c.b16 %v601, %v600
  %v830 = vpack.c.b16 %v603, %v602
  %v831 = vpack.c.b16 %v605, %v604
  %v832 = vpack.c.b16 %v607, %v606
  %v833 = vpack.c.b16 %v609, %v608
  %v834 = vpack.c.b16 %v611, %v610
  %v835 = vpack.c.b16 %v613, %v612
  %v836 = vpack.c.b16 %v615, %v614
  %v837 = vpack.c.b16 %v617, %v616
  %v838 = vpack.c.b16 %v619, %v618
  %v839 = vpack.c.b16 %v621, %v620
  %v840 = vpack.c.b16 %v623, %v622
  %v841 = vpack.c.b16 %v625, %v624
  %v842 = vpack.c.b16 %v627, %v626
  %v843 = vpack.c.b16 %v629, %v628
  %v844 = vpack.c.b16 %v631, %v630
  %v845 = vpack.c.b16 %v633, %v632
  %v846 = vpack.c.b16 %v635, %v634
  %v847 = vpack.c.b16 %v637, %v636
  %v848 = vpack.c.b16 %v639, %v638
  %v849 = vpack.c.b16 %v641, %v640
  %v850 = vpack.c.b16 %v643, %v642
  %v851 = vpack.c.b16 %v645, %v644
  %v852 = vpack.c.b16 %v647, %v646
  %v853 = vpack.c.b16 %v649, %v648
  %v854 = vpack.c.b16 %v651, %v650
  %v855 = vpack.c.b16 %v653, %v652
  %v856 = vpack.c.b16 %v655, %v654
  %v857 = vpack.c.b16 %v657, %v656
  %v858 = vpack.c.b16 %v659, %v658
  %v859 = vpack.c.b16 %v661, %v660
  %v860 = vpack.c.b16 %v663, %v662
  %v861 = vpack.c.b16 %v665, %v664
  %v862 = vpack.c.b16 %v667, %v666
  %v863 = vpack.c.b16 %v669, %v668
  %v864 = vpack.c.b16 %v671, %v670
  %v865 = vpack.c.b16 %v673, %v672
  %v866 = vpack.c.b16 %v675, %v674
  %v867 = vpack.c.b16 %v677, %v676
  %v868 = vpack.c.b16 %v679, %v678
  %v869 = vpack.c.b16 %v681, %v680
  %v870 = vpack.c.b16 %v683, %v682
  %v871 = vpack.c.b16 %v685, %v684
  %v872 = vpack.c.b16 %v687, %v686
  %v873 = vpack.c.b16 %v689, %v688
  %v874 = vpack.c.b16 %v691, %v690
  %v875 = vpack.c.b16 %v693, %v692
  %v876 = vpack.c.b16 %v695, %v694
  %v877 = vpack.c.b16 %v697, %v696
  %v878 = vpack.c.b16 %v699, %v698
  %v879 = vpack.c.b16 %v701, %v700
  %v880 = vpack.c.b16 %v703, %v702
  %v881 = vpack.c.b16 %v705, %v704
  %v882 = vpack.c.b16 %v707, %v706
  %v883 = vpack.c.b16 %v709, %v708
  %v884 = vpack.c.b16 %v711, %v710
  %v885 = vpack.c.b16 %v713, %v712
  %v886 = vpack.c.b16 %v715, %v714
  %v887 = vpack.c.b16 %v717, %v716
  %v888 = vpack.c.b16 %v719, %v718
  %v889 = vpack.c.b16 %v721, %v720
  %v890 = vpack.c.b16 %v723, %v722
  %v891 = vpack.c.b16 %v725, %v724
  %v892 = vpack.c.b16 %v727, %v726
  %v893 = vpack.c.b16 %v729, %v728
  %v894 = vpack.c.b16 %v731, %v730
  %v895 = vpack.c.b16 %v733, %v732
  %v896 = vpack.c.b16 %v735, %v734
  %v897 = vpack.c.b16 %v737, %v736
  %v898 = vpack.c.b16 %v739, %v738
  %v899 = vpack.c.b16 %v741, %v740
  %v900 = vpack.c.b16 %v743, %v742
  %v901 = vpack.c.b16 %v745, %v744
  %v902 = vpack.c.b16 %v747, %v746
  %v903 = vpack.c.b16 %v749, %v748
  %v904 = vpack.c.b16 %v751, %v750
  %v905 = vpack.c.b16 %v753, %v752
  %v906 = vpack.c.b16 %v755, %v754
  %v907 = vpack.c.b16 %v757, %v756
  %v908 = vpack.c.b16 %v759, %v758
  %v909 = vpack.c.b16 %v761, %v760
  %v910 = vpack.c.b16 %v763, %v762
  %v911 = vpack.c.b16 %v765, %v764
  %v912 = vpack.c.b16 %v767, %v766
  %v913 = vpack.c.b16 %v769, %v768
  %v914 = vpack.c.b16 %v771, %v770
  %v915 = vpack.c.b16 %v773, %v772
  %v916 = vpack.c.b16 %v775, %v774
  %v917 = vpack.c.b16 %v777, %v776
  %v918 = vpack.c.b16 %v779, %v778
  %v919 = vpack.c.b16 %v781, %v780
  %v920 = vpack.c.b16 %v783, %v782
  %v921 = vpack.c.b16 %v785, %v784
  %v922 = vpack.c.b16 %v787, %v786
  %v923 = vpack.c.b16 %v789, %v788
  %v924 = vpack.c.b16 %v791, %v790
  %v925 = vpack.c.b16 %v793, %v792
  %v926 = vpack.c.b16 %v795, %v794
  %v927 = vpack.c.b16 %v797, %v796
  %v928 = vpack.c.b16 %v799, %v798
  %v929 = vpack.c.b16 %v801, %v800
  %v1074 = vunpack.c.l.b16 %v270
  %v1075 = vunpack.c.l.b16 %v271
  %v1076 = vunpack.c.l.b16 %v272
  %v1077 = vunpack.c.l.b16 %v273
  %v1078 = vunpack.c.l.b16 %v274
  %v1079 = vunpack.c.l.b16 %v275
  %v1080 = vunpack.c.l.b16 %v276
  %v1081 = vunpack.c.l.b16 %v277
  %v1082 = vunpack.c.l.b16 %v278
  %v1083 = vunpack.c.l.b16 %v279
  %v1084 = vunpack.c.l.b16 %v280
  %v1085 = vunpack.c.l.b16 %v281
  %v1086 = vunpack.c.l.b16 %v282
  %v1087 = vunpack.c.l.b16 %v283
  %v1088 = vunpack.c.l.b16 %v284
  %v1089 = vunpack.c.l.b16 %v285
  %v1090 = vpack.c.b16 %v1075, %v1074
  %v1091 = vpack.c.b16 %v1077, %v1076
  %v1092 = vpack.c.b16 %v1079, %v1078
  %v1093 = vpack.c.b16 %v1081, %v1080
  %v1094 = vpack.c.b16 %v1083, %v1082
  %v1095 = vpack.c.b16 %v1085, %v1084
  %v1096 = vpack.c.b16 %v1087, %v1086
  %v1097 = vpack.c.b16 %v1089, %v1088
  %1106 = vmatpush.bf16.msra.mxu0 %v1097
  %1107 = vmatpush.bf16.msra.mxu0 %v1096
  %1108 = vmatpush.bf16.msra.mxu0 %v1095
  %1109 = vmatpush.bf16.msra.mxu0 %v1094
  %1110 = vmatpush.bf16.msra.mxu0 %v1093
  %1111 = vmatpush.bf16.msra.mxu0 %v1092
  %1112 = vmatpush.bf16.msra.mxu0 %v1091
  %1113 = vmatpush.bf16.msra.mxu0 %v1090
  %1114 = vmatmul.bf16.gmra.mxu0 %v802
  %v1115 = vpop.f32.mrf.mxu0
  %v1116 = vadd.f32 %v288, %v1115
  %v1117 = vpop.f32.mrf.mxu0
  %v1118 = vadd.f32 %v288, %v1117
  %1119 = vmatmul.bf16.gmra.mxu0 %v803
  %v1120 = vpop.f32.mrf.mxu0
  %v1121 = vadd.f32 %v288, %v1120
  %v1122 = vpop.f32.mrf.mxu0
  %v1123 = vadd.f32 %v288, %v1122
  %1124 = vmatmul.bf16.gmra.mxu0 %v804
  %v1125 = vpop.f32.mrf.mxu0
  %v1126 = vadd.f32 %v288, %v1125
  %v1127 = vpop.f32.mrf.mxu0
  %v1128 = vadd.f32 %v288, %v1127
  %1129 = vmatmul.bf16.gmra.mxu0 %v805
  %v1130 = vpop.f32.mrf.mxu0
  %v1131 = vadd.f32 %v288, %v1130
  %v1132 = vpop.f32.mrf.mxu0
  %v1133 = vadd.f32 %v288, %v1132
  %1134 = vmatmul.bf16.gmra.mxu0 %v806
  %v1135 = vpop.f32.mrf.mxu0
  %v1136 = vadd.f32 %v288, %v1135
  %v1137 = vpop.f32.mrf.mxu0
  %v1138 = vadd.f32 %v288, %v1137
  %1139 = vmatmul.bf16.gmra.mxu0 %v807
  %v1140 = vpop.f32.mrf.mxu0
  %v1141 = vadd.f32 %v288, %v1140
  %v1142 = vpop.f32.mrf.mxu0
  %v1143 = vadd.f32 %v288, %v1142
  %1144 = vmatmul.bf16.gmra.mxu0 %v808
  %v1145 = vpop.f32.mrf.mxu0
  %v1146 = vadd.f32 %v288, %v1145
  %v1147 = vpop.f32.mrf.mxu0
  %v1148 = vadd.f32 %v288, %v1147
  %1149 = vmatmul.bf16.gmra.mxu0 %v809
  %v1150 = vpop.f32.mrf.mxu0
  %v1151 = vadd.f32 %v288, %v1150
  %v1152 = vpop.f32.mrf.mxu0
  %v1153 = vadd.f32 %v288, %v1152
  %1154 = vmatmul.bf16.gmra.mxu0 %v810
  %v1155 = vpop.f32.mrf.mxu0
  %v1156 = vadd.f32 %v288, %v1155
  %v1157 = vpop.f32.mrf.mxu0
  %v1158 = vadd.f32 %v288, %v1157
  %1159 = vmatmul.bf16.gmra.mxu0 %v811
  %v1160 = vpop.f32.mrf.mxu0
  %v1161 = vadd.f32 %v288, %v1160
  %v1162 = vpop.f32.mrf.mxu0
  %v1163 = vadd.f32 %v288, %v1162
  %1164 = vmatmul.bf16.gmra.mxu0 %v812
  %v1165 = vpop.f32.mrf.mxu0
  %v1166 = vadd.f32 %v288, %v1165
  %v1167 = vpop.f32.mrf.mxu0
  %v1168 = vadd.f32 %v288, %v1167
  %1169 = vmatmul.bf16.gmra.mxu0 %v813
  %v1170 = vpop.f32.mrf.mxu0
  %v1171 = vadd.f32 %v288, %v1170
  %v1172 = vpop.f32.mrf.mxu0
  %v1173 = vadd.f32 %v288, %v1172
  %1174 = vmatmul.bf16.gmra.mxu0 %v814
  %v1175 = vpop.f32.mrf.mxu0
  %v1176 = vadd.f32 %v288, %v1175
  %v1177 = vpop.f32.mrf.mxu0
  %v1178 = vadd.f32 %v288, %v1177
  %1179 = vmatmul.bf16.gmra.mxu0 %v815
  %v1180 = vpop.f32.mrf.mxu0
  %v1181 = vadd.f32 %v288, %v1180
  %v1182 = vpop.f32.mrf.mxu0
  %v1183 = vadd.f32 %v288, %v1182
  %1184 = vmatmul.bf16.gmra.mxu0 %v816
  %v1185 = vpop.f32.mrf.mxu0
  %v1186 = vadd.f32 %v288, %v1185
  %v1187 = vpop.f32.mrf.mxu0
  %v1188 = vadd.f32 %v288, %v1187
  %1189 = vmatmul.bf16.gmra.mxu0 %v817
  %v1190 = vpop.f32.mrf.mxu0
  %v1191 = vadd.f32 %v288, %v1190
  %v1192 = vpop.f32.mrf.mxu0
  %v1193 = vadd.f32 %v288, %v1192
  %1194 = vmatmul.bf16.gmra.mxu0 %v818
  %v1195 = vpop.f32.mrf.mxu0
  %v1196 = vadd.f32 %v288, %v1195
  %v1197 = vpop.f32.mrf.mxu0
  %v1198 = vadd.f32 %v288, %v1197
  %1199 = vmatmul.bf16.gmra.mxu0 %v819
  %v1200 = vpop.f32.mrf.mxu0
  %v1201 = vadd.f32 %v288, %v1200
  %v1202 = vpop.f32.mrf.mxu0
  %v1203 = vadd.f32 %v288, %v1202
  %1204 = vmatmul.bf16.gmra.mxu0 %v820
  %v1205 = vpop.f32.mrf.mxu0
  %v1206 = vadd.f32 %v288, %v1205
  %v1207 = vpop.f32.mrf.mxu0
  %v1208 = vadd.f32 %v288, %v1207
  %1209 = vmatmul.bf16.gmra.mxu0 %v821
  %v1210 = vpop.f32.mrf.mxu0
  %v1211 = vadd.f32 %v288, %v1210
  %v1212 = vpop.f32.mrf.mxu0
  %v1213 = vadd.f32 %v288, %v1212
  %1214 = vmatmul.bf16.gmra.mxu0 %v822
  %v1215 = vpop.f32.mrf.mxu0
  %v1216 = vadd.f32 %v288, %v1215
  %v1217 = vpop.f32.mrf.mxu0
  %v1218 = vadd.f32 %v288, %v1217
  %1219 = vmatmul.bf16.gmra.mxu0 %v823
  %v1220 = vpop.f32.mrf.mxu0
  %v1221 = vadd.f32 %v288, %v1220
  %v1222 = vpop.f32.mrf.mxu0
  %v1223 = vadd.f32 %v288, %v1222
  %1224 = vmatmul.bf16.gmra.mxu0 %v824
  %v1225 = vpop.f32.mrf.mxu0
  %v1226 = vadd.f32 %v288, %v1225
  %v1227 = vpop.f32.mrf.mxu0
  %v1228 = vadd.f32 %v288, %v1227
  %1229 = vmatmul.bf16.gmra.mxu0 %v825
  %v1230 = vpop.f32.mrf.mxu0
  %v1231 = vadd.f32 %v288, %v1230
  %v1232 = vpop.f32.mrf.mxu0
  %v1233 = vadd.f32 %v288, %v1232
  %1234 = vmatmul.bf16.gmra.mxu0 %v826
  %v1235 = vpop.f32.mrf.mxu0
  %v1236 = vadd.f32 %v288, %v1235
  %v1237 = vpop.f32.mrf.mxu0
  %v1238 = vadd.f32 %v288, %v1237
  %1239 = vmatmul.bf16.gmra.mxu0 %v827
  %v1240 = vpop.f32.mrf.mxu0
  %v1241 = vadd.f32 %v288, %v1240
  %v1242 = vpop.f32.mrf.mxu0
  %v1243 = vadd.f32 %v288, %v1242
  %1244 = vmatmul.bf16.gmra.mxu0 %v828
  %v1245 = vpop.f32.mrf.mxu0
  %v1246 = vadd.f32 %v288, %v1245
  %v1247 = vpop.f32.mrf.mxu0
  %v1248 = vadd.f32 %v288, %v1247
  %1249 = vmatmul.bf16.gmra.mxu0 %v829
  %v1250 = vpop.f32.mrf.mxu0
  %v1251 = vadd.f32 %v288, %v1250
  %v1252 = vpop.f32.mrf.mxu0
  %v1253 = vadd.f32 %v288, %v1252
  %1254 = vmatmul.bf16.gmra.mxu0 %v830
  %v1255 = vpop.f32.mrf.mxu0
  %v1256 = vadd.f32 %v288, %v1255
  %v1257 = vpop.f32.mrf.mxu0
  %v1258 = vadd.f32 %v288, %v1257
  %1259 = vmatmul.bf16.gmra.mxu0 %v831
  %v1260 = vpop.f32.mrf.mxu0
  %v1261 = vadd.f32 %v288, %v1260
  %v1262 = vpop.f32.mrf.mxu0
  %v1263 = vadd.f32 %v288, %v1262
  %1264 = vmatmul.bf16.gmra.mxu0 %v832
  %v1265 = vpop.f32.mrf.mxu0
  %v1266 = vadd.f32 %v288, %v1265
  %v1267 = vpop.f32.mrf.mxu0
  %v1268 = vadd.f32 %v288, %v1267
  %1269 = vmatmul.bf16.gmra.mxu0 %v833
  %v1270 = vpop.f32.mrf.mxu0
  %v1271 = vadd.f32 %v288, %v1270
  %v1272 = vpop.f32.mrf.mxu0
  %v1273 = vadd.f32 %v288, %v1272
  %1274 = vmatmul.bf16.gmra.mxu0 %v834
  %v1275 = vpop.f32.mrf.mxu0
  %v1276 = vadd.f32 %v288, %v1275
  %v1277 = vpop.f32.mrf.mxu0
  %v1278 = vadd.f32 %v288, %v1277
  %1279 = vmatmul.bf16.gmra.mxu0 %v835
  %v1280 = vpop.f32.mrf.mxu0
  %v1281 = vadd.f32 %v288, %v1280
  %v1282 = vpop.f32.mrf.mxu0
  %v1283 = vadd.f32 %v288, %v1282
  %1284 = vmatmul.bf16.gmra.mxu0 %v836
  %v1285 = vpop.f32.mrf.mxu0
  %v1286 = vadd.f32 %v288, %v1285
  %v1287 = vpop.f32.mrf.mxu0
  %v1288 = vadd.f32 %v288, %v1287
  %1289 = vmatmul.bf16.gmra.mxu0 %v837
  %v1290 = vpop.f32.mrf.mxu0
  %v1291 = vadd.f32 %v288, %v1290
  %v1292 = vpop.f32.mrf.mxu0
  %v1293 = vadd.f32 %v288, %v1292
  %1294 = vmatmul.bf16.gmra.mxu0 %v838
  %v1295 = vpop.f32.mrf.mxu0
  %v1296 = vadd.f32 %v288, %v1295
  %v1297 = vpop.f32.mrf.mxu0
  %v1298 = vadd.f32 %v288, %v1297
  %1299 = vmatmul.bf16.gmra.mxu0 %v839
  %v1300 = vpop.f32.mrf.mxu0
  %v1301 = vadd.f32 %v288, %v1300
  %v1302 = vpop.f32.mrf.mxu0
  %v1303 = vadd.f32 %v288, %v1302
  %1304 = vmatmul.bf16.gmra.mxu0 %v840
  %v1305 = vpop.f32.mrf.mxu0
  %v1306 = vadd.f32 %v288, %v1305
  %v1307 = vpop.f32.mrf.mxu0
  %v1308 = vadd.f32 %v288, %v1307
  %1309 = vmatmul.bf16.gmra.mxu0 %v841
  %v1310 = vpop.f32.mrf.mxu0
  %v1311 = vadd.f32 %v288, %v1310
  %v1312 = vpop.f32.mrf.mxu0
  %v1313 = vadd.f32 %v288, %v1312
  %1314 = vmatmul.bf16.gmra.mxu0 %v842
  %v1315 = vpop.f32.mrf.mxu0
  %v1316 = vadd.f32 %v288, %v1315
  %v1317 = vpop.f32.mrf.mxu0
  %v1318 = vadd.f32 %v288, %v1317
  %1319 = vmatmul.bf16.gmra.mxu0 %v843
  %v1320 = vpop.f32.mrf.mxu0
  %v1321 = vadd.f32 %v288, %v1320
  %v1322 = vpop.f32.mrf.mxu0
  %v1323 = vadd.f32 %v288, %v1322
  %1324 = vmatmul.bf16.gmra.mxu0 %v844
  %v1325 = vpop.f32.mrf.mxu0
  %v1326 = vadd.f32 %v288, %v1325
  %v1327 = vpop.f32.mrf.mxu0
  %v1328 = vadd.f32 %v288, %v1327
  %1329 = vmatmul.bf16.gmra.mxu0 %v845
  %v1330 = vpop.f32.mrf.mxu0
  %v1331 = vadd.f32 %v288, %v1330
  %v1332 = vpop.f32.mrf.mxu0
  %v1333 = vadd.f32 %v288, %v1332
  %1334 = vmatmul.bf16.gmra.mxu0 %v846
  %v1335 = vpop.f32.mrf.mxu0
  %v1336 = vadd.f32 %v288, %v1335
  %v1337 = vpop.f32.mrf.mxu0
  %v1338 = vadd.f32 %v288, %v1337
  %1339 = vmatmul.bf16.gmra.mxu0 %v847
  %v1340 = vpop.f32.mrf.mxu0
  %v1341 = vadd.f32 %v288, %v1340
  %v1342 = vpop.f32.mrf.mxu0
  %v1343 = vadd.f32 %v288, %v1342
  %1344 = vmatmul.bf16.gmra.mxu0 %v848
  %v1345 = vpop.f32.mrf.mxu0
  %v1346 = vadd.f32 %v288, %v1345
  %v1347 = vpop.f32.mrf.mxu0
  %v1348 = vadd.f32 %v288, %v1347
  %1349 = vmatmul.bf16.gmra.mxu0 %v849
  %v1350 = vpop.f32.mrf.mxu0
  %v1351 = vadd.f32 %v288, %v1350
  %v1352 = vpop.f32.mrf.mxu0
  %v1353 = vadd.f32 %v288, %v1352
  %1354 = vmatmul.bf16.gmra.mxu0 %v850
  %v1355 = vpop.f32.mrf.mxu0
  %v1356 = vadd.f32 %v288, %v1355
  %v1357 = vpop.f32.mrf.mxu0
  %v1358 = vadd.f32 %v288, %v1357
  %1359 = vmatmul.bf16.gmra.mxu0 %v851
  %v1360 = vpop.f32.mrf.mxu0
  %v1361 = vadd.f32 %v288, %v1360
  %v1362 = vpop.f32.mrf.mxu0
  %v1363 = vadd.f32 %v288, %v1362
  %1364 = vmatmul.bf16.gmra.mxu0 %v852
  %v1365 = vpop.f32.mrf.mxu0
  %v1366 = vadd.f32 %v288, %v1365
  %v1367 = vpop.f32.mrf.mxu0
  %v1368 = vadd.f32 %v288, %v1367
  %1369 = vmatmul.bf16.gmra.mxu0 %v853
  %v1370 = vpop.f32.mrf.mxu0
  %v1371 = vadd.f32 %v288, %v1370
  %v1372 = vpop.f32.mrf.mxu0
  %v1373 = vadd.f32 %v288, %v1372
  %1374 = vmatmul.bf16.gmra.mxu0 %v854
  %v1375 = vpop.f32.mrf.mxu0
  %v1376 = vadd.f32 %v288, %v1375
  %v1377 = vpop.f32.mrf.mxu0
  %v1378 = vadd.f32 %v288, %v1377
  %1379 = vmatmul.bf16.gmra.mxu0 %v855
  %v1380 = vpop.f32.mrf.mxu0
  %v1381 = vadd.f32 %v288, %v1380
  %v1382 = vpop.f32.mrf.mxu0
  %v1383 = vadd.f32 %v288, %v1382
  %1384 = vmatmul.bf16.gmra.mxu0 %v856
  %v1385 = vpop.f32.mrf.mxu0
  %v1386 = vadd.f32 %v288, %v1385
  %v1387 = vpop.f32.mrf.mxu0
  %v1388 = vadd.f32 %v288, %v1387
  %1389 = vmatmul.bf16.gmra.mxu0 %v857
  %v1390 = vpop.f32.mrf.mxu0
  %v1391 = vadd.f32 %v288, %v1390
  %v1392 = vpop.f32.mrf.mxu0
  %v1393 = vadd.f32 %v288, %v1392
  %1394 = vmatmul.bf16.gmra.mxu0 %v858
  %v1395 = vpop.f32.mrf.mxu0
  %v1396 = vadd.f32 %v288, %v1395
  %v1397 = vpop.f32.mrf.mxu0
  %v1398 = vadd.f32 %v288, %v1397
  %1399 = vmatmul.bf16.gmra.mxu0 %v859
  %v1400 = vpop.f32.mrf.mxu0
  %v1401 = vadd.f32 %v288, %v1400
  %v1402 = vpop.f32.mrf.mxu0
  %v1403 = vadd.f32 %v288, %v1402
  %1404 = vmatmul.bf16.gmra.mxu0 %v860
  %v1405 = vpop.f32.mrf.mxu0
  %v1406 = vadd.f32 %v288, %v1405
  %v1407 = vpop.f32.mrf.mxu0
  %v1408 = vadd.f32 %v288, %v1407
  %1409 = vmatmul.bf16.gmra.mxu0 %v861
  %v1410 = vpop.f32.mrf.mxu0
  %v1411 = vadd.f32 %v288, %v1410
  %v1412 = vpop.f32.mrf.mxu0
  %v1413 = vadd.f32 %v288, %v1412
  %1414 = vmatmul.bf16.gmra.mxu0 %v862
  %v1415 = vpop.f32.mrf.mxu0
  %v1416 = vadd.f32 %v288, %v1415
  %v1417 = vpop.f32.mrf.mxu0
  %v1418 = vadd.f32 %v288, %v1417
  %1419 = vmatmul.bf16.gmra.mxu0 %v863
  %v1420 = vpop.f32.mrf.mxu0
  %v1421 = vadd.f32 %v288, %v1420
  %v1422 = vpop.f32.mrf.mxu0
  %v1423 = vadd.f32 %v288, %v1422
  %1424 = vmatmul.bf16.gmra.mxu0 %v864
  %v1425 = vpop.f32.mrf.mxu0
  %v1426 = vadd.f32 %v288, %v1425
  %v1427 = vpop.f32.mrf.mxu0
  %v1428 = vadd.f32 %v288, %v1427
  %1429 = vmatmul.bf16.gmra.mxu0 %v865
  %v1430 = vpop.f32.mrf.mxu0
  %v1431 = vadd.f32 %v288, %v1430
  %v1432 = vpop.f32.mrf.mxu0
  %v1433 = vadd.f32 %v288, %v1432
  %1434 = vmatmul.bf16.gmra.mxu0 %v866
  %v1435 = vpop.f32.mrf.mxu0
  %v1436 = vadd.f32 %v288, %v1435
  %v1437 = vpop.f32.mrf.mxu0
  %v1438 = vadd.f32 %v288, %v1437
  %1439 = vmatmul.bf16.gmra.mxu0 %v867
  %v1440 = vpop.f32.mrf.mxu0
  %v1441 = vadd.f32 %v288, %v1440
  %v1442 = vpop.f32.mrf.mxu0
  %v1443 = vadd.f32 %v288, %v1442
  %1444 = vmatmul.bf16.gmra.mxu0 %v868
  %v1445 = vpop.f32.mrf.mxu0
  %v1446 = vadd.f32 %v288, %v1445
  %v1447 = vpop.f32.mrf.mxu0
  %v1448 = vadd.f32 %v288, %v1447
  %1449 = vmatmul.bf16.gmra.mxu0 %v869
  %v1450 = vpop.f32.mrf.mxu0
  %v1451 = vadd.f32 %v288, %v1450
  %v1452 = vpop.f32.mrf.mxu0
  %v1453 = vadd.f32 %v288, %v1452
  %1454 = vmatmul.bf16.gmra.mxu0 %v870
  %v1455 = vpop.f32.mrf.mxu0
  %v1456 = vadd.f32 %v288, %v1455
  %v1457 = vpop.f32.mrf.mxu0
  %v1458 = vadd.f32 %v288, %v1457
  %1459 = vmatmul.bf16.gmra.mxu0 %v871
  %v1460 = vpop.f32.mrf.mxu0
  %v1461 = vadd.f32 %v288, %v1460
  %v1462 = vpop.f32.mrf.mxu0
  %v1463 = vadd.f32 %v288, %v1462
  %1464 = vmatmul.bf16.gmra.mxu0 %v872
  %v1465 = vpop.f32.mrf.mxu0
  %v1466 = vadd.f32 %v288, %v1465
  %v1467 = vpop.f32.mrf.mxu0
  %v1468 = vadd.f32 %v288, %v1467
  %1469 = vmatmul.bf16.gmra.mxu0 %v873
  %v1470 = vpop.f32.mrf.mxu0
  %v1471 = vadd.f32 %v288, %v1470
  %v1472 = vpop.f32.mrf.mxu0
  %v1473 = vadd.f32 %v288, %v1472
  %1474 = vmatmul.bf16.gmra.mxu0 %v874
  %v1475 = vpop.f32.mrf.mxu0
  %v1476 = vadd.f32 %v288, %v1475
  %v1477 = vpop.f32.mrf.mxu0
  %v1478 = vadd.f32 %v288, %v1477
  %1479 = vmatmul.bf16.gmra.mxu0 %v875
  %v1480 = vpop.f32.mrf.mxu0
  %v1481 = vadd.f32 %v288, %v1480
  %v1482 = vpop.f32.mrf.mxu0
  %v1483 = vadd.f32 %v288, %v1482
  %1484 = vmatmul.bf16.gmra.mxu0 %v876
  %v1485 = vpop.f32.mrf.mxu0
  %v1486 = vadd.f32 %v288, %v1485
  %v1487 = vpop.f32.mrf.mxu0
  %v1488 = vadd.f32 %v288, %v1487
  %1489 = vmatmul.bf16.gmra.mxu0 %v877
  %v1490 = vpop.f32.mrf.mxu0
  %v1491 = vadd.f32 %v288, %v1490
  %v1492 = vpop.f32.mrf.mxu0
  %v1493 = vadd.f32 %v288, %v1492
  %1494 = vmatmul.bf16.gmra.mxu0 %v878
  %v1495 = vpop.f32.mrf.mxu0
  %v1496 = vadd.f32 %v288, %v1495
  %v1497 = vpop.f32.mrf.mxu0
  %v1498 = vadd.f32 %v288, %v1497
  %1499 = vmatmul.bf16.gmra.mxu0 %v879
  %v1500 = vpop.f32.mrf.mxu0
  %v1501 = vadd.f32 %v288, %v1500
  %v1502 = vpop.f32.mrf.mxu0
  %v1503 = vadd.f32 %v288, %v1502
  %1504 = vmatmul.bf16.gmra.mxu0 %v880
  %v1505 = vpop.f32.mrf.mxu0
  %v1506 = vadd.f32 %v288, %v1505
  %v1507 = vpop.f32.mrf.mxu0
  %v1508 = vadd.f32 %v288, %v1507
  %1509 = vmatmul.bf16.gmra.mxu0 %v881
  %v1510 = vpop.f32.mrf.mxu0
  %v1511 = vadd.f32 %v288, %v1510
  %v1512 = vpop.f32.mrf.mxu0
  %v1513 = vadd.f32 %v288, %v1512
  %1514 = vmatmul.bf16.gmra.mxu0 %v882
  %v1515 = vpop.f32.mrf.mxu0
  %v1516 = vadd.f32 %v288, %v1515
  %v1517 = vpop.f32.mrf.mxu0
  %v1518 = vadd.f32 %v288, %v1517
  %1519 = vmatmul.bf16.gmra.mxu0 %v883
  %v1520 = vpop.f32.mrf.mxu0
  %v1521 = vadd.f32 %v288, %v1520
  %v1522 = vpop.f32.mrf.mxu0
  %v1523 = vadd.f32 %v288, %v1522
  %1524 = vmatmul.bf16.gmra.mxu0 %v884
  %v1525 = vpop.f32.mrf.mxu0
  %v1526 = vadd.f32 %v288, %v1525
  %v1527 = vpop.f32.mrf.mxu0
  %v1528 = vadd.f32 %v288, %v1527
  %1529 = vmatmul.bf16.gmra.mxu0 %v885
  %v1530 = vpop.f32.mrf.mxu0
  %v1531 = vadd.f32 %v288, %v1530
  %v1532 = vpop.f32.mrf.mxu0
  %v1533 = vadd.f32 %v288, %v1532
  %1534 = vmatmul.bf16.gmra.mxu0 %v886
  %v1535 = vpop.f32.mrf.mxu0
  %v1536 = vadd.f32 %v288, %v1535
  %v1537 = vpop.f32.mrf.mxu0
  %v1538 = vadd.f32 %v288, %v1537
  %1539 = vmatmul.bf16.gmra.mxu0 %v887
  %v1540 = vpop.f32.mrf.mxu0
  %v1541 = vadd.f32 %v288, %v1540
  %v1542 = vpop.f32.mrf.mxu0
  %v1543 = vadd.f32 %v288, %v1542
  %1544 = vmatmul.bf16.gmra.mxu0 %v888
  %v1545 = vpop.f32.mrf.mxu0
  %v1546 = vadd.f32 %v288, %v1545
  %v1547 = vpop.f32.mrf.mxu0
  %v1548 = vadd.f32 %v288, %v1547
  %1549 = vmatmul.bf16.gmra.mxu0 %v889
  %v1550 = vpop.f32.mrf.mxu0
  %v1551 = vadd.f32 %v288, %v1550
  %v1552 = vpop.f32.mrf.mxu0
  %v1553 = vadd.f32 %v288, %v1552
  %1554 = vmatmul.bf16.gmra.mxu0 %v890
  %v1555 = vpop.f32.mrf.mxu0
  %v1556 = vadd.f32 %v288, %v1555
  %v1557 = vpop.f32.mrf.mxu0
  %v1558 = vadd.f32 %v288, %v1557
  %1559 = vmatmul.bf16.gmra.mxu0 %v891
  %v1560 = vpop.f32.mrf.mxu0
  %v1561 = vadd.f32 %v288, %v1560
  %v1562 = vpop.f32.mrf.mxu0
  %v1563 = vadd.f32 %v288, %v1562
  %1564 = vmatmul.bf16.gmra.mxu0 %v892
  %v1565 = vpop.f32.mrf.mxu0
  %v1566 = vadd.f32 %v288, %v1565
  %v1567 = vpop.f32.mrf.mxu0
  %v1568 = vadd.f32 %v288, %v1567
  %1569 = vmatmul.bf16.gmra.mxu0 %v893
  %v1570 = vpop.f32.mrf.mxu0
  %v1571 = vadd.f32 %v288, %v1570
  %v1572 = vpop.f32.mrf.mxu0
  %v1573 = vadd.f32 %v288, %v1572
  %1574 = vmatmul.bf16.gmra.mxu0 %v894
  %v1575 = vpop.f32.mrf.mxu0
  %v1576 = vadd.f32 %v288, %v1575
  %v1577 = vpop.f32.mrf.mxu0
  %v1578 = vadd.f32 %v288, %v1577
  %1579 = vmatmul.bf16.gmra.mxu0 %v895
  %v1580 = vpop.f32.mrf.mxu0
  %v1581 = vadd.f32 %v288, %v1580
  %v1582 = vpop.f32.mrf.mxu0
  %v1583 = vadd.f32 %v288, %v1582
  %1584 = vmatmul.bf16.gmra.mxu0 %v896
  %v1585 = vpop.f32.mrf.mxu0
  %v1586 = vadd.f32 %v288, %v1585
  %v1587 = vpop.f32.mrf.mxu0
  %v1588 = vadd.f32 %v288, %v1587
  %1589 = vmatmul.bf16.gmra.mxu0 %v897
  %v1590 = vpop.f32.mrf.mxu0
  %v1591 = vadd.f32 %v288, %v1590
  %v1592 = vpop.f32.mrf.mxu0
  %v1593 = vadd.f32 %v288, %v1592
  %1594 = vmatmul.bf16.gmra.mxu0 %v898
  %v1595 = vpop.f32.mrf.mxu0
  %v1596 = vadd.f32 %v288, %v1595
  %v1597 = vpop.f32.mrf.mxu0
  %v1598 = vadd.f32 %v288, %v1597
  %1599 = vmatmul.bf16.gmra.mxu0 %v899
  %v1600 = vpop.f32.mrf.mxu0
  %v1601 = vadd.f32 %v288, %v1600
  %v1602 = vpop.f32.mrf.mxu0
  %v1603 = vadd.f32 %v288, %v1602
  %1604 = vmatmul.bf16.gmra.mxu0 %v900
  %v1605 = vpop.f32.mrf.mxu0
  %v1606 = vadd.f32 %v288, %v1605
  %v1607 = vpop.f32.mrf.mxu0
  %v1608 = vadd.f32 %v288, %v1607
  %1609 = vmatmul.bf16.gmra.mxu0 %v901
  %v1610 = vpop.f32.mrf.mxu0
  %v1611 = vadd.f32 %v288, %v1610
  %v1612 = vpop.f32.mrf.mxu0
  %v1613 = vadd.f32 %v288, %v1612
  %1614 = vmatmul.bf16.gmra.mxu0 %v902
  %v1615 = vpop.f32.mrf.mxu0
  %v1616 = vadd.f32 %v288, %v1615
  %v1617 = vpop.f32.mrf.mxu0
  %v1618 = vadd.f32 %v288, %v1617
  %1619 = vmatmul.bf16.gmra.mxu0 %v903
  %v1620 = vpop.f32.mrf.mxu0
  %v1621 = vadd.f32 %v288, %v1620
  %v1622 = vpop.f32.mrf.mxu0
  %v1623 = vadd.f32 %v288, %v1622
  %1624 = vmatmul.bf16.gmra.mxu0 %v904
  %v1625 = vpop.f32.mrf.mxu0
  %v1626 = vadd.f32 %v288, %v1625
  %v1627 = vpop.f32.mrf.mxu0
  %v1628 = vadd.f32 %v288, %v1627
  %1629 = vmatmul.bf16.gmra.mxu0 %v905
  %v1630 = vpop.f32.mrf.mxu0
  %v1631 = vadd.f32 %v288, %v1630
  %v1632 = vpop.f32.mrf.mxu0
  %v1633 = vadd.f32 %v288, %v1632
  %1634 = vmatmul.bf16.gmra.mxu0 %v906
  %v1635 = vpop.f32.mrf.mxu0
  %v1636 = vadd.f32 %v288, %v1635
  %v1637 = vpop.f32.mrf.mxu0
  %v1638 = vadd.f32 %v288, %v1637
  %1639 = vmatmul.bf16.gmra.mxu0 %v907
  %v1640 = vpop.f32.mrf.mxu0
  %v1641 = vadd.f32 %v288, %v1640
  %v1642 = vpop.f32.mrf.mxu0
  %v1643 = vadd.f32 %v288, %v1642
  %1644 = vmatmul.bf16.gmra.mxu0 %v908
  %v1645 = vpop.f32.mrf.mxu0
  %v1646 = vadd.f32 %v288, %v1645
  %v1647 = vpop.f32.mrf.mxu0
  %v1648 = vadd.f32 %v288, %v1647
  %1649 = vmatmul.bf16.gmra.mxu0 %v909
  %v1650 = vpop.f32.mrf.mxu0
  %v1651 = vadd.f32 %v288, %v1650
  %v1652 = vpop.f32.mrf.mxu0
  %v1653 = vadd.f32 %v288, %v1652
  %1654 = vmatmul.bf16.gmra.mxu0 %v910
  %v1655 = vpop.f32.mrf.mxu0
  %v1656 = vadd.f32 %v288, %v1655
  %v1657 = vpop.f32.mrf.mxu0
  %v1658 = vadd.f32 %v288, %v1657
  %1659 = vmatmul.bf16.gmra.mxu0 %v911
  %v1660 = vpop.f32.mrf.mxu0
  %v1661 = vadd.f32 %v288, %v1660
  %v1662 = vpop.f32.mrf.mxu0
  %v1663 = vadd.f32 %v288, %v1662
  %1664 = vmatmul.bf16.gmra.mxu0 %v912
  %v1665 = vpop.f32.mrf.mxu0
  %v1666 = vadd.f32 %v288, %v1665
  %v1667 = vpop.f32.mrf.mxu0
  %v1668 = vadd.f32 %v288, %v1667
  %1669 = vmatmul.bf16.gmra.mxu0 %v913
  %v1670 = vpop.f32.mrf.mxu0
  %v1671 = vadd.f32 %v288, %v1670
  %v1672 = vpop.f32.mrf.mxu0
  %v1673 = vadd.f32 %v288, %v1672
  %1674 = vmatmul.bf16.gmra.mxu0 %v914
  %v1675 = vpop.f32.mrf.mxu0
  %v1676 = vadd.f32 %v288, %v1675
  %v1677 = vpop.f32.mrf.mxu0
  %v1678 = vadd.f32 %v288, %v1677
  %1679 = vmatmul.bf16.gmra.mxu0 %v915
  %v1680 = vpop.f32.mrf.mxu0
  %v1681 = vadd.f32 %v288, %v1680
  %v1682 = vpop.f32.mrf.mxu0
  %v1683 = vadd.f32 %v288, %v1682
  %1684 = vmatmul.bf16.gmra.mxu0 %v916
  %v1685 = vpop.f32.mrf.mxu0
  %v1686 = vadd.f32 %v288, %v1685
  %v1687 = vpop.f32.mrf.mxu0
  %v1688 = vadd.f32 %v288, %v1687
  %1689 = vmatmul.bf16.gmra.mxu0 %v917
  %v1690 = vpop.f32.mrf.mxu0
  %v1691 = vadd.f32 %v288, %v1690
  %v1692 = vpop.f32.mrf.mxu0
  %v1693 = vadd.f32 %v288, %v1692
  %1694 = vmatmul.bf16.gmra.mxu0 %v918
  %v1695 = vpop.f32.mrf.mxu0
  %v1696 = vadd.f32 %v288, %v1695
  %v1697 = vpop.f32.mrf.mxu0
  %v1698 = vadd.f32 %v288, %v1697
  %1699 = vmatmul.bf16.gmra.mxu0 %v919
  %v1700 = vpop.f32.mrf.mxu0
  %v1701 = vadd.f32 %v288, %v1700
  %v1702 = vpop.f32.mrf.mxu0
  %v1703 = vadd.f32 %v288, %v1702
  %1704 = vmatmul.bf16.gmra.mxu0 %v920
  %v1705 = vpop.f32.mrf.mxu0
  %v1706 = vadd.f32 %v288, %v1705
  %v1707 = vpop.f32.mrf.mxu0
  %v1708 = vadd.f32 %v288, %v1707
  %1709 = vmatmul.bf16.gmra.mxu0 %v921
  %v1710 = vpop.f32.mrf.mxu0
  %v1711 = vadd.f32 %v288, %v1710
  %v1712 = vpop.f32.mrf.mxu0
  %v1713 = vadd.f32 %v288, %v1712
  %1714 = vmatmul.bf16.gmra.mxu0 %v922
  %v1715 = vpop.f32.mrf.mxu0
  %v1716 = vadd.f32 %v288, %v1715
  %v1717 = vpop.f32.mrf.mxu0
  %v1718 = vadd.f32 %v288, %v1717
  %1719 = vmatmul.bf16.gmra.mxu0 %v923
  %v1720 = vpop.f32.mrf.mxu0
  %v1721 = vadd.f32 %v288, %v1720
  %v1722 = vpop.f32.mrf.mxu0
  %v1723 = vadd.f32 %v288, %v1722
  %1724 = vmatmul.bf16.gmra.mxu0 %v924
  %v1725 = vpop.f32.mrf.mxu0
  %v1726 = vadd.f32 %v288, %v1725
  %v1727 = vpop.f32.mrf.mxu0
  %v1728 = vadd.f32 %v288, %v1727
  %1729 = vmatmul.bf16.gmra.mxu0 %v925
  %v1730 = vpop.f32.mrf.mxu0
  %v1731 = vadd.f32 %v288, %v1730
  %v1732 = vpop.f32.mrf.mxu0
  %v1733 = vadd.f32 %v288, %v1732
  %1734 = vmatmul.bf16.gmra.mxu0 %v926
  %v1735 = vpop.f32.mrf.mxu0
  %v1736 = vadd.f32 %v288, %v1735
  %v1737 = vpop.f32.mrf.mxu0
  %v1738 = vadd.f32 %v288, %v1737
  %1739 = vmatmul.bf16.gmra.mxu0 %v927
  %v1740 = vpop.f32.mrf.mxu0
  %v1741 = vadd.f32 %v288, %v1740
  %v1742 = vpop.f32.mrf.mxu0
  %v1743 = vadd.f32 %v288, %v1742
  %1744 = vmatmul.bf16.gmra.mxu0 %v928
  %v1745 = vpop.f32.mrf.mxu0
  %v1746 = vadd.f32 %v288, %v1745
  %v1747 = vpop.f32.mrf.mxu0
  %v1748 = vadd.f32 %v288, %v1747
  %1749 = vmatmul.bf16.gmra.mxu0 %v929
  %v1750 = vpop.f32.mrf.mxu0
  %v1751 = vadd.f32 %v288, %v1750
  %v1752 = vpop.f32.mrf.mxu0
  %v1753 = vadd.f32 %v288, %v1752
  %1754 = vdwg.mxu0
  %vm1755 = vcmp.gt.f32.partialorder %v1116, 0.0
  %vm1756 = vcmp.gt.f32.partialorder %v1118, 0.0
  %vm1757 = vcmp.gt.f32.partialorder %v1121, 0.0
  %vm1758 = vcmp.gt.f32.partialorder %v1123, 0.0
  %vm1759 = vcmp.gt.f32.partialorder %v1126, 0.0
  %vm1760 = vcmp.gt.f32.partialorder %v1128, 0.0
  %vm1761 = vcmp.gt.f32.partialorder %v1131, 0.0
  %vm1762 = vcmp.gt.f32.partialorder %v1133, 0.0
  %vm1763 = vcmp.gt.f32.partialorder %v1136, 0.0
  %vm1764 = vcmp.gt.f32.partialorder %v1138, 0.0
  %vm1765 = vcmp.gt.f32.partialorder %v1141, 0.0
  %vm1766 = vcmp.gt.f32.partialorder %v1143, 0.0
  %vm1767 = vcmp.gt.f32.partialorder %v1146, 0.0
  %vm1768 = vcmp.gt.f32.partialorder %v1148, 0.0
  %vm1769 = vcmp.gt.f32.partialorder %v1151, 0.0
  %vm1770 = vcmp.gt.f32.partialorder %v1153, 0.0
  %vm1771 = vcmp.gt.f32.partialorder %v1156, 0.0
  %vm1772 = vcmp.gt.f32.partialorder %v1158, 0.0
  %vm1773 = vcmp.gt.f32.partialorder %v1161, 0.0
  %vm1774 = vcmp.gt.f32.partialorder %v1163, 0.0
  %vm1775 = vcmp.gt.f32.partialorder %v1166, 0.0
  %vm1776 = vcmp.gt.f32.partialorder %v1168, 0.0
  %vm1777 = vcmp.gt.f32.partialorder %v1171, 0.0
  %vm1778 = vcmp.gt.f32.partialorder %v1173, 0.0
  %vm1779 = vcmp.gt.f32.partialorder %v1176, 0.0
  %vm1780 = vcmp.gt.f32.partialorder %v1178, 0.0
  %vm1781 = vcmp.gt.f32.partialorder %v1181, 0.0
  %vm1782 = vcmp.gt.f32.partialorder %v1183, 0.0
  %vm1783 = vcmp.gt.f32.partialorder %v1186, 0.0
  %vm1784 = vcmp.gt.f32.partialorder %v1188, 0.0
  %vm1785 = vcmp.gt.f32.partialorder %v1191, 0.0
  %vm1786 = vcmp.gt.f32.partialorder %v1193, 0.0
  %vm1787 = vcmp.gt.f32.partialorder %v1196, 0.0
  %vm1788 = vcmp.gt.f32.partialorder %v1198, 0.0
  %vm1789 = vcmp.gt.f32.partialorder %v1201, 0.0
  %vm1790 = vcmp.gt.f32.partialorder %v1203, 0.0
  %vm1791 = vcmp.gt.f32.partialorder %v1206, 0.0
  %vm1792 = vcmp.gt.f32.partialorder %v1208, 0.0
  %vm1793 = vcmp.gt.f32.partialorder %v1211, 0.0
  %vm1794 = vcmp.gt.f32.partialorder %v1213, 0.0
  %vm1795 = vcmp.gt.f32.partialorder %v1216, 0.0
  %vm1796 = vcmp.gt.f32.partialorder %v1218, 0.0
  %vm1797 = vcmp.gt.f32.partialorder %v1221, 0.0
  %vm1798 = vcmp.gt.f32.partialorder %v1223, 0.0
  %vm1799 = vcmp.gt.f32.partialorder %v1226, 0.0
  %vm1800 = vcmp.gt.f32.partialorder %v1228, 0.0
  %vm1801 = vcmp.gt.f32.partialorder %v1231, 0.0
  %vm1802 = vcmp.gt.f32.partialorder %v1233, 0.0
  %vm1803 = vcmp.gt.f32.partialorder %v1236, 0.0
  %vm1804 = vcmp.gt.f32.partialorder %v1238, 0.0
  %vm1805 = vcmp.gt.f32.partialorder %v1241, 0.0
  %vm1806 = vcmp.gt.f32.partialorder %v1243, 0.0
  %vm1807 = vcmp.gt.f32.partialorder %v1246, 0.0
  %vm1808 = vcmp.gt.f32.partialorder %v1248, 0.0
  %vm1809 = vcmp.gt.f32.partialorder %v1251, 0.0
  %vm1810 = vcmp.gt.f32.partialorder %v1253, 0.0
  %vm1811 = vcmp.gt.f32.partialorder %v1256, 0.0
  %vm1812 = vcmp.gt.f32.partialorder %v1258, 0.0
  %vm1813 = vcmp.gt.f32.partialorder %v1261, 0.0
  %vm1814 = vcmp.gt.f32.partialorder %v1263, 0.0
  %vm1815 = vcmp.gt.f32.partialorder %v1266, 0.0
  %vm1816 = vcmp.gt.f32.partialorder %v1268, 0.0
  %vm1817 = vcmp.gt.f32.partialorder %v1271, 0.0
  %vm1818 = vcmp.gt.f32.partialorder %v1273, 0.0
  %vm1819 = vcmp.gt.f32.partialorder %v1276, 0.0
  %vm1820 = vcmp.gt.f32.partialorder %v1278, 0.0
  %vm1821 = vcmp.gt.f32.partialorder %v1281, 0.0
  %vm1822 = vcmp.gt.f32.partialorder %v1283, 0.0
  %vm1823 = vcmp.gt.f32.partialorder %v1286, 0.0
  %vm1824 = vcmp.gt.f32.partialorder %v1288, 0.0
  %vm1825 = vcmp.gt.f32.partialorder %v1291, 0.0
  %vm1826 = vcmp.gt.f32.partialorder %v1293, 0.0
  %vm1827 = vcmp.gt.f32.partialorder %v1296, 0.0
  %vm1828 = vcmp.gt.f32.partialorder %v1298, 0.0
  %vm1829 = vcmp.gt.f32.partialorder %v1301, 0.0
  %vm1830 = vcmp.gt.f32.partialorder %v1303, 0.0
  %vm1831 = vcmp.gt.f32.partialorder %v1306, 0.0
  %vm1832 = vcmp.gt.f32.partialorder %v1308, 0.0
  %vm1833 = vcmp.gt.f32.partialorder %v1311, 0.0
  %vm1834 = vcmp.gt.f32.partialorder %v1313, 0.0
  %vm1835 = vcmp.gt.f32.partialorder %v1316, 0.0
  %vm1836 = vcmp.gt.f32.partialorder %v1318, 0.0
  %vm1837 = vcmp.gt.f32.partialorder %v1321, 0.0
  %vm1838 = vcmp.gt.f32.partialorder %v1323, 0.0
  %vm1839 = vcmp.gt.f32.partialorder %v1326, 0.0
  %vm1840 = vcmp.gt.f32.partialorder %v1328, 0.0
  %vm1841 = vcmp.gt.f32.partialorder %v1331, 0.0
  %vm1842 = vcmp.gt.f32.partialorder %v1333, 0.0
  %vm1843 = vcmp.gt.f32.partialorder %v1336, 0.0
  %vm1844 = vcmp.gt.f32.partialorder %v1338, 0.0
  %vm1845 = vcmp.gt.f32.partialorder %v1341, 0.0
  %vm1846 = vcmp.gt.f32.partialorder %v1343, 0.0
  %vm1847 = vcmp.gt.f32.partialorder %v1346, 0.0
  %vm1848 = vcmp.gt.f32.partialorder %v1348, 0.0
  %vm1849 = vcmp.gt.f32.partialorder %v1351, 0.0
  %vm1850 = vcmp.gt.f32.partialorder %v1353, 0.0
  %vm1851 = vcmp.gt.f32.partialorder %v1356, 0.0
  %vm1852 = vcmp.gt.f32.partialorder %v1358, 0.0
  %vm1853 = vcmp.gt.f32.partialorder %v1361, 0.0
  %vm1854 = vcmp.gt.f32.partialorder %v1363, 0.0
  %vm1855 = vcmp.gt.f32.partialorder %v1366, 0.0
  %vm1856 = vcmp.gt.f32.partialorder %v1368, 0.0
  %vm1857 = vcmp.gt.f32.partialorder %v1371, 0.0
  %vm1858 = vcmp.gt.f32.partialorder %v1373, 0.0
  %vm1859 = vcmp.gt.f32.partialorder %v1376, 0.0
  %vm1860 = vcmp.gt.f32.partialorder %v1378, 0.0
  %vm1861 = vcmp.gt.f32.partialorder %v1381, 0.0
  %vm1862 = vcmp.gt.f32.partialorder %v1383, 0.0
  %vm1863 = vcmp.gt.f32.partialorder %v1386, 0.0
  %vm1864 = vcmp.gt.f32.partialorder %v1388, 0.0
  %vm1865 = vcmp.gt.f32.partialorder %v1391, 0.0
  %vm1866 = vcmp.gt.f32.partialorder %v1393, 0.0
  %vm1867 = vcmp.gt.f32.partialorder %v1396, 0.0
  %vm1868 = vcmp.gt.f32.partialorder %v1398, 0.0
  %vm1869 = vcmp.gt.f32.partialorder %v1401, 0.0
  %vm1870 = vcmp.gt.f32.partialorder %v1403, 0.0
  %vm1871 = vcmp.gt.f32.partialorder %v1406, 0.0
  %vm1872 = vcmp.gt.f32.partialorder %v1408, 0.0
  %vm1873 = vcmp.gt.f32.partialorder %v1411, 0.0
  %vm1874 = vcmp.gt.f32.partialorder %v1413, 0.0
  %vm1875 = vcmp.gt.f32.partialorder %v1416, 0.0
  %vm1876 = vcmp.gt.f32.partialorder %v1418, 0.0
  %vm1877 = vcmp.gt.f32.partialorder %v1421, 0.0
  %vm1878 = vcmp.gt.f32.partialorder %v1423, 0.0
  %vm1879 = vcmp.gt.f32.partialorder %v1426, 0.0
  %vm1880 = vcmp.gt.f32.partialorder %v1428, 0.0
  %vm1881 = vcmp.gt.f32.partialorder %v1431, 0.0
  %vm1882 = vcmp.gt.f32.partialorder %v1433, 0.0
  %vm1883 = vcmp.gt.f32.partialorder %v1436, 0.0
  %vm1884 = vcmp.gt.f32.partialorder %v1438, 0.0
  %vm1885 = vcmp.gt.f32.partialorder %v1441, 0.0
  %vm1886 = vcmp.gt.f32.partialorder %v1443, 0.0
  %vm1887 = vcmp.gt.f32.partialorder %v1446, 0.0
  %vm1888 = vcmp.gt.f32.partialorder %v1448, 0.0
  %vm1889 = vcmp.gt.f32.partialorder %v1451, 0.0
  %vm1890 = vcmp.gt.f32.partialorder %v1453, 0.0
  %vm1891 = vcmp.gt.f32.partialorder %v1456, 0.0
  %vm1892 = vcmp.gt.f32.partialorder %v1458, 0.0
  %vm1893 = vcmp.gt.f32.partialorder %v1461, 0.0
  %vm1894 = vcmp.gt.f32.partialorder %v1463, 0.0
  %vm1895 = vcmp.gt.f32.partialorder %v1466, 0.0
  %vm1896 = vcmp.gt.f32.partialorder %v1468, 0.0
  %vm1897 = vcmp.gt.f32.partialorder %v1471, 0.0
  %vm1898 = vcmp.gt.f32.partialorder %v1473, 0.0
  %vm1899 = vcmp.gt.f32.partialorder %v1476, 0.0
  %vm1900 = vcmp.gt.f32.partialorder %v1478, 0.0
  %vm1901 = vcmp.gt.f32.partialorder %v1481, 0.0
  %vm1902 = vcmp.gt.f32.partialorder %v1483, 0.0
  %vm1903 = vcmp.gt.f32.partialorder %v1486, 0.0
  %vm1904 = vcmp.gt.f32.partialorder %v1488, 0.0
  %vm1905 = vcmp.gt.f32.partialorder %v1491, 0.0
  %vm1906 = vcmp.gt.f32.partialorder %v1493, 0.0
  %vm1907 = vcmp.gt.f32.partialorder %v1496, 0.0
  %vm1908 = vcmp.gt.f32.partialorder %v1498, 0.0
  %vm1909 = vcmp.gt.f32.partialorder %v1501, 0.0
  %vm1910 = vcmp.gt.f32.partialorder %v1503, 0.0
  %vm1911 = vcmp.gt.f32.partialorder %v1506, 0.0
  %vm1912 = vcmp.gt.f32.partialorder %v1508, 0.0
  %vm1913 = vcmp.gt.f32.partialorder %v1511, 0.0
  %vm1914 = vcmp.gt.f32.partialorder %v1513, 0.0
  %vm1915 = vcmp.gt.f32.partialorder %v1516, 0.0
  %vm1916 = vcmp.gt.f32.partialorder %v1518, 0.0
  %vm1917 = vcmp.gt.f32.partialorder %v1521, 0.0
  %vm1918 = vcmp.gt.f32.partialorder %v1523, 0.0
  %vm1919 = vcmp.gt.f32.partialorder %v1526, 0.0
  %vm1920 = vcmp.gt.f32.partialorder %v1528, 0.0
  %vm1921 = vcmp.gt.f32.partialorder %v1531, 0.0
  %vm1922 = vcmp.gt.f32.partialorder %v1533, 0.0
  %vm1923 = vcmp.gt.f32.partialorder %v1536, 0.0
  %vm1924 = vcmp.gt.f32.partialorder %v1538, 0.0
  %vm1925 = vcmp.gt.f32.partialorder %v1541, 0.0
  %vm1926 = vcmp.gt.f32.partialorder %v1543, 0.0
  %vm1927 = vcmp.gt.f32.partialorder %v1546, 0.0
  %vm1928 = vcmp.gt.f32.partialorder %v1548, 0.0
  %vm1929 = vcmp.gt.f32.partialorder %v1551, 0.0
  %vm1930 = vcmp.gt.f32.partialorder %v1553, 0.0
  %vm1931 = vcmp.gt.f32.partialorder %v1556, 0.0
  %vm1932 = vcmp.gt.f32.partialorder %v1558, 0.0
  %vm1933 = vcmp.gt.f32.partialorder %v1561, 0.0
  %vm1934 = vcmp.gt.f32.partialorder %v1563, 0.0
  %vm1935 = vcmp.gt.f32.partialorder %v1566, 0.0
  %vm1936 = vcmp.gt.f32.partialorder %v1568, 0.0
  %vm1937 = vcmp.gt.f32.partialorder %v1571, 0.0
  %vm1938 = vcmp.gt.f32.partialorder %v1573, 0.0
  %vm1939 = vcmp.gt.f32.partialorder %v1576, 0.0
  %vm1940 = vcmp.gt.f32.partialorder %v1578, 0.0
  %vm1941 = vcmp.gt.f32.partialorder %v1581, 0.0
  %vm1942 = vcmp.gt.f32.partialorder %v1583, 0.0
  %vm1943 = vcmp.gt.f32.partialorder %v1586, 0.0
  %vm1944 = vcmp.gt.f32.partialorder %v1588, 0.0
  %vm1945 = vcmp.gt.f32.partialorder %v1591, 0.0
  %vm1946 = vcmp.gt.f32.partialorder %v1593, 0.0
  %vm1947 = vcmp.gt.f32.partialorder %v1596, 0.0
  %vm1948 = vcmp.gt.f32.partialorder %v1598, 0.0
  %vm1949 = vcmp.gt.f32.partialorder %v1601, 0.0
  %vm1950 = vcmp.gt.f32.partialorder %v1603, 0.0
  %vm1951 = vcmp.gt.f32.partialorder %v1606, 0.0
  %vm1952 = vcmp.gt.f32.partialorder %v1608, 0.0
  %vm1953 = vcmp.gt.f32.partialorder %v1611, 0.0
  %vm1954 = vcmp.gt.f32.partialorder %v1613, 0.0
  %vm1955 = vcmp.gt.f32.partialorder %v1616, 0.0
  %vm1956 = vcmp.gt.f32.partialorder %v1618, 0.0
  %vm1957 = vcmp.gt.f32.partialorder %v1621, 0.0
  %vm1958 = vcmp.gt.f32.partialorder %v1623, 0.0
  %vm1959 = vcmp.gt.f32.partialorder %v1626, 0.0
  %vm1960 = vcmp.gt.f32.partialorder %v1628, 0.0
  %vm1961 = vcmp.gt.f32.partialorder %v1631, 0.0
  %vm1962 = vcmp.gt.f32.partialorder %v1633, 0.0
  %vm1963 = vcmp.gt.f32.partialorder %v1636, 0.0
  %vm1964 = vcmp.gt.f32.partialorder %v1638, 0.0
  %vm1965 = vcmp.gt.f32.partialorder %v1641, 0.0
  %vm1966 = vcmp.gt.f32.partialorder %v1643, 0.0
  %vm1967 = vcmp.gt.f32.partialorder %v1646, 0.0
  %vm1968 = vcmp.gt.f32.partialorder %v1648, 0.0
  %vm1969 = vcmp.gt.f32.partialorder %v1651, 0.0
  %vm1970 = vcmp.gt.f32.partialorder %v1653, 0.0
  %vm1971 = vcmp.gt.f32.partialorder %v1656, 0.0
  %vm1972 = vcmp.gt.f32.partialorder %v1658, 0.0
  %vm1973 = vcmp.gt.f32.partialorder %v1661, 0.0
  %vm1974 = vcmp.gt.f32.partialorder %v1663, 0.0
  %vm1975 = vcmp.gt.f32.partialorder %v1666, 0.0
  %vm1976 = vcmp.gt.f32.partialorder %v1668, 0.0
  %vm1977 = vcmp.gt.f32.partialorder %v1671, 0.0
  %vm1978 = vcmp.gt.f32.partialorder %v1673, 0.0
  %vm1979 = vcmp.gt.f32.partialorder %v1676, 0.0
  %vm1980 = vcmp.gt.f32.partialorder %v1678, 0.0
  %vm1981 = vcmp.gt.f32.partialorder %v1681, 0.0
  %vm1982 = vcmp.gt.f32.partialorder %v1683, 0.0
  %vm1983 = vcmp.gt.f32.partialorder %v1686, 0.0
  %vm1984 = vcmp.gt.f32.partialorder %v1688, 0.0
  %vm1985 = vcmp.gt.f32.partialorder %v1691, 0.0
  %vm1986 = vcmp.gt.f32.partialorder %v1693, 0.0
  %vm1987 = vcmp.gt.f32.partialorder %v1696, 0.0
  %vm1988 = vcmp.gt.f32.partialorder %v1698, 0.0
  %vm1989 = vcmp.gt.f32.partialorder %v1701, 0.0
  %vm1990 = vcmp.gt.f32.partialorder %v1703, 0.0
  %vm1991 = vcmp.gt.f32.partialorder %v1706, 0.0
  %vm1992 = vcmp.gt.f32.partialorder %v1708, 0.0
  %vm1993 = vcmp.gt.f32.partialorder %v1711, 0.0
  %vm1994 = vcmp.gt.f32.partialorder %v1713, 0.0
  %vm1995 = vcmp.gt.f32.partialorder %v1716, 0.0
  %vm1996 = vcmp.gt.f32.partialorder %v1718, 0.0
  %vm1997 = vcmp.gt.f32.partialorder %v1721, 0.0
  %vm1998 = vcmp.gt.f32.partialorder %v1723, 0.0
  %vm1999 = vcmp.gt.f32.partialorder %v1726, 0.0
  %vm2000 = vcmp.gt.f32.partialorder %v1728, 0.0
  %vm2001 = vcmp.gt.f32.partialorder %v1731, 0.0
  %vm2002 = vcmp.gt.f32.partialorder %v1733, 0.0
  %vm2003 = vcmp.gt.f32.partialorder %v1736, 0.0
  %vm2004 = vcmp.gt.f32.partialorder %v1738, 0.0
  %vm2005 = vcmp.gt.f32.partialorder %v1741, 0.0
  %vm2006 = vcmp.gt.f32.partialorder %v1743, 0.0
  %vm2007 = vcmp.gt.f32.partialorder %v1746, 0.0
  %vm2008 = vcmp.gt.f32.partialorder %v1748, 0.0
  %vm2009 = vcmp.gt.f32.partialorder %v1751, 0.0
  %vm2010 = vcmp.gt.f32.partialorder %v1753, 0.0
  %v2011 = vmul.f32 %v1116, 0.2
  %v2012 = vmul.f32 %v1118, 0.2
  %v2013 = vmul.f32 %v1121, 0.2
  %v2014 = vmul.f32 %v1123, 0.2
  %v2015 = vmul.f32 %v1126, 0.2
  %v2016 = vmul.f32 %v1128, 0.2
  %v2017 = vmul.f32 %v1131, 0.2
  %v2018 = vmul.f32 %v1133, 0.2
  %v2019 = vmul.f32 %v1136, 0.2
  %v2020 = vmul.f32 %v1138, 0.2
  %v2021 = vmul.f32 %v1141, 0.2
  %v2022 = vmul.f32 %v1143, 0.2
  %v2023 = vmul.f32 %v1146, 0.2
  %v2024 = vmul.f32 %v1148, 0.2
  %v2025 = vmul.f32 %v1151, 0.2
  %v2026 = vmul.f32 %v1153, 0.2
  %v2027 = vmul.f32 %v1156, 0.2
  %v2028 = vmul.f32 %v1158, 0.2
  %v2029 = vmul.f32 %v1161, 0.2
  %v2030 = vmul.f32 %v1163, 0.2
  %v2031 = vmul.f32 %v1166, 0.2
  %v2032 = vmul.f32 %v1168, 0.2
  %v2033 = vmul.f32 %v1171, 0.2
  %v2034 = vmul.f32 %v1173, 0.2
  %v2035 = vmul.f32 %v1176, 0.2
  %v2036 = vmul.f32 %v1178, 0.2
  %v2037 = vmul.f32 %v1181, 0.2
  %v2038 = vmul.f32 %v1183, 0.2
  %v2039 = vmul.f32 %v1186, 0.2
  %v2040 = vmul.f32 %v1188, 0.2
  %v2041 = vmul.f32 %v1191, 0.2
  %v2042 = vmul.f32 %v1193, 0.2
  %v2043 = vmul.f32 %v1196, 0.2
  %v2044 = vmul.f32 %v1198, 0.2
  %v2045 = vmul.f32 %v1201, 0.2
  %v2046 = vmul.f32 %v1203, 0.2
  %v2047 = vmul.f32 %v1206, 0.2
  %v2048 = vmul.f32 %v1208, 0.2
  %v2049 = vmul.f32 %v1211, 0.2
  %v2050 = vmul.f32 %v1213, 0.2
  %v2051 = vmul.f32 %v1216, 0.2
  %v2052 = vmul.f32 %v1218, 0.2
  %v2053 = vmul.f32 %v1221, 0.2
  %v2054 = vmul.f32 %v1223, 0.2
  %v2055 = vmul.f32 %v1226, 0.2
  %v2056 = vmul.f32 %v1228, 0.2
  %v2057 = vmul.f32 %v1231, 0.2
  %v2058 = vmul.f32 %v1233, 0.2
  %v2059 = vmul.f32 %v1236, 0.2
  %v2060 = vmul.f32 %v1238, 0.2
  %v2061 = vmul.f32 %v1241, 0.2
  %v2062 = vmul.f32 %v1243, 0.2
  %v2063 = vmul.f32 %v1246, 0.2
  %v2064 = vmul.f32 %v1248, 0.2
  %v2065 = vmul.f32 %v1251, 0.2
  %v2066 = vmul.f32 %v1253, 0.2
  %v2067 = vmul.f32 %v1256, 0.2
  %v2068 = vmul.f32 %v1258, 0.2
  %v2069 = vmul.f32 %v1261, 0.2
  %v2070 = vmul.f32 %v1263, 0.2
  %v2071 = vmul.f32 %v1266, 0.2
  %v2072 = vmul.f32 %v1268, 0.2
  %v2073 = vmul.f32 %v1271, 0.2
  %v2074 = vmul.f32 %v1273, 0.2
  %v2075 = vmul.f32 %v1276, 0.2
  %v2076 = vmul.f32 %v1278, 0.2
  %v2077 = vmul.f32 %v1281, 0.2
  %v2078 = vmul.f32 %v1283, 0.2
  %v2079 = vmul.f32 %v1286, 0.2
  %v2080 = vmul.f32 %v1288, 0.2
  %v2081 = vmul.f32 %v1291, 0.2
  %v2082 = vmul.f32 %v1293, 0.2
  %v2083 = vmul.f32 %v1296, 0.2
  %v2084 = vmul.f32 %v1298, 0.2
  %v2085 = vmul.f32 %v1301, 0.2
  %v2086 = vmul.f32 %v1303, 0.2
  %v2087 = vmul.f32 %v1306, 0.2
  %v2088 = vmul.f32 %v1308, 0.2
  %v2089 = vmul.f32 %v1311, 0.2
  %v2090 = vmul.f32 %v1313, 0.2
  %v2091 = vmul.f32 %v1316, 0.2
  %v2092 = vmul.f32 %v1318, 0.2
  %v2093 = vmul.f32 %v1321, 0.2
  %v2094 = vmul.f32 %v1323, 0.2
  %v2095 = vmul.f32 %v1326, 0.2
  %v2096 = vmul.f32 %v1328, 0.2
  %v2097 = vmul.f32 %v1331, 0.2
  %v2098 = vmul.f32 %v1333, 0.2
  %v2099 = vmul.f32 %v1336, 0.2
  %v2100 = vmul.f32 %v1338, 0.2
  %v2101 = vmul.f32 %v1341, 0.2
  %v2102 = vmul.f32 %v1343, 0.2
  %v2103 = vmul.f32 %v1346, 0.2
  %v2104 = vmul.f32 %v1348, 0.2
  %v2105 = vmul.f32 %v1351, 0.2
  %v2106 = vmul.f32 %v1353, 0.2
  %v2107 = vmul.f32 %v1356, 0.2
  %v2108 = vmul.f32 %v1358, 0.2
  %v2109 = vmul.f32 %v1361, 0.2
  %v2110 = vmul.f32 %v1363, 0.2
  %v2111 = vmul.f32 %v1366, 0.2
  %v2112 = vmul.f32 %v1368, 0.2
  %v2113 = vmul.f32 %v1371, 0.2
  %v2114 = vmul.f32 %v1373, 0.2
  %v2115 = vmul.f32 %v1376, 0.2
  %v2116 = vmul.f32 %v1378, 0.2
  %v2117 = vmul.f32 %v1381, 0.2
  %v2118 = vmul.f32 %v1383, 0.2
  %v2119 = vmul.f32 %v1386, 0.2
  %v2120 = vmul.f32 %v1388, 0.2
  %v2121 = vmul.f32 %v1391, 0.2
  %v2122 = vmul.f32 %v1393, 0.2
  %v2123 = vmul.f32 %v1396, 0.2
  %v2124 = vmul.f32 %v1398, 0.2
  %v2125 = vmul.f32 %v1401, 0.2
  %v2126 = vmul.f32 %v1403, 0.2
  %v2127 = vmul.f32 %v1406, 0.2
  %v2128 = vmul.f32 %v1408, 0.2
  %v2129 = vmul.f32 %v1411, 0.2
  %v2130 = vmul.f32 %v1413, 0.2
  %v2131 = vmul.f32 %v1416, 0.2
  %v2132 = vmul.f32 %v1418, 0.2
  %v2133 = vmul.f32 %v1421, 0.2
  %v2134 = vmul.f32 %v1423, 0.2
  %v2135 = vmul.f32 %v1426, 0.2
  %v2136 = vmul.f32 %v1428, 0.2
  %v2137 = vmul.f32 %v1431, 0.2
  %v2138 = vmul.f32 %v1433, 0.2
  %v2139 = vmul.f32 %v1436, 0.2
  %v2140 = vmul.f32 %v1438, 0.2
  %v2141 = vmul.f32 %v1441, 0.2
  %v2142 = vmul.f32 %v1443, 0.2
  %v2143 = vmul.f32 %v1446, 0.2
  %v2144 = vmul.f32 %v1448, 0.2
  %v2145 = vmul.f32 %v1451, 0.2
  %v2146 = vmul.f32 %v1453, 0.2
  %v2147 = vmul.f32 %v1456, 0.2
  %v2148 = vmul.f32 %v1458, 0.2
  %v2149 = vmul.f32 %v1461, 0.2
  %v2150 = vmul.f32 %v1463, 0.2
  %v2151 = vmul.f32 %v1466, 0.2
  %v2152 = vmul.f32 %v1468, 0.2
  %v2153 = vmul.f32 %v1471, 0.2
  %v2154 = vmul.f32 %v1473, 0.2
  %v2155 = vmul.f32 %v1476, 0.2
  %v2156 = vmul.f32 %v1478, 0.2
  %v2157 = vmul.f32 %v1481, 0.2
  %v2158 = vmul.f32 %v1483, 0.2
  %v2159 = vmul.f32 %v1486, 0.2
  %v2160 = vmul.f32 %v1488, 0.2
  %v2161 = vmul.f32 %v1491, 0.2
  %v2162 = vmul.f32 %v1493, 0.2
  %v2163 = vmul.f32 %v1496, 0.2
  %v2164 = vmul.f32 %v1498, 0.2
  %v2165 = vmul.f32 %v1501, 0.2
  %v2166 = vmul.f32 %v1503, 0.2
  %v2167 = vmul.f32 %v1506, 0.2
  %v2168 = vmul.f32 %v1508, 0.2
  %v2169 = vmul.f32 %v1511, 0.2
  %v2170 = vmul.f32 %v1513, 0.2
  %v2171 = vmul.f32 %v1516, 0.2
  %v2172 = vmul.f32 %v1518, 0.2
  %v2173 = vmul.f32 %v1521, 0.2
  %v2174 = vmul.f32 %v1523, 0.2
  %v2175 = vmul.f32 %v1526, 0.2
  %v2176 = vmul.f32 %v1528, 0.2
  %v2177 = vmul.f32 %v1531, 0.2
  %v2178 = vmul.f32 %v1533, 0.2
  %v2179 = vmul.f32 %v1536, 0.2
  %v2180 = vmul.f32 %v1538, 0.2
  %v2181 = vmul.f32 %v1541, 0.2
  %v2182 = vmul.f32 %v1543, 0.2
  %v2183 = vmul.f32 %v1546, 0.2
  %v2184 = vmul.f32 %v1548, 0.2
  %v2185 = vmul.f32 %v1551, 0.2
  %v2186 = vmul.f32 %v1553, 0.2
  %v2187 = vmul.f32 %v1556, 0.2
  %v2188 = vmul.f32 %v1558, 0.2
  %v2189 = vmul.f32 %v1561, 0.2
  %v2190 = vmul.f32 %v1563, 0.2
  %v2191 = vmul.f32 %v1566, 0.2
  %v2192 = vmul.f32 %v1568, 0.2
  %v2193 = vmul.f32 %v1571, 0.2
  %v2194 = vmul.f32 %v1573, 0.2
  %v2195 = vmul.f32 %v1576, 0.2
  %v2196 = vmul.f32 %v1578, 0.2
  %v2197 = vmul.f32 %v1581, 0.2
  %v2198 = vmul.f32 %v1583, 0.2
  %v2199 = vmul.f32 %v1586, 0.2
  %v2200 = vmul.f32 %v1588, 0.2
  %v2201 = vmul.f32 %v1591, 0.2
  %v2202 = vmul.f32 %v1593, 0.2
  %v2203 = vmul.f32 %v1596, 0.2
  %v2204 = vmul.f32 %v1598, 0.2
  %v2205 = vmul.f32 %v1601, 0.2
  %v2206 = vmul.f32 %v1603, 0.2
  %v2207 = vmul.f32 %v1606, 0.2
  %v2208 = vmul.f32 %v1608, 0.2
  %v2209 = vmul.f32 %v1611, 0.2
  %v2210 = vmul.f32 %v1613, 0.2
  %v2211 = vmul.f32 %v1616, 0.2
  %v2212 = vmul.f32 %v1618, 0.2
  %v2213 = vmul.f32 %v1621, 0.2
  %v2214 = vmul.f32 %v1623, 0.2
  %v2215 = vmul.f32 %v1626, 0.2
  %v2216 = vmul.f32 %v1628, 0.2
  %v2217 = vmul.f32 %v1631, 0.2
  %v2218 = vmul.f32 %v1633, 0.2
  %v2219 = vmul.f32 %v1636, 0.2
  %v2220 = vmul.f32 %v1638, 0.2
  %v2221 = vmul.f32 %v1641, 0.2
  %v2222 = vmul.f32 %v1643, 0.2
  %v2223 = vmul.f32 %v1646, 0.2
  %v2224 = vmul.f32 %v1648, 0.2
  %v2225 = vmul.f32 %v1651, 0.2
  %v2226 = vmul.f32 %v1653, 0.2
  %v2227 = vmul.f32 %v1656, 0.2
  %v2228 = vmul.f32 %v1658, 0.2
  %v2229 = vmul.f32 %v1661, 0.2
  %v2230 = vmul.f32 %v1663, 0.2
  %v2231 = vmul.f32 %v1666, 0.2
  %v2232 = vmul.f32 %v1668, 0.2
  %v2233 = vmul.f32 %v1671, 0.2
  %v2234 = vmul.f32 %v1673, 0.2
  %v2235 = vmul.f32 %v1676, 0.2
  %v2236 = vmul.f32 %v1678, 0.2
  %v2237 = vmul.f32 %v1681, 0.2
  %v2238 = vmul.f32 %v1683, 0.2
  %v2239 = vmul.f32 %v1686, 0.2
  %v2240 = vmul.f32 %v1688, 0.2
  %v2241 = vmul.f32 %v1691, 0.2
  %v2242 = vmul.f32 %v1693, 0.2
  %v2243 = vmul.f32 %v1696, 0.2
  %v2244 = vmul.f32 %v1698, 0.2
  %v2245 = vmul.f32 %v1701, 0.2
  %v2246 = vmul.f32 %v1703, 0.2
  %v2247 = vmul.f32 %v1706, 0.2
  %v2248 = vmul.f32 %v1708, 0.2
  %v2249 = vmul.f32 %v1711, 0.2
  %v2250 = vmul.f32 %v1713, 0.2
  %v2251 = vmul.f32 %v1716, 0.2
  %v2252 = vmul.f32 %v1718, 0.2
  %v2253 = vmul.f32 %v1721, 0.2
  %v2254 = vmul.f32 %v1723, 0.2
  %v2255 = vmul.f32 %v1726, 0.2
  %v2256 = vmul.f32 %v1728, 0.2
  %v2257 = vmul.f32 %v1731, 0.2
  %v2258 = vmul.f32 %v1733, 0.2
  %v2259 = vmul.f32 %v1736, 0.2
  %v2260 = vmul.f32 %v1738, 0.2
  %v2261 = vmul.f32 %v1741, 0.2
  %v2262 = vmul.f32 %v1743, 0.2
  %v2263 = vmul.f32 %v1746, 0.2
  %v2264 = vmul.f32 %v1748, 0.2
  %v2265 = vmul.f32 %v1751, 0.2
  %v2266 = vmul.f32 %v1753, 0.2
  %v2267 = vsel %vm1755, %v1116, %v2011
  %v2268 = vsel %vm1756, %v1118, %v2012
  %v2269 = vsel %vm1757, %v1121, %v2013
  %v2270 = vsel %vm1758, %v1123, %v2014
  %v2271 = vsel %vm1759, %v1126, %v2015
  %v2272 = vsel %vm1760, %v1128, %v2016
  %v2273 = vsel %vm1761, %v1131, %v2017
  %v2274 = vsel %vm1762, %v1133, %v2018
  %v2275 = vsel %vm1763, %v1136, %v2019
  %v2276 = vsel %vm1764, %v1138, %v2020
  %v2277 = vsel %vm1765, %v1141, %v2021
  %v2278 = vsel %vm1766, %v1143, %v2022
  %v2279 = vsel %vm1767, %v1146, %v2023
  %v2280 = vsel %vm1768, %v1148, %v2024
  %v2281 = vsel %vm1769, %v1151, %v2025
  %v2282 = vsel %vm1770, %v1153, %v2026
  %v2283 = vsel %vm1771, %v1156, %v2027
  %v2284 = vsel %vm1772, %v1158, %v2028
  %v2285 = vsel %vm1773, %v1161, %v2029
  %v2286 = vsel %vm1774, %v1163, %v2030
  %v2287 = vsel %vm1775, %v1166, %v2031
  %v2288 = vsel %vm1776, %v1168, %v2032
  %v2289 = vsel %vm1777, %v1171, %v2033
  %v2290 = vsel %vm1778, %v1173, %v2034
  %v2291 = vsel %vm1779, %v1176, %v2035
  %v2292 = vsel %vm1780, %v1178, %v2036
  %v2293 = vsel %vm1781, %v1181, %v2037
  %v2294 = vsel %vm1782, %v1183, %v2038
  %v2295 = vsel %vm1783, %v1186, %v2039
  %v2296 = vsel %vm1784, %v1188, %v2040
  %v2297 = vsel %vm1785, %v1191, %v2041
  %v2298 = vsel %vm1786, %v1193, %v2042
  %v2299 = vsel %vm1787, %v1196, %v2043
  %v2300 = vsel %vm1788, %v1198, %v2044
  %v2301 = vsel %vm1789, %v1201, %v2045
  %v2302 = vsel %vm1790, %v1203, %v2046
  %v2303 = vsel %vm1791, %v1206, %v2047
  %v2304 = vsel %vm1792, %v1208, %v2048
  %v2305 = vsel %vm1793, %v1211, %v2049
  %v2306 = vsel %vm1794, %v1213, %v2050
  %v2307 = vsel %vm1795, %v1216, %v2051
  %v2308 = vsel %vm1796, %v1218, %v2052
  %v2309 = vsel %vm1797, %v1221, %v2053
  %v2310 = vsel %vm1798, %v1223, %v2054
  %v2311 = vsel %vm1799, %v1226, %v2055
  %v2312 = vsel %vm1800, %v1228, %v2056
  %v2313 = vsel %vm1801, %v1231, %v2057
  %v2314 = vsel %vm1802, %v1233, %v2058
  %v2315 = vsel %vm1803, %v1236, %v2059
  %v2316 = vsel %vm1804, %v1238, %v2060
  %v2317 = vsel %vm1805, %v1241, %v2061
  %v2318 = vsel %vm1806, %v1243, %v2062
  %v2319 = vsel %vm1807, %v1246, %v2063
  %v2320 = vsel %vm1808, %v1248, %v2064
  %v2321 = vsel %vm1809, %v1251, %v2065
  %v2322 = vsel %vm1810, %v1253, %v2066
  %v2323 = vsel %vm1811, %v1256, %v2067
  %v2324 = vsel %vm1812, %v1258, %v2068
  %v2325 = vsel %vm1813, %v1261, %v2069
  %v2326 = vsel %vm1814, %v1263, %v2070
  %v2327 = vsel %vm1815, %v1266, %v2071
  %v2328 = vsel %vm1816, %v1268, %v2072
  %v2329 = vsel %vm1817, %v1271, %v2073
  %v2330 = vsel %vm1818, %v1273, %v2074
  %v2331 = vsel %vm1819, %v1276, %v2075
  %v2332 = vsel %vm1820, %v1278, %v2076
  %v2333 = vsel %vm1821, %v1281, %v2077
  %v2334 = vsel %vm1822, %v1283, %v2078
  %v2335 = vsel %vm1823, %v1286, %v2079
  %v2336 = vsel %vm1824, %v1288, %v2080
  %v2337 = vsel %vm1825, %v1291, %v2081
  %v2338 = vsel %vm1826, %v1293, %v2082
  %v2339 = vsel %vm1827, %v1296, %v2083
  %v2340 = vsel %vm1828, %v1298, %v2084
  %v2341 = vsel %vm1829, %v1301, %v2085
  %v2342 = vsel %vm1830, %v1303, %v2086
  %v2343 = vsel %vm1831, %v1306, %v2087
  %v2344 = vsel %vm1832, %v1308, %v2088
  %v2345 = vsel %vm1833, %v1311, %v2089
  %v2346 = vsel %vm1834, %v1313, %v2090
  %v2347 = vsel %vm1835, %v1316, %v2091
  %v2348 = vsel %vm1836, %v1318, %v2092
  %v2349 = vsel %vm1837, %v1321, %v2093
  %v2350 = vsel %vm1838, %v1323, %v2094
  %v2351 = vsel %vm1839, %v1326, %v2095
  %v2352 = vsel %vm1840, %v1328, %v2096
  %v2353 = vsel %vm1841, %v1331, %v2097
  %v2354 = vsel %vm1842, %v1333, %v2098
  %v2355 = vsel %vm1843, %v1336, %v2099
  %v2356 = vsel %vm1844, %v1338, %v2100
  %v2357 = vsel %vm1845, %v1341, %v2101
  %v2358 = vsel %vm1846, %v1343, %v2102
  %v2359 = vsel %vm1847, %v1346, %v2103
  %v2360 = vsel %vm1848, %v1348, %v2104
  %v2361 = vsel %vm1849, %v1351, %v2105
  %v2362 = vsel %vm1850, %v1353, %v2106
  %v2363 = vsel %vm1851, %v1356, %v2107
  %v2364 = vsel %vm1852, %v1358, %v2108
  %v2365 = vsel %vm1853, %v1361, %v2109
  %v2366 = vsel %vm1854, %v1363, %v2110
  %v2367 = vsel %vm1855, %v1366, %v2111
  %v2368 = vsel %vm1856, %v1368, %v2112
  %v2369 = vsel %vm1857, %v1371, %v2113
  %v2370 = vsel %vm1858, %v1373, %v2114
  %v2371 = vsel %vm1859, %v1376, %v2115
  %v2372 = vsel %vm1860, %v1378, %v2116
  %v2373 = vsel %vm1861, %v1381, %v2117
  %v2374 = vsel %vm1862, %v1383, %v2118
  %v2375 = vsel %vm1863, %v1386, %v2119
  %v2376 = vsel %vm1864, %v1388, %v2120
  %v2377 = vsel %vm1865, %v1391, %v2121
  %v2378 = vsel %vm1866, %v1393, %v2122
  %v2379 = vsel %vm1867, %v1396, %v2123
  %v2380 = vsel %vm1868, %v1398, %v2124
  %v2381 = vsel %vm1869, %v1401, %v2125
  %v2382 = vsel %vm1870, %v1403, %v2126
  %v2383 = vsel %vm1871, %v1406, %v2127
  %v2384 = vsel %vm1872, %v1408, %v2128
  %v2385 = vsel %vm1873, %v1411, %v2129
  %v2386 = vsel %vm1874, %v1413, %v2130
  %v2387 = vsel %vm1875, %v1416, %v2131
  %v2388 = vsel %vm1876, %v1418, %v2132
  %v2389 = vsel %vm1877, %v1421, %v2133
  %v2390 = vsel %vm1878, %v1423, %v2134
  %v2391 = vsel %vm1879, %v1426, %v2135
  %v2392 = vsel %vm1880, %v1428, %v2136
  %v2393 = vsel %vm1881, %v1431, %v2137
  %v2394 = vsel %vm1882, %v1433, %v2138
  %v2395 = vsel %vm1883, %v1436, %v2139
  %v2396 = vsel %vm1884, %v1438, %v2140
  %v2397 = vsel %vm1885, %v1441, %v2141
  %v2398 = vsel %vm1886, %v1443, %v2142
  %v2399 = vsel %vm1887, %v1446, %v2143
  %v2400 = vsel %vm1888, %v1448, %v2144
  %v2401 = vsel %vm1889, %v1451, %v2145
  %v2402 = vsel %vm1890, %v1453, %v2146
  %v2403 = vsel %vm1891, %v1456, %v2147
  %v2404 = vsel %vm1892, %v1458, %v2148
  %v2405 = vsel %vm1893, %v1461, %v2149
  %v2406 = vsel %vm1894, %v1463, %v2150
  %v2407 = vsel %vm1895, %v1466, %v2151
  %v2408 = vsel %vm1896, %v1468, %v2152
  %v2409 = vsel %vm1897, %v1471, %v2153
  %v2410 = vsel %vm1898, %v1473, %v2154
  %v2411 = vsel %vm1899, %v1476, %v2155
  %v2412 = vsel %vm1900, %v1478, %v2156
  %v2413 = vsel %vm1901, %v1481, %v2157
  %v2414 = vsel %vm1902, %v1483, %v2158
  %v2415 = vsel %vm1903, %v1486, %v2159
  %v2416 = vsel %vm1904, %v1488, %v2160
  %v2417 = vsel %vm1905, %v1491, %v2161
  %v2418 = vsel %vm1906, %v1493, %v2162
  %v2419 = vsel %vm1907, %v1496, %v2163
  %v2420 = vsel %vm1908, %v1498, %v2164
  %v2421 = vsel %vm1909, %v1501, %v2165
  %v2422 = vsel %vm1910, %v1503, %v2166
  %v2423 = vsel %vm1911, %v1506, %v2167
  %v2424 = vsel %vm1912, %v1508, %v2168
  %v2425 = vsel %vm1913, %v1511, %v2169
  %v2426 = vsel %vm1914, %v1513, %v2170
  %v2427 = vsel %vm1915, %v1516, %v2171
  %v2428 = vsel %vm1916, %v1518, %v2172
  %v2429 = vsel %vm1917, %v1521, %v2173
  %v2430 = vsel %vm1918, %v1523, %v2174
  %v2431 = vsel %vm1919, %v1526, %v2175
  %v2432 = vsel %vm1920, %v1528, %v2176
  %v2433 = vsel %vm1921, %v1531, %v2177
  %v2434 = vsel %vm1922, %v1533, %v2178
  %v2435 = vsel %vm1923, %v1536, %v2179
  %v2436 = vsel %vm1924, %v1538, %v2180
  %v2437 = vsel %vm1925, %v1541, %v2181
  %v2438 = vsel %vm1926, %v1543, %v2182
  %v2439 = vsel %vm1927, %v1546, %v2183
  %v2440 = vsel %vm1928, %v1548, %v2184
  %v2441 = vsel %vm1929, %v1551, %v2185
  %v2442 = vsel %vm1930, %v1553, %v2186
  %v2443 = vsel %vm1931, %v1556, %v2187
  %v2444 = vsel %vm1932, %v1558, %v2188
  %v2445 = vsel %vm1933, %v1561, %v2189
  %v2446 = vsel %vm1934, %v1563, %v2190
  %v2447 = vsel %vm1935, %v1566, %v2191
  %v2448 = vsel %vm1936, %v1568, %v2192
  %v2449 = vsel %vm1937, %v1571, %v2193
  %v2450 = vsel %vm1938, %v1573, %v2194
  %v2451 = vsel %vm1939, %v1576, %v2195
  %v2452 = vsel %vm1940, %v1578, %v2196
  %v2453 = vsel %vm1941, %v1581, %v2197
  %v2454 = vsel %vm1942, %v1583, %v2198
  %v2455 = vsel %vm1943, %v1586, %v2199
  %v2456 = vsel %vm1944, %v1588, %v2200
  %v2457 = vsel %vm1945, %v1591, %v2201
  %v2458 = vsel %vm1946, %v1593, %v2202
  %v2459 = vsel %vm1947, %v1596, %v2203
  %v2460 = vsel %vm1948, %v1598, %v2204
  %v2461 = vsel %vm1949, %v1601, %v2205
  %v2462 = vsel %vm1950, %v1603, %v2206
  %v2463 = vsel %vm1951, %v1606, %v2207
  %v2464 = vsel %vm1952, %v1608, %v2208
  %v2465 = vsel %vm1953, %v1611, %v2209
  %v2466 = vsel %vm1954, %v1613, %v2210
  %v2467 = vsel %vm1955, %v1616, %v2211
  %v2468 = vsel %vm1956, %v1618, %v2212
  %v2469 = vsel %vm1957, %v1621, %v2213
  %v2470 = vsel %vm1958, %v1623, %v2214
  %v2471 = vsel %vm1959, %v1626, %v2215
  %v2472 = vsel %vm1960, %v1628, %v2216
  %v2473 = vsel %vm1961, %v1631, %v2217
  %v2474 = vsel %vm1962, %v1633, %v2218
  %v2475 = vsel %vm1963, %v1636, %v2219
  %v2476 = vsel %vm1964, %v1638, %v2220
  %v2477 = vsel %vm1965, %v1641, %v2221
  %v2478 = vsel %vm1966, %v1643, %v2222
  %v2479 = vsel %vm1967, %v1646, %v2223
  %v2480 = vsel %vm1968, %v1648, %v2224
  %v2481 = vsel %vm1969, %v1651, %v2225
  %v2482 = vsel %vm1970, %v1653, %v2226
  %v2483 = vsel %vm1971, %v1656, %v2227
  %v2484 = vsel %vm1972, %v1658, %v2228
  %v2485 = vsel %vm1973, %v1661, %v2229
  %v2486 = vsel %vm1974, %v1663, %v2230
  %v2487 = vsel %vm1975, %v1666, %v2231
  %v2488 = vsel %vm1976, %v1668, %v2232
  %v2489 = vsel %vm1977, %v1671, %v2233
  %v2490 = vsel %vm1978, %v1673, %v2234
  %v2491 = vsel %vm1979, %v1676, %v2235
  %v2492 = vsel %vm1980, %v1678, %v2236
  %v2493 = vsel %vm1981, %v1681, %v2237
  %v2494 = vsel %vm1982, %v1683, %v2238
  %v2495 = vsel %vm1983, %v1686, %v2239
  %v2496 = vsel %vm1984, %v1688, %v2240
  %v2497 = vsel %vm1985, %v1691, %v2241
  %v2498 = vsel %vm1986, %v1693, %v2242
  %v2499 = vsel %vm1987, %v1696, %v2243
  %v2500 = vsel %vm1988, %v1698, %v2244
  %v2501 = vsel %vm1989, %v1701, %v2245
  %v2502 = vsel %vm1990, %v1703, %v2246
  %v2503 = vsel %vm1991, %v1706, %v2247
  %v2504 = vsel %vm1992, %v1708, %v2248
  %v2505 = vsel %vm1993, %v1711, %v2249
  %v2506 = vsel %vm1994, %v1713, %v2250
  %v2507 = vsel %vm1995, %v1716, %v2251
  %v2508 = vsel %vm1996, %v1718, %v2252
  %v2509 = vsel %vm1997, %v1721, %v2253
  %v2510 = vsel %vm1998, %v1723, %v2254
  %v2511 = vsel %vm1999, %v1726, %v2255
  %v2512 = vsel %vm2000, %v1728, %v2256
  %v2513 = vsel %vm2001, %v1731, %v2257
  %v2514 = vsel %vm2002, %v1733, %v2258
  %v2515 = vsel %vm2003, %v1736, %v2259
  %v2516 = vsel %vm2004, %v1738, %v2260
  %v2517 = vsel %vm2005, %v1741, %v2261
  %v2518 = vsel %vm2006, %v1743, %v2262
  %v2519 = vsel %vm2007, %v1746, %v2263
  %v2520 = vsel %vm2008, %v1748, %v2264
  %v2521 = vsel %vm2009, %v1751, %v2265
  %v2522 = vsel %vm2010, %v1753, %v2266
  %v2523 = vpack.c.bf16 %v2267, %v2267
  %v2524 = vpack.c.bf16 %v2268, %v2268
  %v2525 = vpack.c.bf16 %v2269, %v2269
  %v2526 = vpack.c.bf16 %v2270, %v2270
  %v2527 = vpack.c.bf16 %v2271, %v2271
  %v2528 = vpack.c.bf16 %v2272, %v2272
  %v2529 = vpack.c.bf16 %v2273, %v2273
  %v2530 = vpack.c.bf16 %v2274, %v2274
  %v2531 = vpack.c.bf16 %v2275, %v2275
  %v2532 = vpack.c.bf16 %v2276, %v2276
  %v2533 = vpack.c.bf16 %v2277, %v2277
  %v2534 = vpack.c.bf16 %v2278, %v2278
  %v2535 = vpack.c.bf16 %v2279, %v2279
  %v2536 = vpack.c.bf16 %v2280, %v2280
  %v2537 = vpack.c.bf16 %v2281, %v2281
  %v2538 = vpack.c.bf16 %v2282, %v2282
  %v2539 = vpack.c.bf16 %v2283, %v2283
  %v2540 = vpack.c.bf16 %v2284, %v2284
  %v2541 = vpack.c.bf16 %v2285, %v2285
  %v2542 = vpack.c.bf16 %v2286, %v2286
  %v2543 = vpack.c.bf16 %v2287, %v2287
  %v2544 = vpack.c.bf16 %v2288, %v2288
  %v2545 = vpack.c.bf16 %v2289, %v2289
  %v2546 = vpack.c.bf16 %v2290, %v2290
  %v2547 = vpack.c.bf16 %v2291, %v2291
  %v2548 = vpack.c.bf16 %v2292, %v2292
  %v2549 = vpack.c.bf16 %v2293, %v2293
  %v2550 = vpack.c.bf16 %v2294, %v2294
  %v2551 = vpack.c.bf16 %v2295, %v2295
  %v2552 = vpack.c.bf16 %v2296, %v2296
  %v2553 = vpack.c.bf16 %v2297, %v2297
  %v2554 = vpack.c.bf16 %v2298, %v2298
  %v2555 = vpack.c.bf16 %v2299, %v2299
  %v2556 = vpack.c.bf16 %v2300, %v2300
  %v2557 = vpack.c.bf16 %v2301, %v2301
  %v2558 = vpack.c.bf16 %v2302, %v2302
  %v2559 = vpack.c.bf16 %v2303, %v2303
  %v2560 = vpack.c.bf16 %v2304, %v2304
  %v2561 = vpack.c.bf16 %v2305, %v2305
  %v2562 = vpack.c.bf16 %v2306, %v2306
  %v2563 = vpack.c.bf16 %v2307, %v2307
  %v2564 = vpack.c.bf16 %v2308, %v2308
  %v2565 = vpack.c.bf16 %v2309, %v2309
  %v2566 = vpack.c.bf16 %v2310, %v2310
  %v2567 = vpack.c.bf16 %v2311, %v2311
  %v2568 = vpack.c.bf16 %v2312, %v2312
  %v2569 = vpack.c.bf16 %v2313, %v2313
  %v2570 = vpack.c.bf16 %v2314, %v2314
  %v2571 = vpack.c.bf16 %v2315, %v2315
  %v2572 = vpack.c.bf16 %v2316, %v2316
  %v2573 = vpack.c.bf16 %v2317, %v2317
  %v2574 = vpack.c.bf16 %v2318, %v2318
  %v2575 = vpack.c.bf16 %v2319, %v2319
  %v2576 = vpack.c.bf16 %v2320, %v2320
  %v2577 = vpack.c.bf16 %v2321, %v2321
  %v2578 = vpack.c.bf16 %v2322, %v2322
  %v2579 = vpack.c.bf16 %v2323, %v2323
  %v2580 = vpack.c.bf16 %v2324, %v2324
  %v2581 = vpack.c.bf16 %v2325, %v2325
  %v2582 = vpack.c.bf16 %v2326, %v2326
  %v2583 = vpack.c.bf16 %v2327, %v2327
  %v2584 = vpack.c.bf16 %v2328, %v2328
  %v2585 = vpack.c.bf16 %v2329, %v2329
  %v2586 = vpack.c.bf16 %v2330, %v2330
  %v2587 = vpack.c.bf16 %v2331, %v2331
  %v2588 = vpack.c.bf16 %v2332, %v2332
  %v2589 = vpack.c.bf16 %v2333, %v2333
  %v2590 = vpack.c.bf16 %v2334, %v2334
  %v2591 = vpack.c.bf16 %v2335, %v2335
  %v2592 = vpack.c.bf16 %v2336, %v2336
  %v2593 = vpack.c.bf16 %v2337, %v2337
  %v2594 = vpack.c.bf16 %v2338, %v2338
  %v2595 = vpack.c.bf16 %v2339, %v2339
  %v2596 = vpack.c.bf16 %v2340, %v2340
  %v2597 = vpack.c.bf16 %v2341, %v2341
  %v2598 = vpack.c.bf16 %v2342, %v2342
  %v2599 = vpack.c.bf16 %v2343, %v2343
  %v2600 = vpack.c.bf16 %v2344, %v2344
  %v2601 = vpack.c.bf16 %v2345, %v2345
  %v2602 = vpack.c.bf16 %v2346, %v2346
  %v2603 = vpack.c.bf16 %v2347, %v2347
  %v2604 = vpack.c.bf16 %v2348, %v2348
  %v2605 = vpack.c.bf16 %v2349, %v2349
  %v2606 = vpack.c.bf16 %v2350, %v2350
  %v2607 = vpack.c.bf16 %v2351, %v2351
  %v2608 = vpack.c.bf16 %v2352, %v2352
  %v2609 = vpack.c.bf16 %v2353, %v2353
  %v2610 = vpack.c.bf16 %v2354, %v2354
  %v2611 = vpack.c.bf16 %v2355, %v2355
  %v2612 = vpack.c.bf16 %v2356, %v2356
  %v2613 = vpack.c.bf16 %v2357, %v2357
  %v2614 = vpack.c.bf16 %v2358, %v2358
  %v2615 = vpack.c.bf16 %v2359, %v2359
  %v2616 = vpack.c.bf16 %v2360, %v2360
  %v2617 = vpack.c.bf16 %v2361, %v2361
  %v2618 = vpack.c.bf16 %v2362, %v2362
  %v2619 = vpack.c.bf16 %v2363, %v2363
  %v2620 = vpack.c.bf16 %v2364, %v2364
  %v2621 = vpack.c.bf16 %v2365, %v2365
  %v2622 = vpack.c.bf16 %v2366, %v2366
  %v2623 = vpack.c.bf16 %v2367, %v2367
  %v2624 = vpack.c.bf16 %v2368, %v2368
  %v2625 = vpack.c.bf16 %v2369, %v2369
  %v2626 = vpack.c.bf16 %v2370, %v2370
  %v2627 = vpack.c.bf16 %v2371, %v2371
  %v2628 = vpack.c.bf16 %v2372, %v2372
  %v2629 = vpack.c.bf16 %v2373, %v2373
  %v2630 = vpack.c.bf16 %v2374, %v2374
  %v2631 = vpack.c.bf16 %v2375, %v2375
  %v2632 = vpack.c.bf16 %v2376, %v2376
  %v2633 = vpack.c.bf16 %v2377, %v2377
  %v2634 = vpack.c.bf16 %v2378, %v2378
  %v2635 = vpack.c.bf16 %v2379, %v2379
  %v2636 = vpack.c.bf16 %v2380, %v2380
  %v2637 = vpack.c.bf16 %v2381, %v2381
  %v2638 = vpack.c.bf16 %v2382, %v2382
  %v2639 = vpack.c.bf16 %v2383, %v2383
  %v2640 = vpack.c.bf16 %v2384, %v2384
  %v2641 = vpack.c.bf16 %v2385, %v2385
  %v2642 = vpack.c.bf16 %v2386, %v2386
  %v2643 = vpack.c.bf16 %v2387, %v2387
  %v2644 = vpack.c.bf16 %v2388, %v2388
  %v2645 = vpack.c.bf16 %v2389, %v2389
  %v2646 = vpack.c.bf16 %v2390, %v2390
  %v2647 = vpack.c.bf16 %v2391, %v2391
  %v2648 = vpack.c.bf16 %v2392, %v2392
  %v2649 = vpack.c.bf16 %v2393, %v2393
  %v2650 = vpack.c.bf16 %v2394, %v2394
  %v2651 = vpack.c.bf16 %v2395, %v2395
  %v2652 = vpack.c.bf16 %v2396, %v2396
  %v2653 = vpack.c.bf16 %v2397, %v2397
  %v2654 = vpack.c.bf16 %v2398, %v2398
  %v2655 = vpack.c.bf16 %v2399, %v2399
  %v2656 = vpack.c.bf16 %v2400, %v2400
  %v2657 = vpack.c.bf16 %v2401, %v2401
  %v2658 = vpack.c.bf16 %v2402, %v2402
  %v2659 = vpack.c.bf16 %v2403, %v2403
  %v2660 = vpack.c.bf16 %v2404, %v2404
  %v2661 = vpack.c.bf16 %v2405, %v2405
  %v2662 = vpack.c.bf16 %v2406, %v2406
  %v2663 = vpack.c.bf16 %v2407, %v2407
  %v2664 = vpack.c.bf16 %v2408, %v2408
  %v2665 = vpack.c.bf16 %v2409, %v2409
  %v2666 = vpack.c.bf16 %v2410, %v2410
  %v2667 = vpack.c.bf16 %v2411, %v2411
  %v2668 = vpack.c.bf16 %v2412, %v2412
  %v2669 = vpack.c.bf16 %v2413, %v2413
  %v2670 = vpack.c.bf16 %v2414, %v2414
  %v2671 = vpack.c.bf16 %v2415, %v2415
  %v2672 = vpack.c.bf16 %v2416, %v2416
  %v2673 = vpack.c.bf16 %v2417, %v2417
  %v2674 = vpack.c.bf16 %v2418, %v2418
  %v2675 = vpack.c.bf16 %v2419, %v2419
  %v2676 = vpack.c.bf16 %v2420, %v2420
  %v2677 = vpack.c.bf16 %v2421, %v2421
  %v2678 = vpack.c.bf16 %v2422, %v2422
  %v2679 = vpack.c.bf16 %v2423, %v2423
  %v2680 = vpack.c.bf16 %v2424, %v2424
  %v2681 = vpack.c.bf16 %v2425, %v2425
  %v2682 = vpack.c.bf16 %v2426, %v2426
  %v2683 = vpack.c.bf16 %v2427, %v2427
  %v2684 = vpack.c.bf16 %v2428, %v2428
  %v2685 = vpack.c.bf16 %v2429, %v2429
  %v2686 = vpack.c.bf16 %v2430, %v2430
  %v2687 = vpack.c.bf16 %v2431, %v2431
  %v2688 = vpack.c.bf16 %v2432, %v2432
  %v2689 = vpack.c.bf16 %v2433, %v2433
  %v2690 = vpack.c.bf16 %v2434, %v2434
  %v2691 = vpack.c.bf16 %v2435, %v2435
  %v2692 = vpack.c.bf16 %v2436, %v2436
  %v2693 = vpack.c.bf16 %v2437, %v2437
  %v2694 = vpack.c.bf16 %v2438, %v2438
  %v2695 = vpack.c.bf16 %v2439, %v2439
  %v2696 = vpack.c.bf16 %v2440, %v2440
  %v2697 = vpack.c.bf16 %v2441, %v2441
  %v2698 = vpack.c.bf16 %v2442, %v2442
  %v2699 = vpack.c.bf16 %v2443, %v2443
  %v2700 = vpack.c.bf16 %v2444, %v2444
  %v2701 = vpack.c.bf16 %v2445, %v2445
  %v2702 = vpack.c.bf16 %v2446, %v2446
  %v2703 = vpack.c.bf16 %v2447, %v2447
  %v2704 = vpack.c.bf16 %v2448, %v2448
  %v2705 = vpack.c.bf16 %v2449, %v2449
  %v2706 = vpack.c.bf16 %v2450, %v2450
  %v2707 = vpack.c.bf16 %v2451, %v2451
  %v2708 = vpack.c.bf16 %v2452, %v2452
  %v2709 = vpack.c.bf16 %v2453, %v2453
  %v2710 = vpack.c.bf16 %v2454, %v2454
  %v2711 = vpack.c.bf16 %v2455, %v2455
  %v2712 = vpack.c.bf16 %v2456, %v2456
  %v2713 = vpack.c.bf16 %v2457, %v2457
  %v2714 = vpack.c.bf16 %v2458, %v2458
  %v2715 = vpack.c.bf16 %v2459, %v2459
  %v2716 = vpack.c.bf16 %v2460, %v2460
  %v2717 = vpack.c.bf16 %v2461, %v2461
  %v2718 = vpack.c.bf16 %v2462, %v2462
  %v2719 = vpack.c.bf16 %v2463, %v2463
  %v2720 = vpack.c.bf16 %v2464, %v2464
  %v2721 = vpack.c.bf16 %v2465, %v2465
  %v2722 = vpack.c.bf16 %v2466, %v2466
  %v2723 = vpack.c.bf16 %v2467, %v2467
  %v2724 = vpack.c.bf16 %v2468, %v2468
  %v2725 = vpack.c.bf16 %v2469, %v2469
  %v2726 = vpack.c.bf16 %v2470, %v2470
  %v2727 = vpack.c.bf16 %v2471, %v2471
  %v2728 = vpack.c.bf16 %v2472, %v2472
  %v2729 = vpack.c.bf16 %v2473, %v2473
  %v2730 = vpack.c.bf16 %v2474, %v2474
  %v2731 = vpack.c.bf16 %v2475, %v2475
  %v2732 = vpack.c.bf16 %v2476, %v2476
  %v2733 = vpack.c.bf16 %v2477, %v2477
  %v2734 = vpack.c.bf16 %v2478, %v2478
  %v2735 = vpack.c.bf16 %v2479, %v2479
  %v2736 = vpack.c.bf16 %v2480, %v2480
  %v2737 = vpack.c.bf16 %v2481, %v2481
  %v2738 = vpack.c.bf16 %v2482, %v2482
  %v2739 = vpack.c.bf16 %v2483, %v2483
  %v2740 = vpack.c.bf16 %v2484, %v2484
  %v2741 = vpack.c.bf16 %v2485, %v2485
  %v2742 = vpack.c.bf16 %v2486, %v2486
  %v2743 = vpack.c.bf16 %v2487, %v2487
  %v2744 = vpack.c.bf16 %v2488, %v2488
  %v2745 = vpack.c.bf16 %v2489, %v2489
  %v2746 = vpack.c.bf16 %v2490, %v2490
  %v2747 = vpack.c.bf16 %v2491, %v2491
  %v2748 = vpack.c.bf16 %v2492, %v2492
  %v2749 = vpack.c.bf16 %v2493, %v2493
  %v2750 = vpack.c.bf16 %v2494, %v2494
  %v2751 = vpack.c.bf16 %v2495, %v2495
  %v2752 = vpack.c.bf16 %v2496, %v2496
  %v2753 = vpack.c.bf16 %v2497, %v2497
  %v2754 = vpack.c.bf16 %v2498, %v2498
  %v2755 = vpack.c.bf16 %v2499, %v2499
  %v2756 = vpack.c.bf16 %v2500, %v2500
  %v2757 = vpack.c.bf16 %v2501, %v2501
  %v2758 = vpack.c.bf16 %v2502, %v2502
  %v2759 = vpack.c.bf16 %v2503, %v2503
  %v2760 = vpack.c.bf16 %v2504, %v2504
  %v2761 = vpack.c.bf16 %v2505, %v2505
  %v2762 = vpack.c.bf16 %v2506, %v2506
  %v2763 = vpack.c.bf16 %v2507, %v2507
  %v2764 = vpack.c.bf16 %v2508, %v2508
  %v2765 = vpack.c.bf16 %v2509, %v2509
  %v2766 = vpack.c.bf16 %v2510, %v2510
  %v2767 = vpack.c.bf16 %v2511, %v2511
  %v2768 = vpack.c.bf16 %v2512, %v2512
  %v2769 = vpack.c.bf16 %v2513, %v2513
  %v2770 = vpack.c.bf16 %v2514, %v2514
  %v2771 = vpack.c.bf16 %v2515, %v2515
  %v2772 = vpack.c.bf16 %v2516, %v2516
  %v2773 = vpack.c.bf16 %v2517, %v2517
  %v2774 = vpack.c.bf16 %v2518, %v2518
  %v2775 = vpack.c.bf16 %v2519, %v2519
  %v2776 = vpack.c.bf16 %v2520, %v2520
  %v2777 = vpack.c.bf16 %v2521, %v2521
  %v2778 = vpack.c.bf16 %v2522, %v2522
  %vm2779 = vcmask 60416
  %2780 = vst.msk [vmem:[%s3] sm:$0xf] %vm2779, %v2523
  %2781 = vst.msk [vmem:[%s3 + $0x4] sm:$0xf] %vm2779, %v2524
  %2782 = vst.msk [vmem:[%s3 + $0x8] sm:$0xf] %vm2779, %v2525
  %2783 = vst.msk [vmem:[%s3 + $0xc] sm:$0xf] %vm2779, %v2526
  %2784 = vst.msk [vmem:[%s3 + $0x10] sm:$0xf] %vm2779, %v2527
  %2785 = vst.msk [vmem:[%s3 + $0x14] sm:$0xf] %vm2779, %v2528
  %2786 = vst.msk [vmem:[%s3 + $0x18] sm:$0xf] %vm2779, %v2529
  %2787 = vst.msk [vmem:[%s3 + $0x1c] sm:$0xf] %vm2779, %v2530
  %2788 = vst.msk [vmem:[%s3 + $0x20] sm:$0xf] %vm2779, %v2531
  %2789 = vst.msk [vmem:[%s3 + $0x24] sm:$0xf] %vm2779, %v2532
  %2790 = vst.msk [vmem:[%s3 + $0x28] sm:$0xf] %vm2779, %v2533
  %2791 = vst.msk [vmem:[%s3 + $0x2c] sm:$0xf] %vm2779, %v2534
  %2792 = vst.msk [vmem:[%s3 + $0x30] sm:$0xf] %vm2779, %v2535
  %2793 = vst.msk [vmem:[%s3 + $0x34] sm:$0xf] %vm2779, %v2536
  %2794 = vst.msk [vmem:[%s3 + $0x38] sm:$0xf] %vm2779, %v2537
  %2795 = vst.msk [vmem:[%s3 + $0x3c] sm:$0xf] %vm2779, %v2538
  %2796 = vst.msk [vmem:[%s3 + $0x40] sm:$0xf] %vm2779, %v2539
  %2797 = vst.msk [vmem:[%s3 + $0x44] sm:$0xf] %vm2779, %v2540
  %2798 = vst.msk [vmem:[%s3 + $0x48] sm:$0xf] %vm2779, %v2541
  %2799 = vst.msk [vmem:[%s3 + $0x4c] sm:$0xf] %vm2779, %v2542
  %2800 = vst.msk [vmem:[%s3 + $0x50] sm:$0xf] %vm2779, %v2543
  %2801 = vst.msk [vmem:[%s3 + $0x54] sm:$0xf] %vm2779, %v2544
  %2802 = vst.msk [vmem:[%s3 + $0x58] sm:$0xf] %vm2779, %v2545
  %2803 = vst.msk [vmem:[%s3 + $0x5c] sm:$0xf] %vm2779, %v2546
  %2804 = vst.msk [vmem:[%s3 + $0x60] sm:$0xf] %vm2779, %v2547
  %2805 = vst.msk [vmem:[%s3 + $0x64] sm:$0xf] %vm2779, %v2548
  %2806 = vst.msk [vmem:[%s3 + $0x68] sm:$0xf] %vm2779, %v2549
  %2807 = vst.msk [vmem:[%s3 + $0x6c] sm:$0xf] %vm2779, %v2550
  %2808 = vst.msk [vmem:[%s3 + $0x70] sm:$0xf] %vm2779, %v2551
  %2809 = vst.msk [vmem:[%s3 + $0x74] sm:$0xf] %vm2779, %v2552
  %2810 = vst.msk [vmem:[%s3 + $0x78] sm:$0xf] %vm2779, %v2553
  %2811 = vst.msk [vmem:[%s3 + $0x7c] sm:$0xf] %vm2779, %v2554
  %2812 = vst.msk [vmem:[%s3 + $0x80] sm:$0xf] %vm2779, %v2555
  %2813 = vst.msk [vmem:[%s3 + $0x84] sm:$0xf] %vm2779, %v2556
  %2814 = vst.msk [vmem:[%s3 + $0x88] sm:$0xf] %vm2779, %v2557
  %2815 = vst.msk [vmem:[%s3 + $0x8c] sm:$0xf] %vm2779, %v2558
  %2816 = vst.msk [vmem:[%s3 + $0x90] sm:$0xf] %vm2779, %v2559
  %2817 = vst.msk [vmem:[%s3 + $0x94] sm:$0xf] %vm2779, %v2560
  %2818 = vst.msk [vmem:[%s3 + $0x98] sm:$0xf] %vm2779, %v2561
  %2819 = vst.msk [vmem:[%s3 + $0x9c] sm:$0xf] %vm2779, %v2562
  %2820 = vst.msk [vmem:[%s3 + $0xa0] sm:$0xf] %vm2779, %v2563
  %2821 = vst.msk [vmem:[%s3 + $0xa4] sm:$0xf] %vm2779, %v2564
  %2822 = vst.msk [vmem:[%s3 + $0xa8] sm:$0xf] %vm2779, %v2565
  %2823 = vst.msk [vmem:[%s3 + $0xac] sm:$0xf] %vm2779, %v2566
  %2824 = vst.msk [vmem:[%s3 + $0xb0] sm:$0xf] %vm2779, %v2567
  %2825 = vst.msk [vmem:[%s3 + $0xb4] sm:$0xf] %vm2779, %v2568
  %2826 = vst.msk [vmem:[%s3 + $0xb8] sm:$0xf] %vm2779, %v2569
  %2827 = vst.msk [vmem:[%s3 + $0xbc] sm:$0xf] %vm2779, %v2570
  %2828 = vst.msk [vmem:[%s3 + $0xc0] sm:$0xf] %vm2779, %v2571
  %2829 = vst.msk [vmem:[%s3 + $0xc4] sm:$0xf] %vm2779, %v2572
  %2830 = vst.msk [vmem:[%s3 + $0xc8] sm:$0xf] %vm2779, %v2573
  %2831 = vst.msk [vmem:[%s3 + $0xcc] sm:$0xf] %vm2779, %v2574
  %2832 = vst.msk [vmem:[%s3 + $0xd0] sm:$0xf] %vm2779, %v2575
  %2833 = vst.msk [vmem:[%s3 + $0xd4] sm:$0xf] %vm2779, %v2576
  %2834 = vst.msk [vmem:[%s3 + $0xd8] sm:$0xf] %vm2779, %v2577
  %2835 = vst.msk [vmem:[%s3 + $0xdc] sm:$0xf] %vm2779, %v2578
  %2836 = vst.msk [vmem:[%s3 + $0xe0] sm:$0xf] %vm2779, %v2579
  %2837 = vst.msk [vmem:[%s3 + $0xe4] sm:$0xf] %vm2779, %v2580
  %2838 = vst.msk [vmem:[%s3 + $0xe8] sm:$0xf] %vm2779, %v2581
  %2839 = vst.msk [vmem:[%s3 + $0xec] sm:$0xf] %vm2779, %v2582
  %2840 = vst.msk [vmem:[%s3 + $0xf0] sm:$0xf] %vm2779, %v2583
  %2841 = vst.msk [vmem:[%s3 + $0xf4] sm:$0xf] %vm2779, %v2584
  %2842 = vst.msk [vmem:[%s3 + $0xf8] sm:$0xf] %vm2779, %v2585
  %2843 = vst.msk [vmem:[%s3 + $0xfc] sm:$0xf] %vm2779, %v2586
  %2844 = vst.msk [vmem:[%s3 + $0x100] sm:$0xf] %vm2779, %v2587
  %2845 = vst.msk [vmem:[%s3 + $0x104] sm:$0xf] %vm2779, %v2588
  %2846 = vst.msk [vmem:[%s3 + $0x108] sm:$0xf] %vm2779, %v2589
  %2847 = vst.msk [vmem:[%s3 + $0x10c] sm:$0xf] %vm2779, %v2590
  %2848 = vst.msk [vmem:[%s3 + $0x110] sm:$0xf] %vm2779, %v2591
  %2849 = vst.msk [vmem:[%s3 + $0x114] sm:$0xf] %vm2779, %v2592
  %2850 = vst.msk [vmem:[%s3 + $0x118] sm:$0xf] %vm2779, %v2593
  %2851 = vst.msk [vmem:[%s3 + $0x11c] sm:$0xf] %vm2779, %v2594
  %2852 = vst.msk [vmem:[%s3 + $0x120] sm:$0xf] %vm2779, %v2595
  %2853 = vst.msk [vmem:[%s3 + $0x124] sm:$0xf] %vm2779, %v2596
  %2854 = vst.msk [vmem:[%s3 + $0x128] sm:$0xf] %vm2779, %v2597
  %2855 = vst.msk [vmem:[%s3 + $0x12c] sm:$0xf] %vm2779, %v2598
  %2856 = vst.msk [vmem:[%s3 + $0x130] sm:$0xf] %vm2779, %v2599
  %2857 = vst.msk [vmem:[%s3 + $0x134] sm:$0xf] %vm2779, %v2600
  %2858 = vst.msk [vmem:[%s3 + $0x138] sm:$0xf] %vm2779, %v2601
  %2859 = vst.msk [vmem:[%s3 + $0x13c] sm:$0xf] %vm2779, %v2602
  %2860 = vst.msk [vmem:[%s3 + $0x140] sm:$0xf] %vm2779, %v2603
  %2861 = vst.msk [vmem:[%s3 + $0x144] sm:$0xf] %vm2779, %v2604
  %2862 = vst.msk [vmem:[%s3 + $0x148] sm:$0xf] %vm2779, %v2605
  %2863 = vst.msk [vmem:[%s3 + $0x14c] sm:$0xf] %vm2779, %v2606
  %2864 = vst.msk [vmem:[%s3 + $0x150] sm:$0xf] %vm2779, %v2607
  %2865 = vst.msk [vmem:[%s3 + $0x154] sm:$0xf] %vm2779, %v2608
  %2866 = vst.msk [vmem:[%s3 + $0x158] sm:$0xf] %vm2779, %v2609
  %2867 = vst.msk [vmem:[%s3 + $0x15c] sm:$0xf] %vm2779, %v2610
  %2868 = vst.msk [vmem:[%s3 + $0x160] sm:$0xf] %vm2779, %v2611
  %2869 = vst.msk [vmem:[%s3 + $0x164] sm:$0xf] %vm2779, %v2612
  %2870 = vst.msk [vmem:[%s3 + $0x168] sm:$0xf] %vm2779, %v2613
  %2871 = vst.msk [vmem:[%s3 + $0x16c] sm:$0xf] %vm2779, %v2614
  %2872 = vst.msk [vmem:[%s3 + $0x170] sm:$0xf] %vm2779, %v2615
  %2873 = vst.msk [vmem:[%s3 + $0x174] sm:$0xf] %vm2779, %v2616
  %2874 = vst.msk [vmem:[%s3 + $0x178] sm:$0xf] %vm2779, %v2617
  %2875 = vst.msk [vmem:[%s3 + $0x17c] sm:$0xf] %vm2779, %v2618
  %2876 = vst.msk [vmem:[%s3 + $0x180] sm:$0xf] %vm2779, %v2619
  %2877 = vst.msk [vmem:[%s3 + $0x184] sm:$0xf] %vm2779, %v2620
  %2878 = vst.msk [vmem:[%s3 + $0x188] sm:$0xf] %vm2779, %v2621
  %2879 = vst.msk [vmem:[%s3 + $0x18c] sm:$0xf] %vm2779, %v2622
  %2880 = vst.msk [vmem:[%s3 + $0x190] sm:$0xf] %vm2779, %v2623
  %2881 = vst.msk [vmem:[%s3 + $0x194] sm:$0xf] %vm2779, %v2624
  %2882 = vst.msk [vmem:[%s3 + $0x198] sm:$0xf] %vm2779, %v2625
  %2883 = vst.msk [vmem:[%s3 + $0x19c] sm:$0xf] %vm2779, %v2626
  %2884 = vst.msk [vmem:[%s3 + $0x1a0] sm:$0xf] %vm2779, %v2627
  %2885 = vst.msk [vmem:[%s3 + $0x1a4] sm:$0xf] %vm2779, %v2628
  %2886 = vst.msk [vmem:[%s3 + $0x1a8] sm:$0xf] %vm2779, %v2629
  %2887 = vst.msk [vmem:[%s3 + $0x1ac] sm:$0xf] %vm2779, %v2630
  %2888 = vst.msk [vmem:[%s3 + $0x1b0] sm:$0xf] %vm2779, %v2631
  %2889 = vst.msk [vmem:[%s3 + $0x1b4] sm:$0xf] %vm2779, %v2632
  %2890 = vst.msk [vmem:[%s3 + $0x1b8] sm:$0xf] %vm2779, %v2633
  %2891 = vst.msk [vmem:[%s3 + $0x1bc] sm:$0xf] %vm2779, %v2634
  %2892 = vst.msk [vmem:[%s3 + $0x1c0] sm:$0xf] %vm2779, %v2635
  %2893 = vst.msk [vmem:[%s3 + $0x1c4] sm:$0xf] %vm2779, %v2636
  %2894 = vst.msk [vmem:[%s3 + $0x1c8] sm:$0xf] %vm2779, %v2637
  %2895 = vst.msk [vmem:[%s3 + $0x1cc] sm:$0xf] %vm2779, %v2638
  %2896 = vst.msk [vmem:[%s3 + $0x1d0] sm:$0xf] %vm2779, %v2639
  %2897 = vst.msk [vmem:[%s3 + $0x1d4] sm:$0xf] %vm2779, %v2640
  %2898 = vst.msk [vmem:[%s3 + $0x1d8] sm:$0xf] %vm2779, %v2641
  %2899 = vst.msk [vmem:[%s3 + $0x1dc] sm:$0xf] %vm2779, %v2642
  %2900 = vst.msk [vmem:[%s3 + $0x1e0] sm:$0xf] %vm2779, %v2643
  %2901 = vst.msk [vmem:[%s3 + $0x1e4] sm:$0xf] %vm2779, %v2644
  %2902 = vst.msk [vmem:[%s3 + $0x1e8] sm:$0xf] %vm2779, %v2645
  %2903 = vst.msk [vmem:[%s3 + $0x1ec] sm:$0xf] %vm2779, %v2646
  %2904 = vst.msk [vmem:[%s3 + $0x1f0] sm:$0xf] %vm2779, %v2647
  %2905 = vst.msk [vmem:[%s3 + $0x1f4] sm:$0xf] %vm2779, %v2648
  %2906 = vst.msk [vmem:[%s3 + $0x1f8] sm:$0xf] %vm2779, %v2649
  %2907 = vst.msk [vmem:[%s3 + $0x1fc] sm:$0xf] %vm2779, %v2650
  %2908 = vst.msk [vmem:[%s3 + $0x200] sm:$0xf] %vm2779, %v2651
  %2909 = vst.msk [vmem:[%s3 + $0x204] sm:$0xf] %vm2779, %v2652
  %2910 = vst.msk [vmem:[%s3 + $0x208] sm:$0xf] %vm2779, %v2653
  %2911 = vst.msk [vmem:[%s3 + $0x20c] sm:$0xf] %vm2779, %v2654
  %2912 = vst.msk [vmem:[%s3 + $0x210] sm:$0xf] %vm2779, %v2655
  %2913 = vst.msk [vmem:[%s3 + $0x214] sm:$0xf] %vm2779, %v2656
  %2914 = vst.msk [vmem:[%s3 + $0x218] sm:$0xf] %vm2779, %v2657
  %2915 = vst.msk [vmem:[%s3 + $0x21c] sm:$0xf] %vm2779, %v2658
  %2916 = vst.msk [vmem:[%s3 + $0x220] sm:$0xf] %vm2779, %v2659
  %2917 = vst.msk [vmem:[%s3 + $0x224] sm:$0xf] %vm2779, %v2660
  %2918 = vst.msk [vmem:[%s3 + $0x228] sm:$0xf] %vm2779, %v2661
  %2919 = vst.msk [vmem:[%s3 + $0x22c] sm:$0xf] %vm2779, %v2662
  %2920 = vst.msk [vmem:[%s3 + $0x230] sm:$0xf] %vm2779, %v2663
  %2921 = vst.msk [vmem:[%s3 + $0x234] sm:$0xf] %vm2779, %v2664
  %2922 = vst.msk [vmem:[%s3 + $0x238] sm:$0xf] %vm2779, %v2665
  %2923 = vst.msk [vmem:[%s3 + $0x23c] sm:$0xf] %vm2779, %v2666
  %2924 = vst.msk [vmem:[%s3 + $0x240] sm:$0xf] %vm2779, %v2667
  %2925 = vst.msk [vmem:[%s3 + $0x244] sm:$0xf] %vm2779, %v2668
  %2926 = vst.msk [vmem:[%s3 + $0x248] sm:$0xf] %vm2779, %v2669
  %2927 = vst.msk [vmem:[%s3 + $0x24c] sm:$0xf] %vm2779, %v2670
  %2928 = vst.msk [vmem:[%s3 + $0x250] sm:$0xf] %vm2779, %v2671
  %2929 = vst.msk [vmem:[%s3 + $0x254] sm:$0xf] %vm2779, %v2672
  %2930 = vst.msk [vmem:[%s3 + $0x258] sm:$0xf] %vm2779, %v2673
  %2931 = vst.msk [vmem:[%s3 + $0x25c] sm:$0xf] %vm2779, %v2674
  %2932 = vst.msk [vmem:[%s3 + $0x260] sm:$0xf] %vm2779, %v2675
  %2933 = vst.msk [vmem:[%s3 + $0x264] sm:$0xf] %vm2779, %v2676
  %2934 = vst.msk [vmem:[%s3 + $0x268] sm:$0xf] %vm2779, %v2677
  %2935 = vst.msk [vmem:[%s3 + $0x26c] sm:$0xf] %vm2779, %v2678
  %2936 = vst.msk [vmem:[%s3 + $0x270] sm:$0xf] %vm2779, %v2679
  %2937 = vst.msk [vmem:[%s3 + $0x274] sm:$0xf] %vm2779, %v2680
  %2938 = vst.msk [vmem:[%s3 + $0x278] sm:$0xf] %vm2779, %v2681
  %2939 = vst.msk [vmem:[%s3 + $0x27c] sm:$0xf] %vm2779, %v2682
  %2940 = vst.msk [vmem:[%s3 + $0x280] sm:$0xf] %vm2779, %v2683
  %2941 = vst.msk [vmem:[%s3 + $0x284] sm:$0xf] %vm2779, %v2684
  %2942 = vst.msk [vmem:[%s3 + $0x288] sm:$0xf] %vm2779, %v2685
  %2943 = vst.msk [vmem:[%s3 + $0x28c] sm:$0xf] %vm2779, %v2686
  %2944 = vst.msk [vmem:[%s3 + $0x290] sm:$0xf] %vm2779, %v2687
  %2945 = vst.msk [vmem:[%s3 + $0x294] sm:$0xf] %vm2779, %v2688
  %2946 = vst.msk [vmem:[%s3 + $0x298] sm:$0xf] %vm2779, %v2689
  %2947 = vst.msk [vmem:[%s3 + $0x29c] sm:$0xf] %vm2779, %v2690
  %2948 = vst.msk [vmem:[%s3 + $0x2a0] sm:$0xf] %vm2779, %v2691
  %2949 = vst.msk [vmem:[%s3 + $0x2a4] sm:$0xf] %vm2779, %v2692
  %2950 = vst.msk [vmem:[%s3 + $0x2a8] sm:$0xf] %vm2779, %v2693
  %2951 = vst.msk [vmem:[%s3 + $0x2ac] sm:$0xf] %vm2779, %v2694
  %2952 = vst.msk [vmem:[%s3 + $0x2b0] sm:$0xf] %vm2779, %v2695
  %2953 = vst.msk [vmem:[%s3 + $0x2b4] sm:$0xf] %vm2779, %v2696
  %2954 = vst.msk [vmem:[%s3 + $0x2b8] sm:$0xf] %vm2779, %v2697
  %2955 = vst.msk [vmem:[%s3 + $0x2bc] sm:$0xf] %vm2779, %v2698
  %2956 = vst.msk [vmem:[%s3 + $0x2c0] sm:$0xf] %vm2779, %v2699
  %2957 = vst.msk [vmem:[%s3 + $0x2c4] sm:$0xf] %vm2779, %v2700
  %2958 = vst.msk [vmem:[%s3 + $0x2c8] sm:$0xf] %vm2779, %v2701
  %2959 = vst.msk [vmem:[%s3 + $0x2cc] sm:$0xf] %vm2779, %v2702
  %2960 = vst.msk [vmem:[%s3 + $0x2d0] sm:$0xf] %vm2779, %v2703
  %2961 = vst.msk [vmem:[%s3 + $0x2d4] sm:$0xf] %vm2779, %v2704
  %2962 = vst.msk [vmem:[%s3 + $0x2d8] sm:$0xf] %vm2779, %v2705
  %2963 = vst.msk [vmem:[%s3 + $0x2dc] sm:$0xf] %vm2779, %v2706
  %2964 = vst.msk [vmem:[%s3 + $0x2e0] sm:$0xf] %vm2779, %v2707
  %2965 = vst.msk [vmem:[%s3 + $0x2e4] sm:$0xf] %vm2779, %v2708
  %2966 = vst.msk [vmem:[%s3 + $0x2e8] sm:$0xf] %vm2779, %v2709
  %2967 = vst.msk [vmem:[%s3 + $0x2ec] sm:$0xf] %vm2779, %v2710
  %2968 = vst.msk [vmem:[%s3 + $0x2f0] sm:$0xf] %vm2779, %v2711
  %2969 = vst.msk [vmem:[%s3 + $0x2f4] sm:$0xf] %vm2779, %v2712
  %2970 = vst.msk [vmem:[%s3 + $0x2f8] sm:$0xf] %vm2779, %v2713
  %2971 = vst.msk [vmem:[%s3 + $0x2fc] sm:$0xf] %vm2779, %v2714
  %2972 = vst.msk [vmem:[%s3 + $0x300] sm:$0xf] %vm2779, %v2715
  %2973 = vst.msk [vmem:[%s3 + $0x304] sm:$0xf] %vm2779, %v2716
  %2974 = vst.msk [vmem:[%s3 + $0x308] sm:$0xf] %vm2779, %v2717
  %2975 = vst.msk [vmem:[%s3 + $0x30c] sm:$0xf] %vm2779, %v2718
  %2976 = vst.msk [vmem:[%s3 + $0x310] sm:$0xf] %vm2779, %v2719
  %2977 = vst.msk [vmem:[%s3 + $0x314] sm:$0xf] %vm2779, %v2720
  %2978 = vst.msk [vmem:[%s3 + $0x318] sm:$0xf] %vm2779, %v2721
  %2979 = vst.msk [vmem:[%s3 + $0x31c] sm:$0xf] %vm2779, %v2722
  %2980 = vst.msk [vmem:[%s3 + $0x320] sm:$0xf] %vm2779, %v2723
  %2981 = vst.msk [vmem:[%s3 + $0x324] sm:$0xf] %vm2779, %v2724
  %2982 = vst.msk [vmem:[%s3 + $0x328] sm:$0xf] %vm2779, %v2725
  %2983 = vst.msk [vmem:[%s3 + $0x32c] sm:$0xf] %vm2779, %v2726
  %2984 = vst.msk [vmem:[%s3 + $0x330] sm:$0xf] %vm2779, %v2727
  %2985 = vst.msk [vmem:[%s3 + $0x334] sm:$0xf] %vm2779, %v2728
  %2986 = vst.msk [vmem:[%s3 + $0x338] sm:$0xf] %vm2779, %v2729
  %2987 = vst.msk [vmem:[%s3 + $0x33c] sm:$0xf] %vm2779, %v2730
  %2988 = vst.msk [vmem:[%s3 + $0x340] sm:$0xf] %vm2779, %v2731
  %2989 = vst.msk [vmem:[%s3 + $0x344] sm:$0xf] %vm2779, %v2732
  %2990 = vst.msk [vmem:[%s3 + $0x348] sm:$0xf] %vm2779, %v2733
  %2991 = vst.msk [vmem:[%s3 + $0x34c] sm:$0xf] %vm2779, %v2734
  %2992 = vst.msk [vmem:[%s3 + $0x350] sm:$0xf] %vm2779, %v2735
  %2993 = vst.msk [vmem:[%s3 + $0x354] sm:$0xf] %vm2779, %v2736
  %2994 = vst.msk [vmem:[%s3 + $0x358] sm:$0xf] %vm2779, %v2737
  %2995 = vst.msk [vmem:[%s3 + $0x35c] sm:$0xf] %vm2779, %v2738
  %2996 = vst.msk [vmem:[%s3 + $0x360] sm:$0xf] %vm2779, %v2739
  %2997 = vst.msk [vmem:[%s3 + $0x364] sm:$0xf] %vm2779, %v2740
  %2998 = vst.msk [vmem:[%s3 + $0x368] sm:$0xf] %vm2779, %v2741
  %2999 = vst.msk [vmem:[%s3 + $0x36c] sm:$0xf] %vm2779, %v2742
  %3000 = vst.msk [vmem:[%s3 + $0x370] sm:$0xf] %vm2779, %v2743
  %3001 = vst.msk [vmem:[%s3 + $0x374] sm:$0xf] %vm2779, %v2744
  %3002 = vst.msk [vmem:[%s3 + $0x378] sm:$0xf] %vm2779, %v2745
  %3003 = vst.msk [vmem:[%s3 + $0x37c] sm:$0xf] %vm2779, %v2746
  %3004 = vst.msk [vmem:[%s3 + $0x380] sm:$0xf] %vm2779, %v2747
  %3005 = vst.msk [vmem:[%s3 + $0x384] sm:$0xf] %vm2779, %v2748
  %3006 = vst.msk [vmem:[%s3 + $0x388] sm:$0xf] %vm2779, %v2749
  %3007 = vst.msk [vmem:[%s3 + $0x38c] sm:$0xf] %vm2779, %v2750
  %3008 = vst.msk [vmem:[%s3 + $0x390] sm:$0xf] %vm2779, %v2751
  %3009 = vst.msk [vmem:[%s3 + $0x394] sm:$0xf] %vm2779, %v2752
  %3010 = vst.msk [vmem:[%s3 + $0x398] sm:$0xf] %vm2779, %v2753
  %3011 = vst.msk [vmem:[%s3 + $0x39c] sm:$0xf] %vm2779, %v2754
  %3012 = vst.msk [vmem:[%s3 + $0x3a0] sm:$0xf] %vm2779, %v2755
  %3013 = vst.msk [vmem:[%s3 + $0x3a4] sm:$0xf] %vm2779, %v2756
  %3014 = vst.msk [vmem:[%s3 + $0x3a8] sm:$0xf] %vm2779, %v2757
  %3015 = vst.msk [vmem:[%s3 + $0x3ac] sm:$0xf] %vm2779, %v2758
  %3016 = vst.msk [vmem:[%s3 + $0x3b0] sm:$0xf] %vm2779, %v2759
  %3017 = vst.msk [vmem:[%s3 + $0x3b4] sm:$0xf] %vm2779, %v2760
  %3018 = vst.msk [vmem:[%s3 + $0x3b8] sm:$0xf] %vm2779, %v2761
  %3019 = vst.msk [vmem:[%s3 + $0x3bc] sm:$0xf] %vm2779, %v2762
  %3020 = vst.msk [vmem:[%s3 + $0x3c0] sm:$0xf] %vm2779, %v2763
  %3021 = vst.msk [vmem:[%s3 + $0x3c4] sm:$0xf] %vm2779, %v2764
  %3022 = vst.msk [vmem:[%s3 + $0x3c8] sm:$0xf] %vm2779, %v2765
  %3023 = vst.msk [vmem:[%s3 + $0x3cc] sm:$0xf] %vm2779, %v2766
  %3024 = vst.msk [vmem:[%s3 + $0x3d0] sm:$0xf] %vm2779, %v2767
  %3025 = vst.msk [vmem:[%s3 + $0x3d4] sm:$0xf] %vm2779, %v2768
  %3026 = vst.msk [vmem:[%s3 + $0x3d8] sm:$0xf] %vm2779, %v2769
  %3027 = vst.msk [vmem:[%s3 + $0x3dc] sm:$0xf] %vm2779, %v2770
  %3028 = vst.msk [vmem:[%s3 + $0x3e0] sm:$0xf] %vm2779, %v2771
  %3029 = vst.msk [vmem:[%s3 + $0x3e4] sm:$0xf] %vm2779, %v2772
  %3030 = vst.msk [vmem:[%s3 + $0x3e8] sm:$0xf] %vm2779, %v2773
  %3031 = vst.msk [vmem:[%s3 + $0x3ec] sm:$0xf] %vm2779, %v2774
  %3032 = vst.msk [vmem:[%s3 + $0x3f0] sm:$0xf] %vm2779, %v2775
  %3033 = vst.msk [vmem:[%s3 + $0x3f4] sm:$0xf] %vm2779, %v2776
  %3034 = vst.msk [vmem:[%s3 + $0x3f8] sm:$0xf] %vm2779, %v2777
  %3035 = vst.msk [vmem:[%s3 + $0x3fc] sm:$0xf] %vm2779, %v2778
  // Predicated region
  $region14: #{discriminator_forward.5} parent=0 // pred_check
    _
  $region15: #{discriminator_forward.5} parent=0 // pred_check_branch
    %3037 = sbr.rel (0) target = $region17
  $region16: #{discriminator_forward.5} parent=0 // pred_region
    _
  $region17: #{discriminator_forward.5} parent=0 // pred_fallthru
    _
  // Predicated region
  $region18: #{discriminator_forward.5} parent=0 // pred_check
    _
  $region19: #{discriminator_forward.5} parent=0 // pred_check_branch
    %3039 = sbr.rel (0) target = $region21
  $region20: #{discriminator_forward.5} parent=0 // pred_region
    _
  $region21: #{discriminator_forward.5} parent=0 // pred_fallthru
    _

// kernel: discriminator_forward.6
$region0: #{discriminator_forward.6}
  #allocation0 [shape = 'u32[]', space=smem, size = 0x4, offset = 0x4, fixed_abs, tag = 'smem constant byte address 0x4 - core index']
  #allocation1 [shape = 'u32[72,128]{1,0:T(1,128)}', space=vmem, size = 0x9000, scoped, tag = 'internal scratch']
  %s0 = inlined_call_operand.vmem [shape: bf16[512,128], index: 0, kind: input, shape index: {}]
  %s1 = inlined_call_operand.vmem [shape: bf16[128,16], index: 1, kind: input, shape index: {}]
  %s2 = inlined_call_operand.vmem [shape: f32[1,16], index: 2, kind: input, shape index: {}]
  %s3 = inlined_call_operand.vmem [shape: f32[1,16], index: 3, kind: input, shape index: {}]
  %s4 = inlined_call_operand.vmem [shape: bf16[512,16], index: 4, kind: output, shape index: {}]
  %s5 = sld [smem:[#allocation0]]
  $region26: #{discriminator_forward.6} parent=0
    _
  %s7 = ssub.s32 1, %s5
  %s8 = scalar_select 0, %s7, %s5
  // Predicated region
  $region2: #{discriminator_forward.6} parent=0 // pred_check
    _
  $region3: #{discriminator_forward.6} parent=0 // pred_check_branch
    %10 = sbr.rel (0) target = $region5
  $region4: #{discriminator_forward.6} parent=0 // pred_region
    _
  $region5: #{discriminator_forward.6} parent=0 // pred_fallthru
    _
  // Predicated region
  $region6: #{discriminator_forward.6} parent=0 // pred_check
    _
  $region7: #{discriminator_forward.6} parent=0 // pred_check_branch
    %12 = sbr.rel (0) target = $region9
  $region8: #{discriminator_forward.6} parent=0 // pred_region
    _
  $region9: #{discriminator_forward.6} parent=0 // pred_fallthru
    _
  // Predicated region
  $region10: #{discriminator_forward.6} parent=0 // pred_check
    _
  $region11: #{discriminator_forward.6} parent=0 // pred_check_branch
    %14 = sbr.rel (0) target = $region13
  $region12: #{discriminator_forward.6} parent=0 // pred_region
    _
  $region13: #{discriminator_forward.6} parent=0 // pred_fallthru
    _
  // Predicated region
  $region14: #{discriminator_forward.6} parent=0 // pred_check
    _
  $region15: #{discriminator_forward.6} parent=0 // pred_check_branch
    %16 = sbr.rel (0) target = $region17
  $region16: #{discriminator_forward.6} parent=0 // pred_region
    _
  $region17: #{discriminator_forward.6} parent=0 // pred_fallthru
    _
  %v17 = vld [vmem:[%s0] sm:$0xf]
  %v18 = vld [vmem:[%s0 + $0x4] sm:$0xf]
  %v19 = vld [vmem:[%s0 + $0x8] sm:$0xf]
  %v20 = vld [vmem:[%s0 + $0xc] sm:$0xf]
  %v21 = vld [vmem:[%s0 + $0x10] sm:$0xf]
  %v22 = vld [vmem:[%s0 + $0x14] sm:$0xf]
  %v23 = vld [vmem:[%s0 + $0x18] sm:$0xf]
  %v24 = vld [vmem:[%s0 + $0x1c] sm:$0xf]
  %v25 = vld [vmem:[%s0 + $0x20] sm:$0xf]
  %v26 = vld [vmem:[%s0 + $0x24] sm:$0xf]
  %v27 = vld [vmem:[%s0 + $0x28] sm:$0xf]
  %v28 = vld [vmem:[%s0 + $0x2c] sm:$0xf]
  %v29 = vld [vmem:[%s0 + $0x30] sm:$0xf]
  %v30 = vld [vmem:[%s0 + $0x34] sm:$0xf]
  %v31 = vld [vmem:[%s0 + $0x38] sm:$0xf]
  %v32 = vld [vmem:[%s0 + $0x3c] sm:$0xf]
  %v33 = vld [vmem:[%s0 + $0x40] sm:$0xf]
  %v34 = vld [vmem:[%s0 + $0x44] sm:$0xf]
  %v35 = vld [vmem:[%s0 + $0x48] sm:$0xf]
  %v36 = vld [vmem:[%s0 + $0x4c] sm:$0xf]
  %v37 = vld [vmem:[%s0 + $0x50] sm:$0xf]
  %v38 = vld [vmem:[%s0 + $0x54] sm:$0xf]
  %v39 = vld [vmem:[%s0 + $0x58] sm:$0xf]
  %v40 = vld [vmem:[%s0 + $0x5c] sm:$0xf]
  %v41 = vld [vmem:[%s0 + $0x60] sm:$0xf]
  %v42 = vld [vmem:[%s0 + $0x64] sm:$0xf]
  %v43 = vld [vmem:[%s0 + $0x68] sm:$0xf]
  %v44 = vld [vmem:[%s0 + $0x6c] sm:$0xf]
  %v45 = vld [vmem:[%s0 + $0x70] sm:$0xf]
  %v46 = vld [vmem:[%s0 + $0x74] sm:$0xf]
  %v47 = vld [vmem:[%s0 + $0x78] sm:$0xf]
  %v48 = vld [vmem:[%s0 + $0x7c] sm:$0xf]
  %v49 = vld [vmem:[%s0 + $0x80] sm:$0xf]
  %v50 = vld [vmem:[%s0 + $0x84] sm:$0xf]
  %v51 = vld [vmem:[%s0 + $0x88] sm:$0xf]
  %v52 = vld [vmem:[%s0 + $0x8c] sm:$0xf]
  %v53 = vld [vmem:[%s0 + $0x90] sm:$0xf]
  %v54 = vld [vmem:[%s0 + $0x94] sm:$0xf]
  %v55 = vld [vmem:[%s0 + $0x98] sm:$0xf]
  %v56 = vld [vmem:[%s0 + $0x9c] sm:$0xf]
  %v57 = vld [vmem:[%s0 + $0xa0] sm:$0xf]
  %v58 = vld [vmem:[%s0 + $0xa4] sm:$0xf]
  %v59 = vld [vmem:[%s0 + $0xa8] sm:$0xf]
  %v60 = vld [vmem:[%s0 + $0xac] sm:$0xf]
  %v61 = vld [vmem:[%s0 + $0xb0] sm:$0xf]
  %v62 = vld [vmem:[%s0 + $0xb4] sm:$0xf]
  %v63 = vld [vmem:[%s0 + $0xb8] sm:$0xf]
  %v64 = vld [vmem:[%s0 + $0xbc] sm:$0xf]
  %v65 = vld [vmem:[%s0 + $0xc0] sm:$0xf]
  %v66 = vld [vmem:[%s0 + $0xc4] sm:$0xf]
  %v67 = vld [vmem:[%s0 + $0xc8] sm:$0xf]
  %v68 = vld [vmem:[%s0 + $0xcc] sm:$0xf]
  %v69 = vld [vmem:[%s0 + $0xd0] sm:$0xf]
  %v70 = vld [vmem:[%s0 + $0xd4] sm:$0xf]
  %v71 = vld [vmem:[%s0 + $0xd8] sm:$0xf]
  %v72 = vld [vmem:[%s0 + $0xdc] sm:$0xf]
  %v73 = vld [vmem:[%s0 + $0xe0] sm:$0xf]
  %v74 = vld [vmem:[%s0 + $0xe4] sm:$0xf]
  %v75 = vld [vmem:[%s0 + $0xe8] sm:$0xf]
  %v76 = vld [vmem:[%s0 + $0xec] sm:$0xf]
  %v77 = vld [vmem:[%s0 + $0xf0] sm:$0xf]
  %v78 = vld [vmem:[%s0 + $0xf4] sm:$0xf]
  %v79 = vld [vmem:[%s0 + $0xf8] sm:$0xf]
  %v80 = vld [vmem:[%s0 + $0xfc] sm:$0xf]
  %v81 = vld [vmem:[%s1] sm:$0xf]
  %v82 = vld [vmem:[%s1 + $0x4] sm:$0xf]
  %v83 = vld [vmem:[%s1 + $0x8] sm:$0xf]
  %v84 = vld [vmem:[%s1 + $0xc] sm:$0xf]
  %v85 = vld [vmem:[%s1 + $0x10] sm:$0xf]
  %v86 = vld [vmem:[%s1 + $0x14] sm:$0xf]
  %v87 = vld [vmem:[%s1 + $0x18] sm:$0xf]
  %v88 = vld [vmem:[%s1 + $0x1c] sm:$0xf]
  %v89 = vld [vmem:[%s1 + $0x20] sm:$0xf]
  %v90 = vld [vmem:[%s1 + $0x24] sm:$0xf]
  %v91 = vld [vmem:[%s1 + $0x28] sm:$0xf]
  %v92 = vld [vmem:[%s1 + $0x2c] sm:$0xf]
  %v93 = vld [vmem:[%s1 + $0x30] sm:$0xf]
  %v94 = vld [vmem:[%s1 + $0x34] sm:$0xf]
  %v95 = vld [vmem:[%s1 + $0x38] sm:$0xf]
  %v96 = vld [vmem:[%s1 + $0x3c] sm:$0xf]
  %v161 = vunpack.c.l.b16 %v17
  %v162 = vunpack.c.l.b16 %v18
  %v163 = vunpack.c.l.b16 %v19
  %v164 = vunpack.c.l.b16 %v20
  %v165 = vunpack.c.l.b16 %v21
  %v166 = vunpack.c.l.b16 %v22
  %v167 = vunpack.c.l.b16 %v23
  %v168 = vunpack.c.l.b16 %v24
  %v169 = vunpack.c.l.b16 %v25
  %v170 = vunpack.c.l.b16 %v26
  %v171 = vunpack.c.l.b16 %v27
  %v172 = vunpack.c.l.b16 %v28
  %v173 = vunpack.c.l.b16 %v29
  %v174 = vunpack.c.l.b16 %v30
  %v175 = vunpack.c.l.b16 %v31
  %v176 = vunpack.c.l.b16 %v32
  %v177 = vunpack.c.l.b16 %v33
  %v178 = vunpack.c.l.b16 %v34
  %v179 = vunpack.c.l.b16 %v35
  %v180 = vunpack.c.l.b16 %v36
  %v181 = vunpack.c.l.b16 %v37
  %v182 = vunpack.c.l.b16 %v38
  %v183 = vunpack.c.l.b16 %v39
  %v184 = vunpack.c.l.b16 %v40
  %v185 = vunpack.c.l.b16 %v41
  %v186 = vunpack.c.l.b16 %v42
  %v187 = vunpack.c.l.b16 %v43
  %v188 = vunpack.c.l.b16 %v44
  %v189 = vunpack.c.l.b16 %v45
  %v190 = vunpack.c.l.b16 %v46
  %v191 = vunpack.c.l.b16 %v47
  %v192 = vunpack.c.l.b16 %v48
  %v193 = vunpack.c.l.b16 %v49
  %v194 = vunpack.c.l.b16 %v50
  %v195 = vunpack.c.l.b16 %v51
  %v196 = vunpack.c.l.b16 %v52
  %v197 = vunpack.c.l.b16 %v53
  %v198 = vunpack.c.l.b16 %v54
  %v199 = vunpack.c.l.b16 %v55
  %v200 = vunpack.c.l.b16 %v56
  %v201 = vunpack.c.l.b16 %v57
  %v202 = vunpack.c.l.b16 %v58
  %v203 = vunpack.c.l.b16 %v59
  %v204 = vunpack.c.l.b16 %v60
  %v205 = vunpack.c.l.b16 %v61
  %v206 = vunpack.c.l.b16 %v62
  %v207 = vunpack.c.l.b16 %v63
  %v208 = vunpack.c.l.b16 %v64
  %v209 = vunpack.c.l.b16 %v65
  %v210 = vunpack.c.l.b16 %v66
  %v211 = vunpack.c.l.b16 %v67
  %v212 = vunpack.c.l.b16 %v68
  %v213 = vunpack.c.l.b16 %v69
  %v214 = vunpack.c.l.b16 %v70
  %v215 = vunpack.c.l.b16 %v71
  %v216 = vunpack.c.l.b16 %v72
  %v217 = vunpack.c.l.b16 %v73
  %v218 = vunpack.c.l.b16 %v74
  %v219 = vunpack.c.l.b16 %v75
  %v220 = vunpack.c.l.b16 %v76
  %v221 = vunpack.c.l.b16 %v77
  %v222 = vunpack.c.l.b16 %v78
  %v223 = vunpack.c.l.b16 %v79
  %v224 = vunpack.c.l.b16 %v80
  %v225 = vpack.c.b16 %v162, %v161
  %v226 = vpack.c.b16 %v164, %v163
  %v227 = vpack.c.b16 %v166, %v165
  %v228 = vpack.c.b16 %v168, %v167
  %v229 = vpack.c.b16 %v170, %v169
  %v230 = vpack.c.b16 %v172, %v171
  %v231 = vpack.c.b16 %v174, %v173
  %v232 = vpack.c.b16 %v176, %v175
  %v233 = vpack.c.b16 %v178, %v177
  %v234 = vpack.c.b16 %v180, %v179
  %v235 = vpack.c.b16 %v182, %v181
  %v236 = vpack.c.b16 %v184, %v183
  %v237 = vpack.c.b16 %v186, %v185
  %v238 = vpack.c.b16 %v188, %v187
  %v239 = vpack.c.b16 %v190, %v189
  %v240 = vpack.c.b16 %v192, %v191
  %v241 = vpack.c.b16 %v194, %v193
  %v242 = vpack.c.b16 %v196, %v195
  %v243 = vpack.c.b16 %v198, %v197
  %v244 = vpack.c.b16 %v200, %v199
  %v245 = vpack.c.b16 %v202, %v201
  %v246 = vpack.c.b16 %v204, %v203
  %v247 = vpack.c.b16 %v206, %v205
  %v248 = vpack.c.b16 %v208, %v207
  %v249 = vpack.c.b16 %v210, %v209
  %v250 = vpack.c.b16 %v212, %v211
  %v251 = vpack.c.b16 %v214, %v213
  %v252 = vpack.c.b16 %v216, %v215
  %v253 = vpack.c.b16 %v218, %v217
  %v254 = vpack.c.b16 %v220, %v219
  %v255 = vpack.c.b16 %v222, %v221
  %v256 = vpack.c.b16 %v224, %v223
  %v305 = vunpack.c.l.b16 %v81
  %v306 = vunpack.c.l.b16 %v82
  %v307 = vunpack.c.l.b16 %v83
  %v308 = vunpack.c.l.b16 %v84
  %v309 = vunpack.c.l.b16 %v85
  %v310 = vunpack.c.l.b16 %v86
  %v311 = vunpack.c.l.b16 %v87
  %v312 = vunpack.c.l.b16 %v88
  %v313 = vunpack.c.l.b16 %v89
  %v314 = vunpack.c.l.b16 %v90
  %v315 = vunpack.c.l.b16 %v91
  %v316 = vunpack.c.l.b16 %v92
  %v317 = vunpack.c.l.b16 %v93
  %v318 = vunpack.c.l.b16 %v94
  %v319 = vunpack.c.l.b16 %v95
  %v320 = vunpack.c.l.b16 %v96
  %v321 = vpack.c.b16 %v306, %v305
  %v322 = vpack.c.b16 %v308, %v307
  %v323 = vpack.c.b16 %v310, %v309
  %v324 = vpack.c.b16 %v312, %v311
  %v325 = vpack.c.b16 %v314, %v313
  %v326 = vpack.c.b16 %v316, %v315
  %v327 = vpack.c.b16 %v318, %v317
  %v328 = vpack.c.b16 %v320, %v319
  %337 = vmatpush.bf16.msra.mxu0 %v328
  %338 = vmatpush.bf16.msra.mxu0 %v327
  %339 = vmatpush.bf16.msra.mxu0 %v326
  %340 = vmatpush.bf16.msra.mxu0 %v325
  %341 = vmatpush.bf16.msra.mxu0 %v324
  %342 = vmatpush.bf16.msra.mxu0 %v323
  %343 = vmatpush.bf16.msra.mxu0 %v322
  %344 = vmatpush.bf16.msra.mxu0 %v321
  %345 = vmatmul.bf16.gmra.mxu0 %v225
  %v346 = vpop.f32.mrf.mxu0
  %v347 = vadd.f32 0.0, %v346
  %v348 = vpop.f32.mrf.mxu0
  %v349 = vadd.f32 0.0, %v348
  %350 = vmatmul.bf16.gmra.mxu0 %v226
  %v351 = vpop.f32.mrf.mxu0
  %v352 = vadd.f32 0.0, %v351
  %v353 = vpop.f32.mrf.mxu0
  %v354 = vadd.f32 0.0, %v353
  %355 = vmatmul.bf16.gmra.mxu0 %v227
  %v356 = vpop.f32.mrf.mxu0
  %v357 = vadd.f32 0.0, %v356
  %v358 = vpop.f32.mrf.mxu0
  %v359 = vadd.f32 0.0, %v358
  %360 = vmatmul.bf16.gmra.mxu0 %v228
  %v361 = vpop.f32.mrf.mxu0
  %v362 = vadd.f32 0.0, %v361
  %v363 = vpop.f32.mrf.mxu0
  %v364 = vadd.f32 0.0, %v363
  %365 = vmatmul.bf16.gmra.mxu0 %v229
  %v366 = vpop.f32.mrf.mxu0
  %v367 = vadd.f32 0.0, %v366
  %v368 = vpop.f32.mrf.mxu0
  %v369 = vadd.f32 0.0, %v368
  %370 = vmatmul.bf16.gmra.mxu0 %v230
  %v371 = vpop.f32.mrf.mxu0
  %v372 = vadd.f32 0.0, %v371
  %v373 = vpop.f32.mrf.mxu0
  %v374 = vadd.f32 0.0, %v373
  %375 = vmatmul.bf16.gmra.mxu0 %v231
  %v376 = vpop.f32.mrf.mxu0
  %v377 = vadd.f32 0.0, %v376
  %v378 = vpop.f32.mrf.mxu0
  %v379 = vadd.f32 0.0, %v378
  %380 = vmatmul.bf16.gmra.mxu0 %v232
  %v381 = vpop.f32.mrf.mxu0
  %v382 = vadd.f32 0.0, %v381
  %v383 = vpop.f32.mrf.mxu0
  %v384 = vadd.f32 0.0, %v383
  %385 = vmatmul.bf16.gmra.mxu0 %v233
  %v386 = vpop.f32.mrf.mxu0
  %v387 = vadd.f32 0.0, %v386
  %v388 = vpop.f32.mrf.mxu0
  %v389 = vadd.f32 0.0, %v388
  %390 = vmatmul.bf16.gmra.mxu0 %v234
  %v391 = vpop.f32.mrf.mxu0
  %v392 = vadd.f32 0.0, %v391
  %v393 = vpop.f32.mrf.mxu0
  %v394 = vadd.f32 0.0, %v393
  %395 = vmatmul.bf16.gmra.mxu0 %v235
  %v396 = vpop.f32.mrf.mxu0
  %v397 = vadd.f32 0.0, %v396
  %v398 = vpop.f32.mrf.mxu0
  %v399 = vadd.f32 0.0, %v398
  %400 = vmatmul.bf16.gmra.mxu0 %v236
  %v401 = vpop.f32.mrf.mxu0
  %v402 = vadd.f32 0.0, %v401
  %v403 = vpop.f32.mrf.mxu0
  %v404 = vadd.f32 0.0, %v403
  %405 = vmatmul.bf16.gmra.mxu0 %v237
  %v406 = vpop.f32.mrf.mxu0
  %v407 = vadd.f32 0.0, %v406
  %v408 = vpop.f32.mrf.mxu0
  %v409 = vadd.f32 0.0, %v408
  %410 = vmatmul.bf16.gmra.mxu0 %v238
  %v411 = vpop.f32.mrf.mxu0
  %v412 = vadd.f32 0.0, %v411
  %v413 = vpop.f32.mrf.mxu0
  %v414 = vadd.f32 0.0, %v413
  %415 = vmatmul.bf16.gmra.mxu0 %v239
  %v416 = vpop.f32.mrf.mxu0
  %v417 = vadd.f32 0.0, %v416
  %v418 = vpop.f32.mrf.mxu0
  %v419 = vadd.f32 0.0, %v418
  %420 = vmatmul.bf16.gmra.mxu0 %v240
  %v421 = vpop.f32.mrf.mxu0
  %v422 = vadd.f32 0.0, %v421
  %v423 = vpop.f32.mrf.mxu0
  %v424 = vadd.f32 0.0, %v423
  %425 = vmatmul.bf16.gmra.mxu0 %v241
  %v426 = vpop.f32.mrf.mxu0
  %v427 = vadd.f32 0.0, %v426
  %v428 = vpop.f32.mrf.mxu0
  %v429 = vadd.f32 0.0, %v428
  %430 = vmatmul.bf16.gmra.mxu0 %v242
  %v431 = vpop.f32.mrf.mxu0
  %v432 = vadd.f32 0.0, %v431
  %v433 = vpop.f32.mrf.mxu0
  %v434 = vadd.f32 0.0, %v433
  %435 = vmatmul.bf16.gmra.mxu0 %v243
  %v436 = vpop.f32.mrf.mxu0
  %v437 = vadd.f32 0.0, %v436
  %v438 = vpop.f32.mrf.mxu0
  %v439 = vadd.f32 0.0, %v438
  %440 = vmatmul.bf16.gmra.mxu0 %v244
  %v441 = vpop.f32.mrf.mxu0
  %v442 = vadd.f32 0.0, %v441
  %v443 = vpop.f32.mrf.mxu0
  %v444 = vadd.f32 0.0, %v443
  %445 = vmatmul.bf16.gmra.mxu0 %v245
  %v446 = vpop.f32.mrf.mxu0
  %v447 = vadd.f32 0.0, %v446
  %v448 = vpop.f32.mrf.mxu0
  %v449 = vadd.f32 0.0, %v448
  %450 = vmatmul.bf16.gmra.mxu0 %v246
  %v451 = vpop.f32.mrf.mxu0
  %v452 = vadd.f32 0.0, %v451
  %v453 = vpop.f32.mrf.mxu0
  %v454 = vadd.f32 0.0, %v453
  %455 = vmatmul.bf16.gmra.mxu0 %v247
  %v456 = vpop.f32.mrf.mxu0
  %v457 = vadd.f32 0.0, %v456
  %v458 = vpop.f32.mrf.mxu0
  %v459 = vadd.f32 0.0, %v458
  %460 = vmatmul.bf16.gmra.mxu0 %v248
  %v461 = vpop.f32.mrf.mxu0
  %v462 = vadd.f32 0.0, %v461
  %v463 = vpop.f32.mrf.mxu0
  %v464 = vadd.f32 0.0, %v463
  %465 = vmatmul.bf16.gmra.mxu0 %v249
  %v466 = vpop.f32.mrf.mxu0
  %v467 = vadd.f32 0.0, %v466
  %v468 = vpop.f32.mrf.mxu0
  %v469 = vadd.f32 0.0, %v468
  %470 = vmatmul.bf16.gmra.mxu0 %v250
  %v471 = vpop.f32.mrf.mxu0
  %v472 = vadd.f32 0.0, %v471
  %v473 = vpop.f32.mrf.mxu0
  %v474 = vadd.f32 0.0, %v473
  %475 = vmatmul.bf16.gmra.mxu0 %v251
  %v476 = vpop.f32.mrf.mxu0
  %v477 = vadd.f32 0.0, %v476
  %v478 = vpop.f32.mrf.mxu0
  %v479 = vadd.f32 0.0, %v478
  %480 = vmatmul.bf16.gmra.mxu0 %v252
  %v481 = vpop.f32.mrf.mxu0
  %v482 = vadd.f32 0.0, %v481
  %v483 = vpop.f32.mrf.mxu0
  %v484 = vadd.f32 0.0, %v483
  %485 = vmatmul.bf16.gmra.mxu0 %v253
  %v486 = vpop.f32.mrf.mxu0
  %v487 = vadd.f32 0.0, %v486
  %v488 = vpop.f32.mrf.mxu0
  %v489 = vadd.f32 0.0, %v488
  %490 = vmatmul.bf16.gmra.mxu0 %v254
  %v491 = vpop.f32.mrf.mxu0
  %v492 = vadd.f32 0.0, %v491
  %v493 = vpop.f32.mrf.mxu0
  %v494 = vadd.f32 0.0, %v493
  %495 = vmatmul.bf16.gmra.mxu0 %v255
  %v496 = vpop.f32.mrf.mxu0
  %v497 = vadd.f32 0.0, %v496
  %v498 = vpop.f32.mrf.mxu0
  %v499 = vadd.f32 0.0, %v498
  %500 = vmatmul.bf16.gmra.mxu0 %v256
  %v501 = vpop.f32.mrf.mxu0
  %v502 = vadd.f32 0.0, %v501
  %v503 = vpop.f32.mrf.mxu0
  %v504 = vadd.f32 0.0, %v503
  %505 = vdwg.mxu0
  %vm506 = vcmask 130048
  %v507 = vsel %vm506, %v347, 0.0
  %v508 = vsel %vm506, %v349, 0.0
  %v509 = vadd.f32 %v507, %v508
  %v510 = vsel %vm506, %v352, 0.0
  %v511 = vadd.f32 %v509, %v510
  %v512 = vsel %vm506, %v354, 0.0
  %v513 = vadd.f32 %v511, %v512
  %v514 = vsel %vm506, %v357, 0.0
  %v515 = vadd.f32 %v513, %v514
  %v516 = vsel %vm506, %v359, 0.0
  %v517 = vadd.f32 %v515, %v516
  %v518 = vsel %vm506, %v362, 0.0
  %v519 = vadd.f32 %v517, %v518
  %v520 = vsel %vm506, %v364, 0.0
  %v521 = vadd.f32 %v519, %v520
  %v522 = vsel %vm506, %v367, 0.0
  %v523 = vadd.f32 %v521, %v522
  %v524 = vsel %vm506, %v369, 0.0
  %v525 = vadd.f32 %v523, %v524
  %v526 = vsel %vm506, %v372, 0.0
  %v527 = vadd.f32 %v525, %v526
  %v528 = vsel %vm506, %v374, 0.0
  %v529 = vadd.f32 %v527, %v528
  %v530 = vsel %vm506, %v377, 0.0
  %v531 = vadd.f32 %v529, %v530
  %v532 = vsel %vm506, %v379, 0.0
  %v533 = vadd.f32 %v531, %v532
  %v534 = vsel %vm506, %v382, 0.0
  %v535 = vadd.f32 %v533, %v534
  %v536 = vsel %vm506, %v384, 0.0
  %v537 = vadd.f32 %v535, %v536
  %v538 = vsel %vm506, %v387, 0.0
  %v539 = vadd.f32 %v537, %v538
  %v540 = vsel %vm506, %v389, 0.0
  %v541 = vadd.f32 %v539, %v540
  %v542 = vsel %vm506, %v392, 0.0
  %v543 = vadd.f32 %v541, %v542
  %v544 = vsel %vm506, %v394, 0.0
  %v545 = vadd.f32 %v543, %v544
  %v546 = vsel %vm506, %v397, 0.0
  %v547 = vadd.f32 %v545, %v546
  %v548 = vsel %vm506, %v399, 0.0
  %v549 = vadd.f32 %v547, %v548
  %v550 = vsel %vm506, %v402, 0.0
  %v551 = vadd.f32 %v549, %v550
  %v552 = vsel %vm506, %v404, 0.0
  %v553 = vadd.f32 %v551, %v552
  %v554 = vsel %vm506, %v407, 0.0
  %v555 = vadd.f32 %v553, %v554
  %v556 = vsel %vm506, %v409, 0.0
  %v557 = vadd.f32 %v555, %v556
  %v558 = vsel %vm506, %v412, 0.0
  %v559 = vadd.f32 %v557, %v558
  %v560 = vsel %vm506, %v414, 0.0
  %v561 = vadd.f32 %v559, %v560
  %v562 = vsel %vm506, %v417, 0.0
  %v563 = vadd.f32 %v561, %v562
  %v564 = vsel %vm506, %v419, 0.0
  %v565 = vadd.f32 %v563, %v564
  %v566 = vsel %vm506, %v422, 0.0
  %v567 = vadd.f32 %v565, %v566
  %v568 = vsel %vm506, %v424, 0.0
  %v569 = vadd.f32 %v567, %v568
  %v570 = vsel %vm506, %v427, 0.0
  %v571 = vadd.f32 %v569, %v570
  %v572 = vsel %vm506, %v429, 0.0
  %v573 = vadd.f32 %v571, %v572
  %v574 = vsel %vm506, %v432, 0.0
  %v575 = vadd.f32 %v573, %v574
  %v576 = vsel %vm506, %v434, 0.0
  %v577 = vadd.f32 %v575, %v576
  %v578 = vsel %vm506, %v437, 0.0
  %v579 = vadd.f32 %v577, %v578
  %v580 = vsel %vm506, %v439, 0.0
  %v581 = vadd.f32 %v579, %v580
  %v582 = vsel %vm506, %v442, 0.0
  %v583 = vadd.f32 %v581, %v582
  %v584 = vsel %vm506, %v444, 0.0
  %v585 = vadd.f32 %v583, %v584
  %v586 = vsel %vm506, %v447, 0.0
  %v587 = vadd.f32 %v585, %v586
  %v588 = vsel %vm506, %v449, 0.0
  %v589 = vadd.f32 %v587, %v588
  %v590 = vsel %vm506, %v452, 0.0
  %v591 = vadd.f32 %v589, %v590
  %v592 = vsel %vm506, %v454, 0.0
  %v593 = vadd.f32 %v591, %v592
  %v594 = vsel %vm506, %v457, 0.0
  %v595 = vadd.f32 %v593, %v594
  %v596 = vsel %vm506, %v459, 0.0
  %v597 = vadd.f32 %v595, %v596
  %v598 = vsel %vm506, %v462, 0.0
  %v599 = vadd.f32 %v597, %v598
  %v600 = vsel %vm506, %v464, 0.0
  %v601 = vadd.f32 %v599, %v600
  %v602 = vsel %vm506, %v467, 0.0
  %v603 = vadd.f32 %v601, %v602
  %v604 = vsel %vm506, %v469, 0.0
  %v605 = vadd.f32 %v603, %v604
  %v606 = vsel %vm506, %v472, 0.0
  %v607 = vadd.f32 %v605, %v606
  %v608 = vsel %vm506, %v474, 0.0
  %v609 = vadd.f32 %v607, %v608
  %v610 = vsel %vm506, %v477, 0.0
  %v611 = vadd.f32 %v609, %v610
  %v612 = vsel %vm506, %v479, 0.0
  %v613 = vadd.f32 %v611, %v612
  %v614 = vsel %vm506, %v482, 0.0
  %v615 = vadd.f32 %v613, %v614
  %v616 = vsel %vm506, %v484, 0.0
  %v617 = vadd.f32 %v615, %v616
  %v618 = vsel %vm506, %v487, 0.0
  %v619 = vadd.f32 %v617, %v618
  %v620 = vsel %vm506, %v489, 0.0
  %v621 = vadd.f32 %v619, %v620
  %v622 = vsel %vm506, %v492, 0.0
  %v623 = vadd.f32 %v621, %v622
  %v624 = vsel %vm506, %v494, 0.0
  %v625 = vadd.f32 %v623, %v624
  %v626 = vsel %vm506, %v497, 0.0
  %v627 = vadd.f32 %v625, %v626
  %v628 = vsel %vm506, %v499, 0.0
  %v629 = vadd.f32 %v627, %v628
  %v630 = vsel %vm506, %v502, 0.0
  %v631 = vadd.f32 %v629, %v630
  %v632 = vsel %vm506, %v504, 0.0
  %v633 = vadd.f32 %v631, %v632
  %v634 = vrot.slane %v633, 4
  %v635 = vadd.f32 %v633, %v634
  %v636 = vrot.slane %v635, 2
  %v637 = vadd.f32 %v635, %v636
  %v638 = vrot.slane %v637, 1
  %v639 = vadd.f32 %v637, %v638
  %v640 = vmul.f32 %v639, 0.001953125
  %v641 = vsub.f32 %v347, %v640
  %v642 = vsub.f32 %v349, %v640
  %v643 = vsub.f32 %v352, %v640
  %v644 = vsub.f32 %v354, %v640
  %v645 = vsub.f32 %v357, %v640
  %v646 = vsub.f32 %v359, %v640
  %v647 = vsub.f32 %v362, %v640
  %v648 = vsub.f32 %v364, %v640
  %v649 = vsub.f32 %v367, %v640
  %v650 = vsub.f32 %v369, %v640
  %v651 = vsub.f32 %v372, %v640
  %v652 = vsub.f32 %v374, %v640
  %v653 = vsub.f32 %v377, %v640
  %v654 = vsub.f32 %v379, %v640
  %v655 = vsub.f32 %v382, %v640
  %v656 = vsub.f32 %v384, %v640
  %v657 = vsub.f32 %v387, %v640
  %v658 = vsub.f32 %v389, %v640
  %v659 = vsub.f32 %v392, %v640
  %v660 = vsub.f32 %v394, %v640
  %v661 = vsub.f32 %v397, %v640
  %v662 = vsub.f32 %v399, %v640
  %v663 = vsub.f32 %v402, %v640
  %v664 = vsub.f32 %v404, %v640
  %v665 = vsub.f32 %v407, %v640
  %v666 = vsub.f32 %v409, %v640
  %v667 = vsub.f32 %v412, %v640
  %v668 = vsub.f32 %v414, %v640
  %v669 = vsub.f32 %v417, %v640
  %v670 = vsub.f32 %v419, %v640
  %v671 = vsub.f32 %v422, %v640
  %v672 = vsub.f32 %v424, %v640
  %v673 = vsub.f32 %v427, %v640
  %v674 = vsub.f32 %v429, %v640
  %v675 = vsub.f32 %v432, %v640
  %v676 = vsub.f32 %v434, %v640
  %v677 = vsub.f32 %v437, %v640
  %v678 = vsub.f32 %v439, %v640
  %v679 = vsub.f32 %v442, %v640
  %v680 = vsub.f32 %v444, %v640
  %v681 = vsub.f32 %v447, %v640
  %v682 = vsub.f32 %v449, %v640
  %v683 = vsub.f32 %v452, %v640
  %v684 = vsub.f32 %v454, %v640
  %v685 = vsub.f32 %v457, %v640
  %v686 = vsub.f32 %v459, %v640
  %v687 = vsub.f32 %v462, %v640
  %v688 = vsub.f32 %v464, %v640
  %v689 = vsub.f32 %v467, %v640
  %v690 = vsub.f32 %v469, %v640
  %v691 = vsub.f32 %v472, %v640
  %v692 = vsub.f32 %v474, %v640
  %v693 = vsub.f32 %v477, %v640
  %v694 = vsub.f32 %v479, %v640
  %v695 = vsub.f32 %v482, %v640
  %v696 = vsub.f32 %v484, %v640
  %v697 = vsub.f32 %v487, %v640
  %v698 = vsub.f32 %v489, %v640
  %v699 = vsub.f32 %v492, %v640
  %v700 = vsub.f32 %v494, %v640
  %v701 = vsub.f32 %v497, %v640
  %v702 = vsub.f32 %v499, %v640
  %v703 = vsub.f32 %v502, %v640
  %v704 = vsub.f32 %v504, %v640
  %v705 = vmul.f32 %v641, %v641
  %v706 = vmul.f32 %v642, %v642
  %v707 = vmul.f32 %v643, %v643
  %v708 = vmul.f32 %v644, %v644
  %v709 = vmul.f32 %v645, %v645
  %v710 = vmul.f32 %v646, %v646
  %v711 = vmul.f32 %v647, %v647
  %v712 = vmul.f32 %v648, %v648
  %v713 = vmul.f32 %v649, %v649
  %v714 = vmul.f32 %v650, %v650
  %v715 = vmul.f32 %v651, %v651
  %v716 = vmul.f32 %v652, %v652
  %v717 = vmul.f32 %v653, %v653
  %v718 = vmul.f32 %v654, %v654
  %v719 = vmul.f32 %v655, %v655
  %v720 = vmul.f32 %v656, %v656
  %v721 = vmul.f32 %v657, %v657
  %v722 = vmul.f32 %v658, %v658
  %v723 = vmul.f32 %v659, %v659
  %v724 = vmul.f32 %v660, %v660
  %v725 = vmul.f32 %v661, %v661
  %v726 = vmul.f32 %v662, %v662
  %v727 = vmul.f32 %v663, %v663
  %v728 = vmul.f32 %v664, %v664
  %v729 = vmul.f32 %v665, %v665
  %v730 = vmul.f32 %v666, %v666
  %v731 = vmul.f32 %v667, %v667
  %v732 = vmul.f32 %v668, %v668
  %v733 = vmul.f32 %v669, %v669
  %v734 = vmul.f32 %v670, %v670
  %v735 = vmul.f32 %v671, %v671
  %v736 = vmul.f32 %v672, %v672
  %v737 = vmul.f32 %v673, %v673
  %v738 = vmul.f32 %v674, %v674
  %v739 = vmul.f32 %v675, %v675
  %v740 = vmul.f32 %v676, %v676
  %v741 = vmul.f32 %v677, %v677
  %v742 = vmul.f32 %v678, %v678
  %v743 = vmul.f32 %v679, %v679
  %v744 = vmul.f32 %v680, %v680
  %v745 = vmul.f32 %v681, %v681
  %v746 = vmul.f32 %v682, %v682
  %v747 = vmul.f32 %v683, %v683
  %v748 = vmul.f32 %v684, %v684
  %v749 = vmul.f32 %v685, %v685
  %v750 = vmul.f32 %v686, %v686
  %v751 = vmul.f32 %v687, %v687
  %v752 = vmul.f32 %v688, %v688
  %v753 = vmul.f32 %v689, %v689
  %v754 = vmul.f32 %v690, %v690
  %v755 = vmul.f32 %v691, %v691
  %v756 = vmul.f32 %v692, %v692
  %v757 = vmul.f32 %v693, %v693
  %v758 = vmul.f32 %v694, %v694
  %v759 = vmul.f32 %v695, %v695
  %v760 = vmul.f32 %v696, %v696
  %v761 = vmul.f32 %v697, %v697
  %v762 = vmul.f32 %v698, %v698
  %v763 = vmul.f32 %v699, %v699
  %v764 = vmul.f32 %v700, %v700
  %v765 = vmul.f32 %v701, %v701
  %v766 = vmul.f32 %v702, %v702
  %v767 = vmul.f32 %v703, %v703
  %v768 = vmul.f32 %v704, %v704
  %v769 = vsel %vm506, %v705, 0.0
  %v770 = vsel %vm506, %v706, 0.0
  %v771 = vadd.f32 %v769, %v770
  %v772 = vsel %vm506, %v707, 0.0
  %v773 = vadd.f32 %v771, %v772
  %v774 = vsel %vm506, %v708, 0.0
  %v775 = vadd.f32 %v773, %v774
  %v776 = vsel %vm506, %v709, 0.0
  %v777 = vadd.f32 %v775, %v776
  %v778 = vsel %vm506, %v710, 0.0
  %v779 = vadd.f32 %v777, %v778
  %v780 = vsel %vm506, %v711, 0.0
  %v781 = vadd.f32 %v779, %v780
  %v782 = vsel %vm506, %v712, 0.0
  %v783 = vadd.f32 %v781, %v782
  %v784 = vsel %vm506, %v713, 0.0
  %v785 = vadd.f32 %v783, %v784
  %v786 = vsel %vm506, %v714, 0.0
  %v787 = vadd.f32 %v785, %v786
  %v788 = vsel %vm506, %v715, 0.0
  %v789 = vadd.f32 %v787, %v788
  %v790 = vsel %vm506, %v716, 0.0
  %v791 = vadd.f32 %v789, %v790
  %v792 = vsel %vm506, %v717, 0.0
  %v793 = vadd.f32 %v791, %v792
  %v794 = vsel %vm506, %v718, 0.0
  %v795 = vadd.f32 %v793, %v794
  %v796 = vsel %vm506, %v719, 0.0
  %v797 = vadd.f32 %v795, %v796
  %v798 = vsel %vm506, %v720, 0.0
  %v799 = vadd.f32 %v797, %v798
  %v800 = vsel %vm506, %v721, 0.0
  %v801 = vadd.f32 %v799, %v800
  %v802 = vsel %vm506, %v722, 0.0
  %v803 = vadd.f32 %v801, %v802
  %v804 = vsel %vm506, %v723, 0.0
  %v805 = vadd.f32 %v803, %v804
  %v806 = vsel %vm506, %v724, 0.0
  %v807 = vadd.f32 %v805, %v806
  %v808 = vsel %vm506, %v725, 0.0
  %v809 = vadd.f32 %v807, %v808
  %v810 = vsel %vm506, %v726, 0.0
  %v811 = vadd.f32 %v809, %v810
  %v812 = vsel %vm506, %v727, 0.0
  %v813 = vadd.f32 %v811, %v812
  %v814 = vsel %vm506, %v728, 0.0
  %v815 = vadd.f32 %v813, %v814
  %v816 = vsel %vm506, %v729, 0.0
  %v817 = vadd.f32 %v815, %v816
  %v818 = vsel %vm506, %v730, 0.0
  %v819 = vadd.f32 %v817, %v818
  %v820 = vsel %vm506, %v731, 0.0
  %v821 = vadd.f32 %v819, %v820
  %v822 = vsel %vm506, %v732, 0.0
  %v823 = vadd.f32 %v821, %v822
  %v824 = vsel %vm506, %v733, 0.0
  %v825 = vadd.f32 %v823, %v824
  %v826 = vsel %vm506, %v734, 0.0
  %v827 = vadd.f32 %v825, %v826
  %v828 = vsel %vm506, %v735, 0.0
  %v829 = vadd.f32 %v827, %v828
  %v830 = vsel %vm506, %v736, 0.0
  %v831 = vadd.f32 %v829, %v830
  %v832 = vsel %vm506, %v737, 0.0
  %v833 = vadd.f32 %v831, %v832
  %v834 = vsel %vm506, %v738, 0.0
  %v835 = vadd.f32 %v833, %v834
  %v836 = vsel %vm506, %v739, 0.0
  %v837 = vadd.f32 %v835, %v836
  %v838 = vsel %vm506, %v740, 0.0
  %v839 = vadd.f32 %v837, %v838
  %v840 = vsel %vm506, %v741, 0.0
  %v841 = vadd.f32 %v839, %v840
  %v842 = vsel %vm506, %v742, 0.0
  %v843 = vadd.f32 %v841, %v842
  %v844 = vsel %vm506, %v743, 0.0
  %v845 = vadd.f32 %v843, %v844
  %v846 = vsel %vm506, %v744, 0.0
  %v847 = vadd.f32 %v845, %v846
  %v848 = vsel %vm506, %v745, 0.0
  %v849 = vadd.f32 %v847, %v848
  %v850 = vsel %vm506, %v746, 0.0
  %v851 = vadd.f32 %v849, %v850
  %v852 = vsel %vm506, %v747, 0.0
  %v853 = vadd.f32 %v851, %v852
  %v854 = vsel %vm506, %v748, 0.0
  %v855 = vadd.f32 %v853, %v854
  %v856 = vsel %vm506, %v749, 0.0
  %v857 = vadd.f32 %v855, %v856
  %v858 = vsel %vm506, %v750, 0.0
  %v859 = vadd.f32 %v857, %v858
  %v860 = vsel %vm506, %v751, 0.0
  %v861 = vadd.f32 %v859, %v860
  %v862 = vsel %vm506, %v752, 0.0
  %v863 = vadd.f32 %v861, %v862
  %v864 = vsel %vm506, %v753, 0.0
  %v865 = vadd.f32 %v863, %v864
  %v866 = vsel %vm506, %v754, 0.0
  %v867 = vadd.f32 %v865, %v866
  %v868 = vsel %vm506, %v755, 0.0
  %v869 = vadd.f32 %v867, %v868
  %v870 = vsel %vm506, %v756, 0.0
  %v871 = vadd.f32 %v869, %v870
  %v872 = vsel %vm506, %v757, 0.0
  %v873 = vadd.f32 %v871, %v872
  %v874 = vsel %vm506, %v758, 0.0
  %v875 = vadd.f32 %v873, %v874
  %v876 = vsel %vm506, %v759, 0.0
  %v877 = vadd.f32 %v875, %v876
  %v878 = vsel %vm506, %v760, 0.0
  %v879 = vadd.f32 %v877, %v878
  %v880 = vsel %vm506, %v761, 0.0
  %v881 = vadd.f32 %v879, %v880
  %v882 = vsel %vm506, %v762, 0.0
  %v883 = vadd.f32 %v881, %v882
  %v884 = vsel %vm506, %v763, 0.0
  %v885 = vadd.f32 %v883, %v884
  %v886 = vsel %vm506, %v764, 0.0
  %v887 = vadd.f32 %v885, %v886
  %v888 = vsel %vm506, %v765, 0.0
  %v889 = vadd.f32 %v887, %v888
  %v890 = vsel %vm506, %v766, 0.0
  %v891 = vadd.f32 %v889, %v890
  %v892 = vsel %vm506, %v767, 0.0
  %v893 = vadd.f32 %v891, %v892
  %v894 = vsel %vm506, %v768, 0.0
  %v895 = vadd.f32 %v893, %v894
  %v896 = vrot.slane %v895, 4
  %v897 = vadd.f32 %v895, %v896
  %v898 = vrot.slane %v897, 2
  %v899 = vadd.f32 %v897, %v898
  %v900 = vrot.slane %v899, 1
  %v901 = vadd.f32 %v899, %v900
  %v902 = vmul.f32 %v901, 0.001953125
  %v903 = vld [vmem:[%s2] sm:$0x1]
  %v904 = vadd.f32 %v902, 1e-05
  %v905 = vrsqrt.pop %v904
  %v906 = vmul.f32 %v905, %v904
  %v907 = vmul.f32 %v906, %v905
  %v908 = vmul.f32 0.5, %v907
  %v909 = vsub.f32 1.5, %v908
  %v910 = vmul.f32 %v905, %v909
  %vm911 = vweird.f32 %v904
  %vm912 = vweird.f32 %v905
  %vm913 = vmor %vm911, %vm912
  %v914 = vsel %vm913, %v905, %v910
  %v915 = vmul.f32 %v903, %v914
  %v917 = vperm.slane %v915, 0
  %v919 = vmul.f32 %v641, %v917
  %v920 = vmul.f32 %v642, %v917
  %v921 = vmul.f32 %v643, %v917
  %v922 = vmul.f32 %v644, %v917
  %v923 = vmul.f32 %v645, %v917
  %v924 = vmul.f32 %v646, %v917
  %v925 = vmul.f32 %v647, %v917
  %v926 = vmul.f32 %v648, %v917
  %v927 = vmul.f32 %v649, %v917
  %v928 = vmul.f32 %v650, %v917
  %v929 = vmul.f32 %v651, %v917
  %v930 = vmul.f32 %v652, %v917
  %v931 = vmul.f32 %v653, %v917
  %v932 = vmul.f32 %v654, %v917
  %v933 = vmul.f32 %v655, %v917
  %v934 = vmul.f32 %v656, %v917
  %v935 = vmul.f32 %v657, %v917
  %v936 = vmul.f32 %v658, %v917
  %v937 = vmul.f32 %v659, %v917
  %v938 = vmul.f32 %v660, %v917
  %v939 = vmul.f32 %v661, %v917
  %v940 = vmul.f32 %v662, %v917
  %v941 = vmul.f32 %v663, %v917
  %v942 = vmul.f32 %v664, %v917
  %v943 = vmul.f32 %v665, %v917
  %v944 = vmul.f32 %v666, %v917
  %v945 = vmul.f32 %v667, %v917
  %v946 = vmul.f32 %v668, %v917
  %v947 = vmul.f32 %v669, %v917
  %v948 = vmul.f32 %v670, %v917
  %v949 = vmul.f32 %v671, %v917
  %v950 = vmul.f32 %v672, %v917
  %v951 = vmul.f32 %v673, %v917
  %v952 = vmul.f32 %v674, %v917
  %v953 = vmul.f32 %v675, %v917
  %v954 = vmul.f32 %v676, %v917
  %v955 = vmul.f32 %v677, %v917
  %v956 = vmul.f32 %v678, %v917
  %v957 = vmul.f32 %v679, %v917
  %v958 = vmul.f32 %v680, %v917
  %v959 = vmul.f32 %v681, %v917
  %v960 = vmul.f32 %v682, %v917
  %v961 = vmul.f32 %v683, %v917
  %v962 = vmul.f32 %v684, %v917
  %v963 = vmul.f32 %v685, %v917
  %v964 = vmul.f32 %v686, %v917
  %v965 = vmul.f32 %v687, %v917
  %v966 = vmul.f32 %v688, %v917
  %v967 = vmul.f32 %v689, %v917
  %v968 = vmul.f32 %v690, %v917
  %v969 = vmul.f32 %v691, %v917
  %v970 = vmul.f32 %v692, %v917
  %v971 = vmul.f32 %v693, %v917
  %v972 = vmul.f32 %v694, %v917
  %v973 = vmul.f32 %v695, %v917
  %v974 = vmul.f32 %v696, %v917
  %v975 = vmul.f32 %v697, %v917
  %v976 = vmul.f32 %v698, %v917
  %v977 = vmul.f32 %v699, %v917
  %v978 = vmul.f32 %v700, %v917
  %v979 = vmul.f32 %v701, %v917
  %v980 = vmul.f32 %v702, %v917
  %v981 = vmul.f32 %v703, %v917
  %v982 = vmul.f32 %v704, %v917
  %v983 = vld [vmem:[%s3] sm:$0x1]
  %v985 = vperm.slane %v983, 0
  %v987 = vadd.f32 %v919, %v985
  %v988 = vadd.f32 %v920, %v985
  %v989 = vadd.f32 %v921, %v985
  %v990 = vadd.f32 %v922, %v985
  %v991 = vadd.f32 %v923, %v985
  %v992 = vadd.f32 %v924, %v985
  %v993 = vadd.f32 %v925, %v985
  %v994 = vadd.f32 %v926, %v985
  %v995 = vadd.f32 %v927, %v985
  %v996 = vadd.f32 %v928, %v985
  %v997 = vadd.f32 %v929, %v985
  %v998 = vadd.f32 %v930, %v985
  %v999 = vadd.f32 %v931, %v985
  %v1000 = vadd.f32 %v932, %v985
  %v1001 = vadd.f32 %v933, %v985
  %v1002 = vadd.f32 %v934, %v985
  %v1003 = vadd.f32 %v935, %v985
  %v1004 = vadd.f32 %v936, %v985
  %v1005 = vadd.f32 %v937, %v985
  %v1006 = vadd.f32 %v938, %v985
  %v1007 = vadd.f32 %v939, %v985
  %v1008 = vadd.f32 %v940, %v985
  %v1009 = vadd.f32 %v941, %v985
  %v1010 = vadd.f32 %v942, %v985
  %v1011 = vadd.f32 %v943, %v985
  %v1012 = vadd.f32 %v944, %v985
  %v1013 = vadd.f32 %v945, %v985
  %v1014 = vadd.f32 %v946, %v985
  %v1015 = vadd.f32 %v947, %v985
  %v1016 = vadd.f32 %v948, %v985
  %v1017 = vadd.f32 %v949, %v985
  %v1018 = vadd.f32 %v950, %v985
  %v1019 = vadd.f32 %v951, %v985
  %v1020 = vadd.f32 %v952, %v985
  %v1021 = vadd.f32 %v953, %v985
  %v1022 = vadd.f32 %v954, %v985
  %v1023 = vadd.f32 %v955, %v985
  %v1024 = vadd.f32 %v956, %v985
  %v1025 = vadd.f32 %v957, %v985
  %v1026 = vadd.f32 %v958, %v985
  %v1027 = vadd.f32 %v959, %v985
  %v1028 = vadd.f32 %v960, %v985
  %v1029 = vadd.f32 %v961, %v985
  %v1030 = vadd.f32 %v962, %v985
  %v1031 = vadd.f32 %v963, %v985
  %v1032 = vadd.f32 %v964, %v985
  %v1033 = vadd.f32 %v965, %v985
  %v1034 = vadd.f32 %v966, %v985
  %v1035 = vadd.f32 %v967, %v985
  %v1036 = vadd.f32 %v968, %v985
  %v1037 = vadd.f32 %v969, %v985
  %v1038 = vadd.f32 %v970, %v985
  %v1039 = vadd.f32 %v971, %v985
  %v1040 = vadd.f32 %v972, %v985
  %v1041 = vadd.f32 %v973, %v985
  %v1042 = vadd.f32 %v974, %v985
  %v1043 = vadd.f32 %v975, %v985
  %v1044 = vadd.f32 %v976, %v985
  %v1045 = vadd.f32 %v977, %v985
  %v1046 = vadd.f32 %v978, %v985
  %v1047 = vadd.f32 %v979, %v985
  %v1048 = vadd.f32 %v980, %v985
  %v1049 = vadd.f32 %v981, %v985
  %v1050 = vadd.f32 %v982, %v985
  %vm1051 = vcmp.gt.f32.partialorder %v987, 0.0
  %vm1052 = vcmp.gt.f32.partialorder %v988, 0.0
  %vm1053 = vcmp.gt.f32.partialorder %v989, 0.0
  %vm1054 = vcmp.gt.f32.partialorder %v990, 0.0
  %vm1055 = vcmp.gt.f32.partialorder %v991, 0.0
  %vm1056 = vcmp.gt.f32.partialorder %v992, 0.0
  %vm1057 = vcmp.gt.f32.partialorder %v993, 0.0
  %vm1058 = vcmp.gt.f32.partialorder %v994, 0.0
  %vm1059 = vcmp.gt.f32.partialorder %v995, 0.0
  %vm1060 = vcmp.gt.f32.partialorder %v996, 0.0
  %vm1061 = vcmp.gt.f32.partialorder %v997, 0.0
  %vm1062 = vcmp.gt.f32.partialorder %v998, 0.0
  %vm1063 = vcmp.gt.f32.partialorder %v999, 0.0
  %vm1064 = vcmp.gt.f32.partialorder %v1000, 0.0
  %vm1065 = vcmp.gt.f32.partialorder %v1001, 0.0
  %vm1066 = vcmp.gt.f32.partialorder %v1002, 0.0
  %vm1067 = vcmp.gt.f32.partialorder %v1003, 0.0
  %vm1068 = vcmp.gt.f32.partialorder %v1004, 0.0
  %vm1069 = vcmp.gt.f32.partialorder %v1005, 0.0
  %vm1070 = vcmp.gt.f32.partialorder %v1006, 0.0
  %vm1071 = vcmp.gt.f32.partialorder %v1007, 0.0
  %vm1072 = vcmp.gt.f32.partialorder %v1008, 0.0
  %vm1073 = vcmp.gt.f32.partialorder %v1009, 0.0
  %vm1074 = vcmp.gt.f32.partialorder %v1010, 0.0
  %vm1075 = vcmp.gt.f32.partialorder %v1011, 0.0
  %vm1076 = vcmp.gt.f32.partialorder %v1012, 0.0
  %vm1077 = vcmp.gt.f32.partialorder %v1013, 0.0
  %vm1078 = vcmp.gt.f32.partialorder %v1014, 0.0
  %vm1079 = vcmp.gt.f32.partialorder %v1015, 0.0
  %vm1080 = vcmp.gt.f32.partialorder %v1016, 0.0
  %vm1081 = vcmp.gt.f32.partialorder %v1017, 0.0
  %vm1082 = vcmp.gt.f32.partialorder %v1018, 0.0
  %vm1083 = vcmp.gt.f32.partialorder %v1019, 0.0
  %vm1084 = vcmp.gt.f32.partialorder %v1020, 0.0
  %vm1085 = vcmp.gt.f32.partialorder %v1021, 0.0
  %vm1086 = vcmp.gt.f32.partialorder %v1022, 0.0
  %vm1087 = vcmp.gt.f32.partialorder %v1023, 0.0
  %vm1088 = vcmp.gt.f32.partialorder %v1024, 0.0
  %vm1089 = vcmp.gt.f32.partialorder %v1025, 0.0
  %vm1090 = vcmp.gt.f32.partialorder %v1026, 0.0
  %vm1091 = vcmp.gt.f32.partialorder %v1027, 0.0
  %vm1092 = vcmp.gt.f32.partialorder %v1028, 0.0
  %vm1093 = vcmp.gt.f32.partialorder %v1029, 0.0
  %vm1094 = vcmp.gt.f32.partialorder %v1030, 0.0
  %vm1095 = vcmp.gt.f32.partialorder %v1031, 0.0
  %vm1096 = vcmp.gt.f32.partialorder %v1032, 0.0
  %vm1097 = vcmp.gt.f32.partialorder %v1033, 0.0
  %vm1098 = vcmp.gt.f32.partialorder %v1034, 0.0
  %vm1099 = vcmp.gt.f32.partialorder %v1035, 0.0
  %vm1100 = vcmp.gt.f32.partialorder %v1036, 0.0
  %vm1101 = vcmp.gt.f32.partialorder %v1037, 0.0
  %vm1102 = vcmp.gt.f32.partialorder %v1038, 0.0
  %vm1103 = vcmp.gt.f32.partialorder %v1039, 0.0
  %vm1104 = vcmp.gt.f32.partialorder %v1040, 0.0
  %vm1105 = vcmp.gt.f32.partialorder %v1041, 0.0
  %vm1106 = vcmp.gt.f32.partialorder %v1042, 0.0
  %vm1107 = vcmp.gt.f32.partialorder %v1043, 0.0
  %vm1108 = vcmp.gt.f32.partialorder %v1044, 0.0
  %vm1109 = vcmp.gt.f32.partialorder %v1045, 0.0
  %vm1110 = vcmp.gt.f32.partialorder %v1046, 0.0
  %vm1111 = vcmp.gt.f32.partialorder %v1047, 0.0
  %vm1112 = vcmp.gt.f32.partialorder %v1048, 0.0
  %vm1113 = vcmp.gt.f32.partialorder %v1049, 0.0
  %vm1114 = vcmp.gt.f32.partialorder %v1050, 0.0
  %v1115 = vmul.f32 %v987, 0.2
  %v1116 = vmul.f32 %v988, 0.2
  %v1117 = vmul.f32 %v989, 0.2
  %v1118 = vmul.f32 %v990, 0.2
  %v1119 = vmul.f32 %v991, 0.2
  %v1120 = vmul.f32 %v992, 0.2
  %v1121 = vmul.f32 %v993, 0.2
  %v1122 = vmul.f32 %v994, 0.2
  %v1123 = vmul.f32 %v995, 0.2
  %v1124 = vmul.f32 %v996, 0.2
  %v1125 = vmul.f32 %v997, 0.2
  %v1126 = vmul.f32 %v998, 0.2
  %v1127 = vmul.f32 %v999, 0.2
  %v1128 = vmul.f32 %v1000, 0.2
  %v1129 = vmul.f32 %v1001, 0.2
  %v1130 = vmul.f32 %v1002, 0.2
  %v1131 = vmul.f32 %v1003, 0.2
  %v1132 = vmul.f32 %v1004, 0.2
  %v1133 = vmul.f32 %v1005, 0.2
  %v1134 = vmul.f32 %v1006, 0.2
  %v1135 = vmul.f32 %v1007, 0.2
  %v1136 = vmul.f32 %v1008, 0.2
  %v1137 = vmul.f32 %v1009, 0.2
  %v1138 = vmul.f32 %v1010, 0.2
  %v1139 = vmul.f32 %v1011, 0.2
  %v1140 = vmul.f32 %v1012, 0.2
  %v1141 = vmul.f32 %v1013, 0.2
  %v1142 = vmul.f32 %v1014, 0.2
  %v1143 = vmul.f32 %v1015, 0.2
  %v1144 = vmul.f32 %v1016, 0.2
  %v1145 = vmul.f32 %v1017, 0.2
  %v1146 = vmul.f32 %v1018, 0.2
  %v1147 = vmul.f32 %v1019, 0.2
  %v1148 = vmul.f32 %v1020, 0.2
  %v1149 = vmul.f32 %v1021, 0.2
  %v1150 = vmul.f32 %v1022, 0.2
  %v1151 = vmul.f32 %v1023, 0.2
  %v1152 = vmul.f32 %v1024, 0.2
  %v1153 = vmul.f32 %v1025, 0.2
  %v1154 = vmul.f32 %v1026, 0.2
  %v1155 = vmul.f32 %v1027, 0.2
  %v1156 = vmul.f32 %v1028, 0.2
  %v1157 = vmul.f32 %v1029, 0.2
  %v1158 = vmul.f32 %v1030, 0.2
  %v1159 = vmul.f32 %v1031, 0.2
  %v1160 = vmul.f32 %v1032, 0.2
  %v1161 = vmul.f32 %v1033, 0.2
  %v1162 = vmul.f32 %v1034, 0.2
  %v1163 = vmul.f32 %v1035, 0.2
  %v1164 = vmul.f32 %v1036, 0.2
  %v1165 = vmul.f32 %v1037, 0.2
  %v1166 = vmul.f32 %v1038, 0.2
  %v1167 = vmul.f32 %v1039, 0.2
  %v1168 = vmul.f32 %v1040, 0.2
  %v1169 = vmul.f32 %v1041, 0.2
  %v1170 = vmul.f32 %v1042, 0.2
  %v1171 = vmul.f32 %v1043, 0.2
  %v1172 = vmul.f32 %v1044, 0.2
  %v1173 = vmul.f32 %v1045, 0.2
  %v1174 = vmul.f32 %v1046, 0.2
  %v1175 = vmul.f32 %v1047, 0.2
  %v1176 = vmul.f32 %v1048, 0.2
  %v1177 = vmul.f32 %v1049, 0.2
  %v1178 = vmul.f32 %v1050, 0.2
  %v1179 = vsel %vm1051, %v987, %v1115
  %v1180 = vsel %vm1052, %v988, %v1116
  %v1181 = vsel %vm1053, %v989, %v1117
  %v1182 = vsel %vm1054, %v990, %v1118
  %v1183 = vsel %vm1055, %v991, %v1119
  %v1184 = vsel %vm1056, %v992, %v1120
  %v1185 = vsel %vm1057, %v993, %v1121
  %v1186 = vsel %vm1058, %v994, %v1122
  %v1187 = vsel %vm1059, %v995, %v1123
  %v1188 = vsel %vm1060, %v996, %v1124
  %v1189 = vsel %vm1061, %v997, %v1125
  %v1190 = vsel %vm1062, %v998, %v1126
  %v1191 = vsel %vm1063, %v999, %v1127
  %v1192 = vsel %vm1064, %v1000, %v1128
  %v1193 = vsel %vm1065, %v1001, %v1129
  %v1194 = vsel %vm1066, %v1002, %v1130
  %v1195 = vsel %vm1067, %v1003, %v1131
  %v1196 = vsel %vm1068, %v1004, %v1132
  %v1197 = vsel %vm1069, %v1005, %v1133
  %v1198 = vsel %vm1070, %v1006, %v1134
  %v1199 = vsel %vm1071, %v1007, %v1135
  %v1200 = vsel %vm1072, %v1008, %v1136
  %v1201 = vsel %vm1073, %v1009, %v1137
  %v1202 = vsel %vm1074, %v1010, %v1138
  %v1203 = vsel %vm1075, %v1011, %v1139
  %v1204 = vsel %vm1076, %v1012, %v1140
  %v1205 = vsel %vm1077, %v1013, %v1141
  %v1206 = vsel %vm1078, %v1014, %v1142
  %v1207 = vsel %vm1079, %v1015, %v1143
  %v1208 = vsel %vm1080, %v1016, %v1144
  %v1209 = vsel %vm1081, %v1017, %v1145
  %v1210 = vsel %vm1082, %v1018, %v1146
  %v1211 = vsel %vm1083, %v1019, %v1147
  %v1212 = vsel %vm1084, %v1020, %v1148
  %v1213 = vsel %vm1085, %v1021, %v1149
  %v1214 = vsel %vm1086, %v1022, %v1150
  %v1215 = vsel %vm1087, %v1023, %v1151
  %v1216 = vsel %vm1088, %v1024, %v1152
  %v1217 = vsel %vm1089, %v1025, %v1153
  %v1218 = vsel %vm1090, %v1026, %v1154
  %v1219 = vsel %vm1091, %v1027, %v1155
  %v1220 = vsel %vm1092, %v1028, %v1156
  %v1221 = vsel %vm1093, %v1029, %v1157
  %v1222 = vsel %vm1094, %v1030, %v1158
  %v1223 = vsel %vm1095, %v1031, %v1159
  %v1224 = vsel %vm1096, %v1032, %v1160
  %v1225 = vsel %vm1097, %v1033, %v1161
  %v1226 = vsel %vm1098, %v1034, %v1162
  %v1227 = vsel %vm1099, %v1035, %v1163
  %v1228 = vsel %vm1100, %v1036, %v1164
  %v1229 = vsel %vm1101, %v1037, %v1165
  %v1230 = vsel %vm1102, %v1038, %v1166
  %v1231 = vsel %vm1103, %v1039, %v1167
  %v1232 = vsel %vm1104, %v1040, %v1168
  %v1233 = vsel %vm1105, %v1041, %v1169
  %v1234 = vsel %vm1106, %v1042, %v1170
  %v1235 = vsel %vm1107, %v1043, %v1171
  %v1236 = vsel %vm1108, %v1044, %v1172
  %v1237 = vsel %vm1109, %v1045, %v1173
  %v1238 = vsel %vm1110, %v1046, %v1174
  %v1239 = vsel %vm1111, %v1047, %v1175
  %v1240 = vsel %vm1112, %v1048, %v1176
  %v1241 = vsel %vm1113, %v1049, %v1177
  %v1242 = vsel %vm1114, %v1050, %v1178
  %v1243 = vpack.c.bf16 %v1179, %v1179
  %v1244 = vpack.c.bf16 %v1180, %v1180
  %v1245 = vpack.c.bf16 %v1181, %v1181
  %v1246 = vpack.c.bf16 %v1182, %v1182
  %v1247 = vpack.c.bf16 %v1183, %v1183
  %v1248 = vpack.c.bf16 %v1184, %v1184
  %v1249 = vpack.c.bf16 %v1185, %v1185
  %v1250 = vpack.c.bf16 %v1186, %v1186
  %v1251 = vpack.c.bf16 %v1187, %v1187
  %v1252 = vpack.c.bf16 %v1188, %v1188
  %v1253 = vpack.c.bf16 %v1189, %v1189
  %v1254 = vpack.c.bf16 %v1190, %v1190
  %v1255 = vpack.c.bf16 %v1191, %v1191
  %v1256 = vpack.c.bf16 %v1192, %v1192
  %v1257 = vpack.c.bf16 %v1193, %v1193
  %v1258 = vpack.c.bf16 %v1194, %v1194
  %v1259 = vpack.c.bf16 %v1195, %v1195
  %v1260 = vpack.c.bf16 %v1196, %v1196
  %v1261 = vpack.c.bf16 %v1197, %v1197
  %v1262 = vpack.c.bf16 %v1198, %v1198
  %v1263 = vpack.c.bf16 %v1199, %v1199
  %v1264 = vpack.c.bf16 %v1200, %v1200
  %v1265 = vpack.c.bf16 %v1201, %v1201
  %v1266 = vpack.c.bf16 %v1202, %v1202
  %v1267 = vpack.c.bf16 %v1203, %v1203
  %v1268 = vpack.c.bf16 %v1204, %v1204
  %v1269 = vpack.c.bf16 %v1205, %v1205
  %v1270 = vpack.c.bf16 %v1206, %v1206
  %v1271 = vpack.c.bf16 %v1207, %v1207
  %v1272 = vpack.c.bf16 %v1208, %v1208
  %v1273 = vpack.c.bf16 %v1209, %v1209
  %v1274 = vpack.c.bf16 %v1210, %v1210
  %v1275 = vpack.c.bf16 %v1211, %v1211
  %v1276 = vpack.c.bf16 %v1212, %v1212
  %v1277 = vpack.c.bf16 %v1213, %v1213
  %v1278 = vpack.c.bf16 %v1214, %v1214
  %v1279 = vpack.c.bf16 %v1215, %v1215
  %v1280 = vpack.c.bf16 %v1216, %v1216
  %v1281 = vpack.c.bf16 %v1217, %v1217
  %v1282 = vpack.c.bf16 %v1218, %v1218
  %v1283 = vpack.c.bf16 %v1219, %v1219
  %v1284 = vpack.c.bf16 %v1220, %v1220
  %v1285 = vpack.c.bf16 %v1221, %v1221
  %v1286 = vpack.c.bf16 %v1222, %v1222
  %v1287 = vpack.c.bf16 %v1223, %v1223
  %v1288 = vpack.c.bf16 %v1224, %v1224
  %v1289 = vpack.c.bf16 %v1225, %v1225
  %v1290 = vpack.c.bf16 %v1226, %v1226
  %v1291 = vpack.c.bf16 %v1227, %v1227
  %v1292 = vpack.c.bf16 %v1228, %v1228
  %v1293 = vpack.c.bf16 %v1229, %v1229
  %v1294 = vpack.c.bf16 %v1230, %v1230
  %v1295 = vpack.c.bf16 %v1231, %v1231
  %v1296 = vpack.c.bf16 %v1232, %v1232
  %v1297 = vpack.c.bf16 %v1233, %v1233
  %v1298 = vpack.c.bf16 %v1234, %v1234
  %v1299 = vpack.c.bf16 %v1235, %v1235
  %v1300 = vpack.c.bf16 %v1236, %v1236
  %v1301 = vpack.c.bf16 %v1237, %v1237
  %v1302 = vpack.c.bf16 %v1238, %v1238
  %v1303 = vpack.c.bf16 %v1239, %v1239
  %v1304 = vpack.c.bf16 %v1240, %v1240
  %v1305 = vpack.c.bf16 %v1241, %v1241
  %v1306 = vpack.c.bf16 %v1242, %v1242
  %vm1307 = vcmask 125952
  %1308 = vst.msk [vmem:[%s4] sm:$0xf] %vm1307, %v1243
  %1309 = vst.msk [vmem:[%s4 + $0x4] sm:$0xf] %vm1307, %v1244
  %1310 = vst.msk [vmem:[%s4 + $0x8] sm:$0xf] %vm1307, %v1245
  %1311 = vst.msk [vmem:[%s4 + $0xc] sm:$0xf] %vm1307, %v1246
  %1312 = vst.msk [vmem:[%s4 + $0x10] sm:$0xf] %vm1307, %v1247
  %1313 = vst.msk [vmem:[%s4 + $0x14] sm:$0xf] %vm1307, %v1248
  %1314 = vst.msk [vmem:[%s4 + $0x18] sm:$0xf] %vm1307, %v1249
  %1315 = vst.msk [vmem:[%s4 + $0x1c] sm:$0xf] %vm1307, %v1250
  %1316 = vst.msk [vmem:[%s4 + $0x20] sm:$0xf] %vm1307, %v1251
  %1317 = vst.msk [vmem:[%s4 + $0x24] sm:$0xf] %vm1307, %v1252
  %1318 = vst.msk [vmem:[%s4 + $0x28] sm:$0xf] %vm1307, %v1253
  %1319 = vst.msk [vmem:[%s4 + $0x2c] sm:$0xf] %vm1307, %v1254
  %1320 = vst.msk [vmem:[%s4 + $0x30] sm:$0xf] %vm1307, %v1255
  %1321 = vst.msk [vmem:[%s4 + $0x34] sm:$0xf] %vm1307, %v1256
  %1322 = vst.msk [vmem:[%s4 + $0x38] sm:$0xf] %vm1307, %v1257
  %1323 = vst.msk [vmem:[%s4 + $0x3c] sm:$0xf] %vm1307, %v1258
  %1324 = vst.msk [vmem:[%s4 + $0x40] sm:$0xf] %vm1307, %v1259
  %1325 = vst.msk [vmem:[%s4 + $0x44] sm:$0xf] %vm1307, %v1260
  %1326 = vst.msk [vmem:[%s4 + $0x48] sm:$0xf] %vm1307, %v1261
  %1327 = vst.msk [vmem:[%s4 + $0x4c] sm:$0xf] %vm1307, %v1262
  %1328 = vst.msk [vmem:[%s4 + $0x50] sm:$0xf] %vm1307, %v1263
  %1329 = vst.msk [vmem:[%s4 + $0x54] sm:$0xf] %vm1307, %v1264
  %1330 = vst.msk [vmem:[%s4 + $0x58] sm:$0xf] %vm1307, %v1265
  %1331 = vst.msk [vmem:[%s4 + $0x5c] sm:$0xf] %vm1307, %v1266
  %1332 = vst.msk [vmem:[%s4 + $0x60] sm:$0xf] %vm1307, %v1267
  %1333 = vst.msk [vmem:[%s4 + $0x64] sm:$0xf] %vm1307, %v1268
  %1334 = vst.msk [vmem:[%s4 + $0x68] sm:$0xf] %vm1307, %v1269
  %1335 = vst.msk [vmem:[%s4 + $0x6c] sm:$0xf] %vm1307, %v1270
  %1336 = vst.msk [vmem:[%s4 + $0x70] sm:$0xf] %vm1307, %v1271
  %1337 = vst.msk [vmem:[%s4 + $0x74] sm:$0xf] %vm1307, %v1272
  %1338 = vst.msk [vmem:[%s4 + $0x78] sm:$0xf] %vm1307, %v1273
  %1339 = vst.msk [vmem:[%s4 + $0x7c] sm:$0xf] %vm1307, %v1274
  %1340 = vst.msk [vmem:[%s4 + $0x80] sm:$0xf] %vm1307, %v1275
  %1341 = vst.msk [vmem:[%s4 + $0x84] sm:$0xf] %vm1307, %v1276
  %1342 = vst.msk [vmem:[%s4 + $0x88] sm:$0xf] %vm1307, %v1277
  %1343 = vst.msk [vmem:[%s4 + $0x8c] sm:$0xf] %vm1307, %v1278
  %1344 = vst.msk [vmem:[%s4 + $0x90] sm:$0xf] %vm1307, %v1279
  %1345 = vst.msk [vmem:[%s4 + $0x94] sm:$0xf] %vm1307, %v1280
  %1346 = vst.msk [vmem:[%s4 + $0x98] sm:$0xf] %vm1307, %v1281
  %1347 = vst.msk [vmem:[%s4 + $0x9c] sm:$0xf] %vm1307, %v1282
  %1348 = vst.msk [vmem:[%s4 + $0xa0] sm:$0xf] %vm1307, %v1283
  %1349 = vst.msk [vmem:[%s4 + $0xa4] sm:$0xf] %vm1307, %v1284
  %1350 = vst.msk [vmem:[%s4 + $0xa8] sm:$0xf] %vm1307, %v1285
  %1351 = vst.msk [vmem:[%s4 + $0xac] sm:$0xf] %vm1307, %v1286
  %1352 = vst.msk [vmem:[%s4 + $0xb0] sm:$0xf] %vm1307, %v1287
  %1353 = vst.msk [vmem:[%s4 + $0xb4] sm:$0xf] %vm1307, %v1288
  %1354 = vst.msk [vmem:[%s4 + $0xb8] sm:$0xf] %vm1307, %v1289
  %1355 = vst.msk [vmem:[%s4 + $0xbc] sm:$0xf] %vm1307, %v1290
  %1356 = vst.msk [vmem:[%s4 + $0xc0] sm:$0xf] %vm1307, %v1291
  %1357 = vst.msk [vmem:[%s4 + $0xc4] sm:$0xf] %vm1307, %v1292
  %1358 = vst.msk [vmem:[%s4 + $0xc8] sm:$0xf] %vm1307, %v1293
  %1359 = vst.msk [vmem:[%s4 + $0xcc] sm:$0xf] %vm1307, %v1294
  %1360 = vst.msk [vmem:[%s4 + $0xd0] sm:$0xf] %vm1307, %v1295
  %1361 = vst.msk [vmem:[%s4 + $0xd4] sm:$0xf] %vm1307, %v1296
  %1362 = vst.msk [vmem:[%s4 + $0xd8] sm:$0xf] %vm1307, %v1297
  %1363 = vst.msk [vmem:[%s4 + $0xdc] sm:$0xf] %vm1307, %v1298
  %1364 = vst.msk [vmem:[%s4 + $0xe0] sm:$0xf] %vm1307, %v1299
  %1365 = vst.msk [vmem:[%s4 + $0xe4] sm:$0xf] %vm1307, %v1300
  %1366 = vst.msk [vmem:[%s4 + $0xe8] sm:$0xf] %vm1307, %v1301
  %1367 = vst.msk [vmem:[%s4 + $0xec] sm:$0xf] %vm1307, %v1302
  %1368 = vst.msk [vmem:[%s4 + $0xf0] sm:$0xf] %vm1307, %v1303
  %1369 = vst.msk [vmem:[%s4 + $0xf4] sm:$0xf] %vm1307, %v1304
  %1370 = vst.msk [vmem:[%s4 + $0xf8] sm:$0xf] %vm1307, %v1305
  %1371 = vst.msk [vmem:[%s4 + $0xfc] sm:$0xf] %vm1307, %v1306
  // Predicated region
  $region18: #{discriminator_forward.6} parent=0 // pred_check
    _
  $region19: #{discriminator_forward.6} parent=0 // pred_check_branch
    %1373 = sbr.rel (0) target = $region21
  $region20: #{discriminator_forward.6} parent=0 // pred_region
    _
  $region21: #{discriminator_forward.6} parent=0 // pred_fallthru
    _
  // Predicated region
  $region22: #{discriminator_forward.6} parent=0 // pred_check
    _
  $region23: #{discriminator_forward.6} parent=0 // pred_check_branch
    %1375 = sbr.rel (0) target = $region25
  $region24: #{discriminator_forward.6} parent=0 // pred_region
    _
  $region25: #{discriminator_forward.6} parent=0 // pred_fallthru
    _

// kernel: discriminator_forward.7
$region0: #{discriminator_forward.7}
  #allocation0 [shape = 'u32[]', space=smem, size = 0x4, offset = 0x4, fixed_abs, tag = 'smem constant byte address 0x4 - core index']
  #allocation1 [shape = 'u32[72,128]{1,0:T(1,128)}', space=vmem, size = 0x9000, scoped, tag = 'internal scratch']
  %s0 = inlined_call_operand.vmem [shape: bf16[128,256], index: 0, kind: input, shape index: {}]
  %s1 = inlined_call_operand.vmem [shape: bf16[256,32], index: 1, kind: input, shape index: {}]
  %s2 = inlined_call_operand.vmem [shape: f32[1,32], index: 2, kind: input, shape index: {}]
  %s3 = inlined_call_operand.vmem [shape: f32[1,32], index: 3, kind: input, shape index: {}]
  %s4 = inlined_call_operand.vmem [shape: bf16[128,32], index: 4, kind: output, shape index: {}]
  %s5 = sld [smem:[#allocation0]]
  $region26: #{discriminator_forward.7} parent=0
    _
  %s7 = ssub.s32 1, %s5
  %s8 = scalar_select 0, %s7, %s5
  // Predicated region
  $region2: #{discriminator_forward.7} parent=0 // pred_check
    _
  $region3: #{discriminator_forward.7} parent=0 // pred_check_branch
    %10 = sbr.rel (0) target = $region5
  $region4: #{discriminator_forward.7} parent=0 // pred_region
    _
  $region5: #{discriminator_forward.7} parent=0 // pred_fallthru
    _
  // Predicated region
  $region6: #{discriminator_forward.7} parent=0 // pred_check
    _
  $region7: #{discriminator_forward.7} parent=0 // pred_check_branch
    %12 = sbr.rel (0) target = $region9
  $region8: #{discriminator_forward.7} parent=0 // pred_region
    _
  $region9: #{discriminator_forward.7} parent=0 // pred_fallthru
    _
  // Predicated region
  $region10: #{discriminator_forward.7} parent=0 // pred_check
    _
  $region11: #{discriminator_forward.7} parent=0 // pred_check_branch
    %14 = sbr.rel (0) target = $region13
  $region12: #{discriminator_forward.7} parent=0 // pred_region
    _
  $region13: #{discriminator_forward.7} parent=0 // pred_fallthru
    _
  // Predicated region
  $region14: #{discriminator_forward.7} parent=0 // pred_check
    _
  $region15: #{discriminator_forward.7} parent=0 // pred_check_branch
    %16 = sbr.rel (0) target = $region17
  $region16: #{discriminator_forward.7} parent=0 // pred_region
    _
  $region17: #{discriminator_forward.7} parent=0 // pred_fallthru
    _
  %v17 = vld [vmem:[%s0] sm:$0xff]
  %v18 = vld [vmem:[%s0 + $0x8] sm:$0xff]
  %v19 = vld [vmem:[%s0 + $0x10] sm:$0xff]
  %v20 = vld [vmem:[%s0 + $0x18] sm:$0xff]
  %v21 = vld [vmem:[%s0 + $0x20] sm:$0xff]
  %v22 = vld [vmem:[%s0 + $0x28] sm:$0xff]
  %v23 = vld [vmem:[%s0 + $0x30] sm:$0xff]
  %v24 = vld [vmem:[%s0 + $0x38] sm:$0xff]
  %v25 = vld [vmem:[%s0 + $0x40] sm:$0xff]
  %v26 = vld [vmem:[%s0 + $0x48] sm:$0xff]
  %v27 = vld [vmem:[%s0 + $0x50] sm:$0xff]
  %v28 = vld [vmem:[%s0 + $0x58] sm:$0xff]
  %v29 = vld [vmem:[%s0 + $0x60] sm:$0xff]
  %v30 = vld [vmem:[%s0 + $0x68] sm:$0xff]
  %v31 = vld [vmem:[%s0 + $0x70] sm:$0xff]
  %v32 = vld [vmem:[%s0 + $0x78] sm:$0xff]
  %v33 = vld [vmem:[%s1] sm:$0xf]
  %v34 = vld [vmem:[%s1 + $0x4] sm:$0xf]
  %v35 = vld [vmem:[%s1 + $0x8] sm:$0xf]
  %v36 = vld [vmem:[%s1 + $0xc] sm:$0xf]
  %v37 = vld [vmem:[%s1 + $0x10] sm:$0xf]
  %v38 = vld [vmem:[%s1 + $0x14] sm:$0xf]
  %v39 = vld [vmem:[%s1 + $0x18] sm:$0xf]
  %v40 = vld [vmem:[%s1 + $0x1c] sm:$0xf]
  %v41 = vld [vmem:[%s1 + $0x20] sm:$0xf]
  %v42 = vld [vmem:[%s1 + $0x24] sm:$0xf]
  %v43 = vld [vmem:[%s1 + $0x28] sm:$0xf]
  %v44 = vld [vmem:[%s1 + $0x2c] sm:$0xf]
  %v45 = vld [vmem:[%s1 + $0x30] sm:$0xf]
  %v46 = vld [vmem:[%s1 + $0x34] sm:$0xf]
  %v47 = vld [vmem:[%s1 + $0x38] sm:$0xf]
  %v48 = vld [vmem:[%s1 + $0x3c] sm:$0xf]
  %v49 = vld [vmem:[%s1 + $0x40] sm:$0xf]
  %v50 = vld [vmem:[%s1 + $0x44] sm:$0xf]
  %v51 = vld [vmem:[%s1 + $0x48] sm:$0xf]
  %v52 = vld [vmem:[%s1 + $0x4c] sm:$0xf]
  %v53 = vld [vmem:[%s1 + $0x50] sm:$0xf]
  %v54 = vld [vmem:[%s1 + $0x54] sm:$0xf]
  %v55 = vld [vmem:[%s1 + $0x58] sm:$0xf]
  %v56 = vld [vmem:[%s1 + $0x5c] sm:$0xf]
  %v57 = vld [vmem:[%s1 + $0x60] sm:$0xf]
  %v58 = vld [vmem:[%s1 + $0x64] sm:$0xf]
  %v59 = vld [vmem:[%s1 + $0x68] sm:$0xf]
  %v60 = vld [vmem:[%s1 + $0x6c] sm:$0xf]
  %v61 = vld [vmem:[%s1 + $0x70] sm:$0xf]
  %v62 = vld [vmem:[%s1 + $0x74] sm:$0xf]
  %v63 = vld [vmem:[%s1 + $0x78] sm:$0xf]
  %v64 = vld [vmem:[%s1 + $0x7c] sm:$0xf]
  %v81 = vunpack.c.l.b16 %v17
  %v82 = vunpack.c.h.b16 %v17
  %v83 = vunpack.c.l.b16 %v18
  %v84 = vunpack.c.h.b16 %v18
  %v85 = vunpack.c.l.b16 %v19
  %v86 = vunpack.c.h.b16 %v19
  %v87 = vunpack.c.l.b16 %v20
  %v88 = vunpack.c.h.b16 %v20
  %v89 = vunpack.c.l.b16 %v21
  %v90 = vunpack.c.h.b16 %v21
  %v91 = vunpack.c.l.b16 %v22
  %v92 = vunpack.c.h.b16 %v22
  %v93 = vunpack.c.l.b16 %v23
  %v94 = vunpack.c.h.b16 %v23
  %v95 = vunpack.c.l.b16 %v24
  %v96 = vunpack.c.h.b16 %v24
  %v97 = vunpack.c.l.b16 %v25
  %v98 = vunpack.c.h.b16 %v25
  %v99 = vunpack.c.l.b16 %v26
  %v100 = vunpack.c.h.b16 %v26
  %v101 = vunpack.c.l.b16 %v27
  %v102 = vunpack.c.h.b16 %v27
  %v103 = vunpack.c.l.b16 %v28
  %v104 = vunpack.c.h.b16 %v28
  %v105 = vunpack.c.l.b16 %v29
  %v106 = vunpack.c.h.b16 %v29
  %v107 = vunpack.c.l.b16 %v30
  %v108 = vunpack.c.h.b16 %v30
  %v109 = vunpack.c.l.b16 %v31
  %v110 = vunpack.c.h.b16 %v31
  %v111 = vunpack.c.l.b16 %v32
  %v112 = vunpack.c.h.b16 %v32
  %v113 = vpack.c.b16 %v83, %v81
  %v114 = vpack.c.b16 %v84, %v82
  %v115 = vpack.c.b16 %v87, %v85
  %v116 = vpack.c.b16 %v88, %v86
  %v117 = vpack.c.b16 %v91, %v89
  %v118 = vpack.c.b16 %v92, %v90
  %v119 = vpack.c.b16 %v95, %v93
  %v120 = vpack.c.b16 %v96, %v94
  %v121 = vpack.c.b16 %v99, %v97
  %v122 = vpack.c.b16 %v100, %v98
  %v123 = vpack.c.b16 %v103, %v101
  %v124 = vpack.c.b16 %v104, %v102
  %v125 = vpack.c.b16 %v107, %v105
  %v126 = vpack.c.b16 %v108, %v106
  %v127 = vpack.c.b16 %v111, %v109
  %v128 = vpack.c.b16 %v112, %v110
  %v177 = vunpack.c.l.b16 %v33
  %v178 = vunpack.c.l.b16 %v34
  %v179 = vunpack.c.l.b16 %v35
  %v180 = vunpack.c.l.b16 %v36
  %v181 = vunpack.c.l.b16 %v37
  %v182 = vunpack.c.l.b16 %v38
  %v183 = vunpack.c.l.b16 %v39
  %v184 = vunpack.c.l.b16 %v40
  %v185 = vunpack.c.l.b16 %v41
  %v186 = vunpack.c.l.b16 %v42
  %v187 = vunpack.c.l.b16 %v43
  %v188 = vunpack.c.l.b16 %v44
  %v189 = vunpack.c.l.b16 %v45
  %v190 = vunpack.c.l.b16 %v46
  %v191 = vunpack.c.l.b16 %v47
  %v192 = vunpack.c.l.b16 %v48
  %v193 = vunpack.c.l.b16 %v49
  %v194 = vunpack.c.l.b16 %v50
  %v195 = vunpack.c.l.b16 %v51
  %v196 = vunpack.c.l.b16 %v52
  %v197 = vunpack.c.l.b16 %v53
  %v198 = vunpack.c.l.b16 %v54
  %v199 = vunpack.c.l.b16 %v55
  %v200 = vunpack.c.l.b16 %v56
  %v201 = vunpack.c.l.b16 %v57
  %v202 = vunpack.c.l.b16 %v58
  %v203 = vunpack.c.l.b16 %v59
  %v204 = vunpack.c.l.b16 %v60
  %v205 = vunpack.c.l.b16 %v61
  %v206 = vunpack.c.l.b16 %v62
  %v207 = vunpack.c.l.b16 %v63
  %v208 = vunpack.c.l.b16 %v64
  %v209 = vpack.c.b16 %v178, %v177
  %v210 = vpack.c.b16 %v180, %v179
  %v211 = vpack.c.b16 %v182, %v181
  %v212 = vpack.c.b16 %v184, %v183
  %v213 = vpack.c.b16 %v186, %v185
  %v214 = vpack.c.b16 %v188, %v187
  %v215 = vpack.c.b16 %v190, %v189
  %v216 = vpack.c.b16 %v192, %v191
  %v217 = vpack.c.b16 %v194, %v193
  %v218 = vpack.c.b16 %v196, %v195
  %v219 = vpack.c.b16 %v198, %v197
  %v220 = vpack.c.b16 %v200, %v199
  %v221 = vpack.c.b16 %v202, %v201
  %v222 = vpack.c.b16 %v204, %v203
  %v223 = vpack.c.b16 %v206, %v205
  %v224 = vpack.c.b16 %v208, %v207
  %241 = vmatpush.bf16.msra.mxu0 %v216
  %242 = vmatpush.bf16.msra.mxu0 %v215
  %243 = vmatpush.bf16.msra.mxu0 %v214
  %244 = vmatpush.bf16.msra.mxu0 %v213
  %245 = vmatpush.bf16.msra.mxu0 %v212
  %246 = vmatpush.bf16.msra.mxu0 %v211
  %247 = vmatpush.bf16.msra.mxu0 %v210
  %248 = vmatpush.bf16.msra.mxu0 %v209
  %249 = vmatmul.bf16.gmra.mxu0 %v113
  %v250 = vpop.f32.mrf.mxu0
  %v251 = vadd.f32 0.0, %v250
  %v252 = vpop.f32.mrf.mxu0
  %v253 = vadd.f32 0.0, %v252
  %254 = vmatmul.bf16.gmra.mxu0 %v115
  %v255 = vpop.f32.mrf.mxu0
  %v256 = vadd.f32 0.0, %v255
  %v257 = vpop.f32.mrf.mxu0
  %v258 = vadd.f32 0.0, %v257
  %259 = vmatmul.bf16.gmra.mxu0 %v117
  %v260 = vpop.f32.mrf.mxu0
  %v261 = vadd.f32 0.0, %v260
  %v262 = vpop.f32.mrf.mxu0
  %v263 = vadd.f32 0.0, %v262
  %264 = vmatmul.bf16.gmra.mxu0 %v119
  %v265 = vpop.f32.mrf.mxu0
  %v266 = vadd.f32 0.0, %v265
  %v267 = vpop.f32.mrf.mxu0
  %v268 = vadd.f32 0.0, %v267
  %269 = vmatmul.bf16.gmra.mxu0 %v121
  %v270 = vpop.f32.mrf.mxu0
  %v271 = vadd.f32 0.0, %v270
  %v272 = vpop.f32.mrf.mxu0
  %v273 = vadd.f32 0.0, %v272
  %274 = vmatmul.bf16.gmra.mxu0 %v123
  %v275 = vpop.f32.mrf.mxu0
  %v276 = vadd.f32 0.0, %v275
  %v277 = vpop.f32.mrf.mxu0
  %v278 = vadd.f32 0.0, %v277
  %279 = vmatmul.bf16.gmra.mxu0 %v125
  %v280 = vpop.f32.mrf.mxu0
  %v281 = vadd.f32 0.0, %v280
  %v282 = vpop.f32.mrf.mxu0
  %v283 = vadd.f32 0.0, %v282
  %284 = vmatmul.bf16.gmra.mxu0 %v127
  %v285 = vpop.f32.mrf.mxu0
  %v286 = vadd.f32 0.0, %v285
  %v287 = vpop.f32.mrf.mxu0
  %v288 = vadd.f32 0.0, %v287
  %289 = vdwg.mxu0
  %290 = vmatpush.bf16.msra.mxu0 %v224
  %291 = vmatpush.bf16.msra.mxu0 %v223
  %292 = vmatpush.bf16.msra.mxu0 %v222
  %293 = vmatpush.bf16.msra.mxu0 %v221
  %294 = vmatpush.bf16.msra.mxu0 %v220
  %295 = vmatpush.bf16.msra.mxu0 %v219
  %296 = vmatpush.bf16.msra.mxu0 %v218
  %297 = vmatpush.bf16.msra.mxu0 %v217
  %298 = vmatmul.bf16.gmra.mxu0 %v114
  %v299 = vpop.f32.mrf.mxu0
  %v300 = vadd.f32 %v251, %v299
  %v301 = vpop.f32.mrf.mxu0
  %v302 = vadd.f32 %v253, %v301
  %303 = vmatmul.bf16.gmra.mxu0 %v116
  %v304 = vpop.f32.mrf.mxu0
  %v305 = vadd.f32 %v256, %v304
  %v306 = vpop.f32.mrf.mxu0
  %v307 = vadd.f32 %v258, %v306
  %308 = vmatmul.bf16.gmra.mxu0 %v118
  %v309 = vpop.f32.mrf.mxu0
  %v310 = vadd.f32 %v261, %v309
  %v311 = vpop.f32.mrf.mxu0
  %v312 = vadd.f32 %v263, %v311
  %313 = vmatmul.bf16.gmra.mxu0 %v120
  %v314 = vpop.f32.mrf.mxu0
  %v315 = vadd.f32 %v266, %v314
  %v316 = vpop.f32.mrf.mxu0
  %v317 = vadd.f32 %v268, %v316
  %318 = vmatmul.bf16.gmra.mxu0 %v122
  %v319 = vpop.f32.mrf.mxu0
  %v320 = vadd.f32 %v271, %v319
  %v321 = vpop.f32.mrf.mxu0
  %v322 = vadd.f32 %v273, %v321
  %323 = vmatmul.bf16.gmra.mxu0 %v124
  %v324 = vpop.f32.mrf.mxu0
  %v325 = vadd.f32 %v276, %v324
  %v326 = vpop.f32.mrf.mxu0
  %v327 = vadd.f32 %v278, %v326
  %328 = vmatmul.bf16.gmra.mxu0 %v126
  %v329 = vpop.f32.mrf.mxu0
  %v330 = vadd.f32 %v281, %v329
  %v331 = vpop.f32.mrf.mxu0
  %v332 = vadd.f32 %v283, %v331
  %333 = vmatmul.bf16.gmra.mxu0 %v128
  %v334 = vpop.f32.mrf.mxu0
  %v335 = vadd.f32 %v286, %v334
  %v336 = vpop.f32.mrf.mxu0
  %v337 = vadd.f32 %v288, %v336
  %338 = vdwg.mxu0
  %vm339 = vcmask 261120
  %v340 = vsel %vm339, %v300, 0.0
  %v341 = vsel %vm339, %v302, 0.0
  %v342 = vadd.f32 %v340, %v341
  %v343 = vsel %vm339, %v305, 0.0
  %v344 = vadd.f32 %v342, %v343
  %v345 = vsel %vm339, %v307, 0.0
  %v346 = vadd.f32 %v344, %v345
  %v347 = vsel %vm339, %v310, 0.0
  %v348 = vadd.f32 %v346, %v347
  %v349 = vsel %vm339, %v312, 0.0
  %v350 = vadd.f32 %v348, %v349
  %v351 = vsel %vm339, %v315, 0.0
  %v352 = vadd.f32 %v350, %v351
  %v353 = vsel %vm339, %v317, 0.0
  %v354 = vadd.f32 %v352, %v353
  %v355 = vsel %vm339, %v320, 0.0
  %v356 = vadd.f32 %v354, %v355
  %v357 = vsel %vm339, %v322, 0.0
  %v358 = vadd.f32 %v356, %v357
  %v359 = vsel %vm339, %v325, 0.0
  %v360 = vadd.f32 %v358, %v359
  %v361 = vsel %vm339, %v327, 0.0
  %v362 = vadd.f32 %v360, %v361
  %v363 = vsel %vm339, %v330, 0.0
  %v364 = vadd.f32 %v362, %v363
  %v365 = vsel %vm339, %v332, 0.0
  %v366 = vadd.f32 %v364, %v365
  %v367 = vsel %vm339, %v335, 0.0
  %v368 = vadd.f32 %v366, %v367
  %v369 = vsel %vm339, %v337, 0.0
  %v370 = vadd.f32 %v368, %v369
  %v371 = vrot.slane %v370, 4
  %v372 = vadd.f32 %v370, %v371
  %v373 = vrot.slane %v372, 2
  %v374 = vadd.f32 %v372, %v373
  %v375 = vrot.slane %v374, 1
  %v376 = vadd.f32 %v374, %v375
  %v377 = vmul.f32 %v376, 0.0078125
  %v378 = vsub.f32 %v300, %v377
  %v379 = vsub.f32 %v302, %v377
  %v380 = vsub.f32 %v305, %v377
  %v381 = vsub.f32 %v307, %v377
  %v382 = vsub.f32 %v310, %v377
  %v383 = vsub.f32 %v312, %v377
  %v384 = vsub.f32 %v315, %v377
  %v385 = vsub.f32 %v317, %v377
  %v386 = vsub.f32 %v320, %v377
  %v387 = vsub.f32 %v322, %v377
  %v388 = vsub.f32 %v325, %v377
  %v389 = vsub.f32 %v327, %v377
  %v390 = vsub.f32 %v330, %v377
  %v391 = vsub.f32 %v332, %v377
  %v392 = vsub.f32 %v335, %v377
  %v393 = vsub.f32 %v337, %v377
  %v394 = vmul.f32 %v378, %v378
  %v395 = vmul.f32 %v379, %v379
  %v396 = vmul.f32 %v380, %v380
  %v397 = vmul.f32 %v381, %v381
  %v398 = vmul.f32 %v382, %v382
  %v399 = vmul.f32 %v383, %v383
  %v400 = vmul.f32 %v384, %v384
  %v401 = vmul.f32 %v385, %v385
  %v402 = vmul.f32 %v386, %v386
  %v403 = vmul.f32 %v387, %v387
  %v404 = vmul.f32 %v388, %v388
  %v405 = vmul.f32 %v389, %v389
  %v406 = vmul.f32 %v390, %v390
  %v407 = vmul.f32 %v391, %v391
  %v408 = vmul.f32 %v392, %v392
  %v409 = vmul.f32 %v393, %v393
  %v410 = vsel %vm339, %v394, 0.0
  %v411 = vsel %vm339, %v395, 0.0
  %v412 = vadd.f32 %v410, %v411
  %v413 = vsel %vm339, %v396, 0.0
  %v414 = vadd.f32 %v412, %v413
  %v415 = vsel %vm339, %v397, 0.0
  %v416 = vadd.f32 %v414, %v415
  %v417 = vsel %vm339, %v398, 0.0
  %v418 = vadd.f32 %v416, %v417
  %v419 = vsel %vm339, %v399, 0.0
  %v420 = vadd.f32 %v418, %v419
  %v421 = vsel %vm339, %v400, 0.0
  %v422 = vadd.f32 %v420, %v421
  %v423 = vsel %vm339, %v401, 0.0
  %v424 = vadd.f32 %v422, %v423
  %v425 = vsel %vm339, %v402, 0.0
  %v426 = vadd.f32 %v424, %v425
  %v427 = vsel %vm339, %v403, 0.0
  %v428 = vadd.f32 %v426, %v427
  %v429 = vsel %vm339, %v404, 0.0
  %v430 = vadd.f32 %v428, %v429
  %v431 = vsel %vm339, %v405, 0.0
  %v432 = vadd.f32 %v430, %v431
  %v433 = vsel %vm339, %v406, 0.0
  %v434 = vadd.f32 %v432, %v433
  %v435 = vsel %vm339, %v407, 0.0
  %v436 = vadd.f32 %v434, %v435
  %v437 = vsel %vm339, %v408, 0.0
  %v438 = vadd.f32 %v436, %v437
  %v439 = vsel %vm339, %v409, 0.0
  %v440 = vadd.f32 %v438, %v439
  %v441 = vrot.slane %v440, 4
  %v442 = vadd.f32 %v440, %v441
  %v443 = vrot.slane %v442, 2
  %v444 = vadd.f32 %v442, %v443
  %v445 = vrot.slane %v444, 1
  %v446 = vadd.f32 %v444, %v445
  %v447 = vmul.f32 %v446, 0.0078125
  %v448 = vld [vmem:[%s2] sm:$0x1]
  %v449 = vadd.f32 %v447, 1e-05
  %v450 = vrsqrt.pop %v449
  %v451 = vmul.f32 %v450, %v449
  %v452 = vmul.f32 %v451, %v450
  %v453 = vmul.f32 0.5, %v452
  %v454 = vsub.f32 1.5, %v453
  %v455 = vmul.f32 %v450, %v454
  %vm456 = vweird.f32 %v449
  %vm457 = vweird.f32 %v450
  %vm458 = vmor %vm456, %vm457
  %v459 = vsel %vm458, %v450, %v455
  %v460 = vmul.f32 %v448, %v459
  %v462 = vperm.slane %v460, 0
  %v464 = vmul.f32 %v378, %v462
  %v465 = vmul.f32 %v379, %v462
  %v466 = vmul.f32 %v380, %v462
  %v467 = vmul.f32 %v381, %v462
  %v468 = vmul.f32 %v382, %v462
  %v469 = vmul.f32 %v383, %v462
  %v470 = vmul.f32 %v384, %v462
  %v471 = vmul.f32 %v385, %v462
  %v472 = vmul.f32 %v386, %v462
  %v473 = vmul.f32 %v387, %v462
  %v474 = vmul.f32 %v388, %v462
  %v475 = vmul.f32 %v389, %v462
  %v476 = vmul.f32 %v390, %v462
  %v477 = vmul.f32 %v391, %v462
  %v478 = vmul.f32 %v392, %v462
  %v479 = vmul.f32 %v393, %v462
  %v480 = vld [vmem:[%s3] sm:$0x1]
  %v482 = vperm.slane %v480, 0
  %v484 = vadd.f32 %v464, %v482
  %v485 = vadd.f32 %v465, %v482
  %v486 = vadd.f32 %v466, %v482
  %v487 = vadd.f32 %v467, %v482
  %v488 = vadd.f32 %v468, %v482
  %v489 = vadd.f32 %v469, %v482
  %v490 = vadd.f32 %v470, %v482
  %v491 = vadd.f32 %v471, %v482
  %v492 = vadd.f32 %v472, %v482
  %v493 = vadd.f32 %v473, %v482
  %v494 = vadd.f32 %v474, %v482
  %v495 = vadd.f32 %v475, %v482
  %v496 = vadd.f32 %v476, %v482
  %v497 = vadd.f32 %v477, %v482
  %v498 = vadd.f32 %v478, %v482
  %v499 = vadd.f32 %v479, %v482
  %vm500 = vcmp.gt.f32.partialorder %v484, 0.0
  %vm501 = vcmp.gt.f32.partialorder %v485, 0.0
  %vm502 = vcmp.gt.f32.partialorder %v486, 0.0
  %vm503 = vcmp.gt.f32.partialorder %v487, 0.0
  %vm504 = vcmp.gt.f32.partialorder %v488, 0.0
  %vm505 = vcmp.gt.f32.partialorder %v489, 0.0
  %vm506 = vcmp.gt.f32.partialorder %v490, 0.0
  %vm507 = vcmp.gt.f32.partialorder %v491, 0.0
  %vm508 = vcmp.gt.f32.partialorder %v492, 0.0
  %vm509 = vcmp.gt.f32.partialorder %v493, 0.0
  %vm510 = vcmp.gt.f32.partialorder %v494, 0.0
  %vm511 = vcmp.gt.f32.partialorder %v495, 0.0
  %vm512 = vcmp.gt.f32.partialorder %v496, 0.0
  %vm513 = vcmp.gt.f32.partialorder %v497, 0.0
  %vm514 = vcmp.gt.f32.partialorder %v498, 0.0
  %vm515 = vcmp.gt.f32.partialorder %v499, 0.0
  %v516 = vmul.f32 %v484, 0.2
  %v517 = vmul.f32 %v485, 0.2
  %v518 = vmul.f32 %v486, 0.2
  %v519 = vmul.f32 %v487, 0.2
  %v520 = vmul.f32 %v488, 0.2
  %v521 = vmul.f32 %v489, 0.2
  %v522 = vmul.f32 %v490, 0.2
  %v523 = vmul.f32 %v491, 0.2
  %v524 = vmul.f32 %v492, 0.2
  %v525 = vmul.f32 %v493, 0.2
  %v526 = vmul.f32 %v494, 0.2
  %v527 = vmul.f32 %v495, 0.2
  %v528 = vmul.f32 %v496, 0.2
  %v529 = vmul.f32 %v497, 0.2
  %v530 = vmul.f32 %v498, 0.2
  %v531 = vmul.f32 %v499, 0.2
  %v532 = vsel %vm500, %v484, %v516
  %v533 = vsel %vm501, %v485, %v517
  %v534 = vsel %vm502, %v486, %v518
  %v535 = vsel %vm503, %v487, %v519
  %v536 = vsel %vm504, %v488, %v520
  %v537 = vsel %vm505, %v489, %v521
  %v538 = vsel %vm506, %v490, %v522
  %v539 = vsel %vm507, %v491, %v523
  %v540 = vsel %vm508, %v492, %v524
  %v541 = vsel %vm509, %v493, %v525
  %v542 = vsel %vm510, %v494, %v526
  %v543 = vsel %vm511, %v495, %v527
  %v544 = vsel %vm512, %v496, %v528
  %v545 = vsel %vm513, %v497, %v529
  %v546 = vsel %vm514, %v498, %v530
  %v547 = vsel %vm515, %v499, %v531
  %v548 = vpack.c.bf16 %v532, %v532
  %v549 = vpack.c.bf16 %v533, %v533
  %v550 = vpack.c.bf16 %v534, %v534
  %v551 = vpack.c.bf16 %v535, %v535
  %v552 = vpack.c.bf16 %v536, %v536
  %v553 = vpack.c.bf16 %v537, %v537
  %v554 = vpack.c.bf16 %v538, %v538
  %v555 = vpack.c.bf16 %v539, %v539
  %v556 = vpack.c.bf16 %v540, %v540
  %v557 = vpack.c.bf16 %v541, %v541
  %v558 = vpack.c.bf16 %v542, %v542
  %v559 = vpack.c.bf16 %v543, %v543
  %v560 = vpack.c.bf16 %v544, %v544
  %v561 = vpack.c.bf16 %v545, %v545
  %v562 = vpack.c.bf16 %v546, %v546
  %v563 = vpack.c.bf16 %v547, %v547
  %vm564 = vcmask 257024
  %565 = vst.msk [vmem:[%s4] sm:$0xf] %vm564, %v548
  %566 = vst.msk [vmem:[%s4 + $0x4] sm:$0xf] %vm564, %v549
  %567 = vst.msk [vmem:[%s4 + $0x8] sm:$0xf] %vm564, %v550
  %568 = vst.msk [vmem:[%s4 + $0xc] sm:$0xf] %vm564, %v551
  %569 = vst.msk [vmem:[%s4 + $0x10] sm:$0xf] %vm564, %v552
  %570 = vst.msk [vmem:[%s4 + $0x14] sm:$0xf] %vm564, %v553
  %571 = vst.msk [vmem:[%s4 + $0x18] sm:$0xf] %vm564, %v554
  %572 = vst.msk [vmem:[%s4 + $0x1c] sm:$0xf] %vm564, %v555
  %573 = vst.msk [vmem:[%s4 + $0x20] sm:$0xf] %vm564, %v556
  %574 = vst.msk [vmem:[%s4 + $0x24] sm:$0xf] %vm564, %v557
  %575 = vst.msk [vmem:[%s4 + $0x28] sm:$0xf] %vm564, %v558
  %576 = vst.msk [vmem:[%s4 + $0x2c] sm:$0xf] %vm564, %v559
  %577 = vst.msk [vmem:[%s4 + $0x30] sm:$0xf] %vm564, %v560
  %578 = vst.msk [vmem:[%s4 + $0x34] sm:$0xf] %vm564, %v561
  %579 = vst.msk [vmem:[%s4 + $0x38] sm:$0xf] %vm564, %v562
  %580 = vst.msk [vmem:[%s4 + $0x3c] sm:$0xf] %vm564, %v563
  // Predicated region
  $region18: #{discriminator_forward.7} parent=0 // pred_check
    _
  $region19: #{discriminator_forward.7} parent=0 // pred_check_branch
    %582 = sbr.rel (0) target = $region21
  $region20: #{discriminator_forward.7} parent=0 // pred_region
    _
  $region21: #{discriminator_forward.7} parent=0 // pred_fallthru
    _
  // Predicated region
  $region22: #{discriminator_forward.7} parent=0 // pred_check
    _
  $region23: #{discriminator_forward.7} parent=0 // pred_check_branch
    %584 = sbr.rel (0) target = $region25
  $region24: #{discriminator_forward.7} parent=0 // pred_region
    _
  $region25: #{discriminator_forward.7} parent=0 // pred_fallthru
    _

// kernel: discriminator_forward.8
$region0: #{discriminator_forward.8}
  #allocation0 [shape = 'u32[]', space=smem, size = 0x4, offset = 0x4, fixed_abs, tag = 'smem constant byte address 0x4 - core index']
  #allocation1 [shape = 'u32[72,128]{1,0:T(1,128)}', space=vmem, size = 0x9000, scoped, tag = 'internal scratch']
  %s0 = inlined_call_operand.vmem [shape: bf16[32,512], index: 0, kind: input, shape index: {}]
  %s1 = inlined_call_operand.vmem [shape: bf16[512,64], index: 1, kind: input, shape index: {}]
  %s2 = inlined_call_operand.vmem [shape: f32[1,64], index: 2, kind: input, shape index: {}]
  %s3 = inlined_call_operand.vmem [shape: f32[1,64], index: 3, kind: input, shape index: {}]
  %s4 = inlined_call_operand.vmem [shape: bf16[32,64], index: 4, kind: output, shape index: {}]
  %s5 = sld [smem:[#allocation0]]
  $region26: #{discriminator_forward.8} parent=0
    _
  %s7 = ssub.s32 1, %s5
  %s8 = scalar_select 0, %s7, %s5
  // Predicated region
  $region2: #{discriminator_forward.8} parent=0 // pred_check
    _
  $region3: #{discriminator_forward.8} parent=0 // pred_check_branch
    %10 = sbr.rel (0) target = $region5
  $region4: #{discriminator_forward.8} parent=0 // pred_region
    _
  $region5: #{discriminator_forward.8} parent=0 // pred_fallthru
    _
  // Predicated region
  $region6: #{discriminator_forward.8} parent=0 // pred_check
    _
  $region7: #{discriminator_forward.8} parent=0 // pred_check_branch
    %12 = sbr.rel (0) target = $region9
  $region8: #{discriminator_forward.8} parent=0 // pred_region
    _
  $region9: #{discriminator_forward.8} parent=0 // pred_fallthru
    _
  // Predicated region
  $region10: #{discriminator_forward.8} parent=0 // pred_check
    _
  $region11: #{discriminator_forward.8} parent=0 // pred_check_branch
    %14 = sbr.rel (0) target = $region13
  $region12: #{discriminator_forward.8} parent=0 // pred_region
    _
  $region13: #{discriminator_forward.8} parent=0 // pred_fallthru
    _
  // Predicated region
  $region14: #{discriminator_forward.8} parent=0 // pred_check
    _
  $region15: #{discriminator_forward.8} parent=0 // pred_check_branch
    %16 = sbr.rel (0) target = $region17
  $region16: #{discriminator_forward.8} parent=0 // pred_region
    _
  $region17: #{discriminator_forward.8} parent=0 // pred_fallthru
    _
  %v17 = vld [vmem:[%s0] sm:$0xff]
  %v18 = vld [vmem:[%s0 + $0x8] sm:$0xff]
  %v19 = vld [vmem:[%s0 + $0x10] sm:$0xff]
  %v20 = vld [vmem:[%s0 + $0x18] sm:$0xff]
  %v21 = vld [vmem:[%s0 + $0x20] sm:$0xff]
  %v22 = vld [vmem:[%s0 + $0x28] sm:$0xff]
  %v23 = vld [vmem:[%s0 + $0x30] sm:$0xff]
  %v24 = vld [vmem:[%s0 + $0x38] sm:$0xff]
  %v25 = vld [vmem:[%s1] sm:$0xf]
  %v26 = vld [vmem:[%s1 + $0x4] sm:$0xf]
  %v27 = vld [vmem:[%s1 + $0x8] sm:$0xf]
  %v28 = vld [vmem:[%s1 + $0xc] sm:$0xf]
  %v29 = vld [vmem:[%s1 + $0x10] sm:$0xf]
  %v30 = vld [vmem:[%s1 + $0x14] sm:$0xf]
  %v31 = vld [vmem:[%s1 + $0x18] sm:$0xf]
  %v32 = vld [vmem:[%s1 + $0x1c] sm:$0xf]
  %v33 = vld [vmem:[%s1 + $0x20] sm:$0xf]
  %v34 = vld [vmem:[%s1 + $0x24] sm:$0xf]
  %v35 = vld [vmem:[%s1 + $0x28] sm:$0xf]
  %v36 = vld [vmem:[%s1 + $0x2c] sm:$0xf]
  %v37 = vld [vmem:[%s1 + $0x30] sm:$0xf]
  %v38 = vld [vmem:[%s1 + $0x34] sm:$0xf]
  %v39 = vld [vmem:[%s1 + $0x38] sm:$0xf]
  %v40 = vld [vmem:[%s1 + $0x3c] sm:$0xf]
  %v41 = vld [vmem:[%s1 + $0x40] sm:$0xf]
  %v42 = vld [vmem:[%s1 + $0x44] sm:$0xf]
  %v43 = vld [vmem:[%s1 + $0x48] sm:$0xf]
  %v44 = vld [vmem:[%s1 + $0x4c] sm:$0xf]
  %v45 = vld [vmem:[%s1 + $0x50] sm:$0xf]
  %v46 = vld [vmem:[%s1 + $0x54] sm:$0xf]
  %v47 = vld [vmem:[%s1 + $0x58] sm:$0xf]
  %v48 = vld [vmem:[%s1 + $0x5c] sm:$0xf]
  %v49 = vld [vmem:[%s1 + $0x60] sm:$0xf]
  %v50 = vld [vmem:[%s1 + $0x64] sm:$0xf]
  %v51 = vld [vmem:[%s1 + $0x68] sm:$0xf]
  %v52 = vld [vmem:[%s1 + $0x6c] sm:$0xf]
  %v53 = vld [vmem:[%s1 + $0x70] sm:$0xf]
  %v54 = vld [vmem:[%s1 + $0x74] sm:$0xf]
  %v55 = vld [vmem:[%s1 + $0x78] sm:$0xf]
  %v56 = vld [vmem:[%s1 + $0x7c] sm:$0xf]
  %v57 = vld [vmem:[%s1 + $0x80] sm:$0xf]
  %v58 = vld [vmem:[%s1 + $0x84] sm:$0xf]
  %v59 = vld [vmem:[%s1 + $0x88] sm:$0xf]
  %v60 = vld [vmem:[%s1 + $0x8c] sm:$0xf]
  %v61 = vld [vmem:[%s1 + $0x90] sm:$0xf]
  %v62 = vld [vmem:[%s1 + $0x94] sm:$0xf]
  %v63 = vld [vmem:[%s1 + $0x98] sm:$0xf]
  %v64 = vld [vmem:[%s1 + $0x9c] sm:$0xf]
  %v65 = vld [vmem:[%s1 + $0xa0] sm:$0xf]
  %v66 = vld [vmem:[%s1 + $0xa4] sm:$0xf]
  %v67 = vld [vmem:[%s1 + $0xa8] sm:$0xf]
  %v68 = vld [vmem:[%s1 + $0xac] sm:$0xf]
  %v69 = vld [vmem:[%s1 + $0xb0] sm:$0xf]
  %v70 = vld [vmem:[%s1 + $0xb4] sm:$0xf]
  %v71 = vld [vmem:[%s1 + $0xb8] sm:$0xf]
  %v72 = vld [vmem:[%s1 + $0xbc] sm:$0xf]
  %v73 = vld [vmem:[%s1 + $0xc0] sm:$0xf]
  %v74 = vld [vmem:[%s1 + $0xc4] sm:$0xf]
  %v75 = vld [vmem:[%s1 + $0xc8] sm:$0xf]
  %v76 = vld [vmem:[%s1 + $0xcc] sm:$0xf]
  %v77 = vld [vmem:[%s1 + $0xd0] sm:$0xf]
  %v78 = vld [vmem:[%s1 + $0xd4] sm:$0xf]
  %v79 = vld [vmem:[%s1 + $0xd8] sm:$0xf]
  %v80 = vld [vmem:[%s1 + $0xdc] sm:$0xf]
  %v81 = vld [vmem:[%s1 + $0xe0] sm:$0xf]
  %v82 = vld [vmem:[%s1 + $0xe4] sm:$0xf]
  %v83 = vld [vmem:[%s1 + $0xe8] sm:$0xf]
  %v84 = vld [vmem:[%s1 + $0xec] sm:$0xf]
  %v85 = vld [vmem:[%s1 + $0xf0] sm:$0xf]
  %v86 = vld [vmem:[%s1 + $0xf4] sm:$0xf]
  %v87 = vld [vmem:[%s1 + $0xf8] sm:$0xf]
  %v88 = vld [vmem:[%s1 + $0xfc] sm:$0xf]
  %v97 = vunpack.c.l.b16 %v17
  %v98 = vunpack.c.h.b16 %v17
  %v99 = vunpack.c.l.b16 %v18
  %v100 = vunpack.c.h.b16 %v18
  %v101 = vunpack.c.l.b16 %v19
  %v102 = vunpack.c.h.b16 %v19
  %v103 = vunpack.c.l.b16 %v20
  %v104 = vunpack.c.h.b16 %v20
  %v105 = vunpack.c.l.b16 %v21
  %v106 = vunpack.c.h.b16 %v21
  %v107 = vunpack.c.l.b16 %v22
  %v108 = vunpack.c.h.b16 %v22
  %v109 = vunpack.c.l.b16 %v23
  %v110 = vunpack.c.h.b16 %v23
  %v111 = vunpack.c.l.b16 %v24
  %v112 = vunpack.c.h.b16 %v24
  %v113 = vpack.c.b16 %v101, %v97
  %v114 = vpack.c.b16 %v102, %v98
  %v115 = vpack.c.b16 %v103, %v99
  %v116 = vpack.c.b16 %v104, %v100
  %v117 = vpack.c.b16 %v109, %v105
  %v118 = vpack.c.b16 %v110, %v106
  %v119 = vpack.c.b16 %v111, %v107
  %v120 = vpack.c.b16 %v112, %v108
  %v193 = vunpack.c.l.b16 %v25
  %v194 = vunpack.c.l.b16 %v26
  %v195 = vunpack.c.l.b16 %v27
  %v196 = vunpack.c.l.b16 %v28
  %v197 = vunpack.c.l.b16 %v29
  %v198 = vunpack.c.l.b16 %v30
  %v199 = vunpack.c.l.b16 %v31
  %v200 = vunpack.c.l.b16 %v32
  %v201 = vunpack.c.l.b16 %v33
  %v202 = vunpack.c.l.b16 %v34
  %v203 = vunpack.c.l.b16 %v35
  %v204 = vunpack.c.l.b16 %v36
  %v205 = vunpack.c.l.b16 %v37
  %v206 = vunpack.c.l.b16 %v38
  %v207 = vunpack.c.l.b16 %v39
  %v208 = vunpack.c.l.b16 %v40
  %v209 = vunpack.c.l.b16 %v41
  %v210 = vunpack.c.l.b16 %v42
  %v211 = vunpack.c.l.b16 %v43
  %v212 = vunpack.c.l.b16 %v44
  %v213 = vunpack.c.l.b16 %v45
  %v214 = vunpack.c.l.b16 %v46
  %v215 = vunpack.c.l.b16 %v47
  %v216 = vunpack.c.l.b16 %v48
  %v217 = vunpack.c.l.b16 %v49
  %v218 = vunpack.c.l.b16 %v50
  %v219 = vunpack.c.l.b16 %v51
  %v220 = vunpack.c.l.b16 %v52
  %v221 = vunpack.c.l.b16 %v53
  %v222 = vunpack.c.l.b16 %v54
  %v223 = vunpack.c.l.b16 %v55
  %v224 = vunpack.c.l.b16 %v56
  %v225 = vunpack.c.l.b16 %v57
  %v226 = vunpack.c.l.b16 %v58
  %v227 = vunpack.c.l.b16 %v59
  %v228 = vunpack.c.l.b16 %v60
  %v229 = vunpack.c.l.b16 %v61
  %v230 = vunpack.c.l.b16 %v62
  %v231 = vunpack.c.l.b16 %v63
  %v232 = vunpack.c.l.b16 %v64
  %v233 = vunpack.c.l.b16 %v65
  %v234 = vunpack.c.l.b16 %v66
  %v235 = vunpack.c.l.b16 %v67
  %v236 = vunpack.c.l.b16 %v68
  %v237 = vunpack.c.l.b16 %v69
  %v238 = vunpack.c.l.b16 %v70
  %v239 = vunpack.c.l.b16 %v71
  %v240 = vunpack.c.l.b16 %v72
  %v241 = vunpack.c.l.b16 %v73
  %v242 = vunpack.c.l.b16 %v74
  %v243 = vunpack.c.l.b16 %v75
  %v244 = vunpack.c.l.b16 %v76
  %v245 = vunpack.c.l.b16 %v77
  %v246 = vunpack.c.l.b16 %v78
  %v247 = vunpack.c.l.b16 %v79
  %v248 = vunpack.c.l.b16 %v80
  %v249 = vunpack.c.l.b16 %v81
  %v250 = vunpack.c.l.b16 %v82
  %v251 = vunpack.c.l.b16 %v83
  %v252 = vunpack.c.l.b16 %v84
  %v253 = vunpack.c.l.b16 %v85
  %v254 = vunpack.c.l.b16 %v86
  %v255 = vunpack.c.l.b16 %v87
  %v256 = vunpack.c.l.b16 %v88
  %v257 = vpack.c.b16 %v194, %v193
  %v258 = vpack.c.b16 %v196, %v195
  %v259 = vpack.c.b16 %v198, %v197
  %v260 = vpack.c.b16 %v200, %v199
  %v261 = vpack.c.b16 %v202, %v201
  %v262 = vpack.c.b16 %v204, %v203
  %v263 = vpack.c.b16 %v206, %v205
  %v264 = vpack.c.b16 %v208, %v207
  %v265 = vpack.c.b16 %v210, %v209
  %v266 = vpack.c.b16 %v212, %v211
  %v267 = vpack.c.b16 %v214, %v213
  %v268 = vpack.c.b16 %v216, %v215
  %v269 = vpack.c.b16 %v218, %v217
  %v270 = vpack.c.b16 %v220, %v219
  %v271 = vpack.c.b16 %v222, %v221
  %v272 = vpack.c.b16 %v224, %v223
  %v273 = vpack.c.b16 %v226, %v225
  %v274 = vpack.c.b16 %v228, %v227
  %v275 = vpack.c.b16 %v230, %v229
  %v276 = vpack.c.b16 %v232, %v231
  %v277 = vpack.c.b16 %v234, %v233
  %v278 = vpack.c.b16 %v236, %v235
  %v279 = vpack.c.b16 %v238, %v237
  %v280 = vpack.c.b16 %v240, %v239
  %v281 = vpack.c.b16 %v242, %v241
  %v282 = vpack.c.b16 %v244, %v243
  %v283 = vpack.c.b16 %v246, %v245
  %v284 = vpack.c.b16 %v248, %v247
  %v285 = vpack.c.b16 %v250, %v249
  %v286 = vpack.c.b16 %v252, %v251
  %v287 = vpack.c.b16 %v254, %v253
  %v288 = vpack.c.b16 %v256, %v255
  %321 = vmatpush.bf16.msra.mxu0 %v264
  %322 = vmatpush.bf16.msra.mxu0 %v263
  %323 = vmatpush.bf16.msra.mxu0 %v262
  %324 = vmatpush.bf16.msra.mxu0 %v261
  %325 = vmatpush.bf16.msra.mxu0 %v260
  %326 = vmatpush.bf16.msra.mxu0 %v259
  %327 = vmatpush.bf16.msra.mxu0 %v258
  %328 = vmatpush.bf16.msra.mxu0 %v257
  %329 = vmatmul.bf16.gmra.mxu0 %v113
  %v330 = vpop.f32.mrf.mxu0
  %v331 = vadd.f32 0.0, %v330
  %v332 = vpop.f32.mrf.mxu0
  %v333 = vadd.f32 0.0, %v332
  %334 = vmatmul.bf16.gmra.mxu0 %v117
  %v335 = vpop.f32.mrf.mxu0
  %v336 = vadd.f32 0.0, %v335
  %v337 = vpop.f32.mrf.mxu0
  %v338 = vadd.f32 0.0, %v337
  %339 = vdwg.mxu0
  %340 = vmatpush.bf16.msra.mxu0 %v272
  %341 = vmatpush.bf16.msra.mxu0 %v271
  %342 = vmatpush.bf16.msra.mxu0 %v270
  %343 = vmatpush.bf16.msra.mxu0 %v269
  %344 = vmatpush.bf16.msra.mxu0 %v268
  %345 = vmatpush.bf16.msra.mxu0 %v267
  %346 = vmatpush.bf16.msra.mxu0 %v266
  %347 = vmatpush.bf16.msra.mxu0 %v265
  %348 = vmatmul.bf16.gmra.mxu0 %v114
  %v349 = vpop.f32.mrf.mxu0
  %v350 = vadd.f32 %v331, %v349
  %v351 = vpop.f32.mrf.mxu0
  %v352 = vadd.f32 %v333, %v351
  %353 = vmatmul.bf16.gmra.mxu0 %v118
  %v354 = vpop.f32.mrf.mxu0
  %v355 = vadd.f32 %v336, %v354
  %v356 = vpop.f32.mrf.mxu0
  %v357 = vadd.f32 %v338, %v356
  %358 = vdwg.mxu0
  %359 = vmatpush.bf16.msra.mxu0 %v280
  %360 = vmatpush.bf16.msra.mxu0 %v279
  %361 = vmatpush.bf16.msra.mxu0 %v278
  %362 = vmatpush.bf16.msra.mxu0 %v277
  %363 = vmatpush.bf16.msra.mxu0 %v276
  %364 = vmatpush.bf16.msra.mxu0 %v275
  %365 = vmatpush.bf16.msra.mxu0 %v274
  %366 = vmatpush.bf16.msra.mxu0 %v273
  %367 = vmatmul.bf16.gmra.mxu0 %v115
  %v368 = vpop.f32.mrf.mxu0
  %v369 = vadd.f32 %v350, %v368
  %v370 = vpop.f32.mrf.mxu0
  %v371 = vadd.f32 %v352, %v370
  %372 = vmatmul.bf16.gmra.mxu0 %v119
  %v373 = vpop.f32.mrf.mxu0
  %v374 = vadd.f32 %v355, %v373
  %v375 = vpop.f32.mrf.mxu0
  %v376 = vadd.f32 %v357, %v375
  %377 = vdwg.mxu0
  %378 = vmatpush.bf16.msra.mxu0 %v288
  %379 = vmatpush.bf16.msra.mxu0 %v287
  %380 = vmatpush.bf16.msra.mxu0 %v286
  %381 = vmatpush.bf16.msra.mxu0 %v285
  %382 = vmatpush.bf16.msra.mxu0 %v284
  %383 = vmatpush.bf16.msra.mxu0 %v283
  %384 = vmatpush.bf16.msra.mxu0 %v282
  %385 = vmatpush.bf16.msra.mxu0 %v281
  %386 = vmatmul.bf16.gmra.mxu0 %v116
  %v387 = vpop.f32.mrf.mxu0
  %v388 = vadd.f32 %v369, %v387
  %v389 = vpop.f32.mrf.mxu0
  %v390 = vadd.f32 %v371, %v389
  %391 = vmatmul.bf16.gmra.mxu0 %v120
  %v392 = vpop.f32.mrf.mxu0
  %v393 = vadd.f32 %v374, %v392
  %v394 = vpop.f32.mrf.mxu0
  %v395 = vadd.f32 %v376, %v394
  %396 = vdwg.mxu0
  %vm397 = vcmask 523264
  %v398 = vsel %vm397, %v388, 0.0
  %v399 = vsel %vm397, %v390, 0.0
  %v400 = vadd.f32 %v398, %v399
  %v401 = vsel %vm397, %v393, 0.0
  %v402 = vadd.f32 %v400, %v401
  %v403 = vsel %vm397, %v395, 0.0
  %v404 = vadd.f32 %v402, %v403
  %v405 = vrot.slane %v404, 4
  %v406 = vadd.f32 %v404, %v405
  %v407 = vrot.slane %v406, 2
  %v408 = vadd.f32 %v406, %v407
  %v409 = vrot.slane %v408, 1
  %v410 = vadd.f32 %v408, %v409
  %v411 = vmul.f32 %v410, 0.03125
  %v412 = vsub.f32 %v388, %v411
  %v413 = vsub.f32 %v390, %v411
  %v414 = vsub.f32 %v393, %v411
  %v415 = vsub.f32 %v395, %v411
  %v416 = vmul.f32 %v412, %v412
  %v417 = vmul.f32 %v413, %v413
  %v418 = vmul.f32 %v414, %v414
  %v419 = vmul.f32 %v415, %v415
  %v420 = vsel %vm397, %v416, 0.0
  %v421 = vsel %vm397, %v417, 0.0
  %v422 = vadd.f32 %v420, %v421
  %v423 = vsel %vm397, %v418, 0.0
  %v424 = vadd.f32 %v422, %v423
  %v425 = vsel %vm397, %v419, 0.0
  %v426 = vadd.f32 %v424, %v425
  %v427 = vrot.slane %v426, 4
  %v428 = vadd.f32 %v426, %v427
  %v429 = vrot.slane %v428, 2
  %v430 = vadd.f32 %v428, %v429
  %v431 = vrot.slane %v430, 1
  %v432 = vadd.f32 %v430, %v431
  %v433 = vmul.f32 %v432, 0.03125
  %v434 = vld [vmem:[%s2] sm:$0x1]
  %v435 = vadd.f32 %v433, 1e-05
  %v436 = vrsqrt.pop %v435
  %v437 = vmul.f32 %v436, %v435
  %v438 = vmul.f32 %v437, %v436
  %v439 = vmul.f32 0.5, %v438
  %v440 = vsub.f32 1.5, %v439
  %v441 = vmul.f32 %v436, %v440
  %vm442 = vweird.f32 %v435
  %vm443 = vweird.f32 %v436
  %vm444 = vmor %vm442, %vm443
  %v445 = vsel %vm444, %v436, %v441
  %v446 = vmul.f32 %v434, %v445
  %v448 = vperm.slane %v446, 0
  %v450 = vmul.f32 %v412, %v448
  %v451 = vmul.f32 %v413, %v448
  %v452 = vmul.f32 %v414, %v448
  %v453 = vmul.f32 %v415, %v448
  %v454 = vld [vmem:[%s3] sm:$0x1]
  %v456 = vperm.slane %v454, 0
  %v458 = vadd.f32 %v450, %v456
  %v459 = vadd.f32 %v451, %v456
  %v460 = vadd.f32 %v452, %v456
  %v461 = vadd.f32 %v453, %v456
  %vm462 = vcmp.gt.f32.partialorder %v458, 0.0
  %vm463 = vcmp.gt.f32.partialorder %v459, 0.0
  %vm464 = vcmp.gt.f32.partialorder %v460, 0.0
  %vm465 = vcmp.gt.f32.partialorder %v461, 0.0
  %v466 = vmul.f32 %v458, 0.2
  %v467 = vmul.f32 %v459, 0.2
  %v468 = vmul.f32 %v460, 0.2
  %v469 = vmul.f32 %v461, 0.2
  %v470 = vsel %vm462, %v458, %v466
  %v471 = vsel %vm463, %v459, %v467
  %v472 = vsel %vm464, %v460, %v468
  %v473 = vsel %vm465, %v461, %v469
  %v474 = vpack.c.bf16 %v470, %v470
  %v475 = vpack.c.bf16 %v471, %v471
  %v476 = vpack.c.bf16 %v472, %v472
  %v477 = vpack.c.bf16 %v473, %v473
  %vm478 = vcmask 519168
  %479 = vst.msk [vmem:[%s4] sm:$0xf] %vm478, %v474
  %480 = vst.msk [vmem:[%s4 + $0x4] sm:$0xf] %vm478, %v475
  %481 = vst.msk [vmem:[%s4 + $0x8] sm:$0xf] %vm478, %v476
  %482 = vst.msk [vmem:[%s4 + $0xc] sm:$0xf] %vm478, %v477
  // Predicated region
  $region18: #{discriminator_forward.8} parent=0 // pred_check
    _
  $region19: #{discriminator_forward.8} parent=0 // pred_check_branch
    %484 = sbr.rel (0) target = $region21
  $region20: #{discriminator_forward.8} parent=0 // pred_region
    _
  $region21: #{discriminator_forward.8} parent=0 // pred_fallthru
    _
  // Predicated region
  $region22: #{discriminator_forward.8} parent=0 // pred_check
    _
  $region23: #{discriminator_forward.8} parent=0 // pred_check_branch
    %486 = sbr.rel (0) target = $region25
  $region24: #{discriminator_forward.8} parent=0 // pred_region
    _
  $region25: #{discriminator_forward.8} parent=0 // pred_fallthru
    _

// kernel: discriminator_forward.9
$region0: #{discriminator_forward.9}
  #allocation0 [shape = 'u32[]', space=smem, size = 0x4, offset = 0x4, fixed_abs, tag = 'smem constant byte address 0x4 - core index']
  #allocation1 [shape = 'u32[72,128]{1,0:T(1,128)}', space=vmem, size = 0x9000, scoped, tag = 'internal scratch']
  #allocation2 [shape = 'f32[1,1]{1,0:T(1,128)S(1)}', space=vmem, size = 0x200, scoped, tag = 'scoped memory for discriminator_forward.9']
  %s0 = inlined_call_operand.vmem [shape: bf16[2,1024], index: 0, kind: input, shape index: {}]
  %s1 = inlined_call_operand.vmem [shape: bf16[1024,1], index: 1, kind: input, shape index: {}]
  %s2 = inlined_call_operand.<no memory space> [shape: f32[1,1], index: 2, kind: input, shape index: {}]
  %s3 = inlined_call_operand.vmem [shape: f32[2,1], index: 3, kind: output, shape index: {}]
  %s4 = sld [smem:[#allocation0]]
  $region22: #{discriminator_forward.9} parent=0
    _
  %s6 = ssub.s32 1, %s4
  %s7 = scalar_select 0, %s6, %s4
  %v8 = vstv %s2
  %9 = vst [vmem:[#allocation2] sm:$0x1] %v8
  // Predicated region
  $region2: #{discriminator_forward.9} parent=0 // pred_check
    _
  $region3: #{discriminator_forward.9} parent=0 // pred_check_branch
    %11 = sbr.rel (0) target = $region5
  $region4: #{discriminator_forward.9} parent=0 // pred_region
    _
  $region5: #{discriminator_forward.9} parent=0 // pred_fallthru
    _
  // Predicated region
  $region6: #{discriminator_forward.9} parent=0 // pred_check
    _
  $region7: #{discriminator_forward.9} parent=0 // pred_check_branch
    %13 = sbr.rel (0) target = $region9
  $region8: #{discriminator_forward.9} parent=0 // pred_region
    _
  $region9: #{discriminator_forward.9} parent=0 // pred_fallthru
    _
  // Predicated region
  $region10: #{discriminator_forward.9} parent=0 // pred_check
    _
  $region11: #{discriminator_forward.9} parent=0 // pred_check_branch
    %15 = sbr.rel (0) target = $region13
  $region12: #{discriminator_forward.9} parent=0 // pred_region
    _
  $region13: #{discriminator_forward.9} parent=0 // pred_fallthru
    _
  %v16 = vld [vmem:[%s0] sm:$0xff]
  %v17 = vld [vmem:[%s1] sm:$0xf]
  %v18 = vld [vmem:[%s1 + $0x4] sm:$0xf]
  %v19 = vld [vmem:[%s1 + $0x8] sm:$0xf]
  %v20 = vld [vmem:[%s1 + $0xc] sm:$0xf]
  %v21 = vld [vmem:[%s1 + $0x10] sm:$0xf]
  %v22 = vld [vmem:[%s1 + $0x14] sm:$0xf]
  %v23 = vld [vmem:[%s1 + $0x18] sm:$0xf]
  %v24 = vld [vmem:[%s1 + $0x1c] sm:$0xf]
  %v25 = vld [vmem:[%s1 + $0x20] sm:$0xf]
  %v26 = vld [vmem:[%s1 + $0x24] sm:$0xf]
  %v27 = vld [vmem:[%s1 + $0x28] sm:$0xf]
  %v28 = vld [vmem:[%s1 + $0x2c] sm:$0xf]
  %v29 = vld [vmem:[%s1 + $0x30] sm:$0xf]
  %v30 = vld [vmem:[%s1 + $0x34] sm:$0xf]
  %v31 = vld [vmem:[%s1 + $0x38] sm:$0xf]
  %v32 = vld [vmem:[%s1 + $0x3c] sm:$0xf]
  %v33 = vld [vmem:[%s1 + $0x40] sm:$0xf]
  %v34 = vld [vmem:[%s1 + $0x44] sm:$0xf]
  %v35 = vld [vmem:[%s1 + $0x48] sm:$0xf]
  %v36 = vld [vmem:[%s1 + $0x4c] sm:$0xf]
  %v37 = vld [vmem:[%s1 + $0x50] sm:$0xf]
  %v38 = vld [vmem:[%s1 + $0x54] sm:$0xf]
  %v39 = vld [vmem:[%s1 + $0x58] sm:$0xf]
  %v40 = vld [vmem:[%s1 + $0x5c] sm:$0xf]
  %v41 = vld [vmem:[%s1 + $0x60] sm:$0xf]
  %v42 = vld [vmem:[%s1 + $0x64] sm:$0xf]
  %v43 = vld [vmem:[%s1 + $0x68] sm:$0xf]
  %v44 = vld [vmem:[%s1 + $0x6c] sm:$0xf]
  %v45 = vld [vmem:[%s1 + $0x70] sm:$0xf]
  %v46 = vld [vmem:[%s1 + $0x74] sm:$0xf]
  %v47 = vld [vmem:[%s1 + $0x78] sm:$0xf]
  %v48 = vld [vmem:[%s1 + $0x7c] sm:$0xf]
  %v49 = vld [vmem:[%s1 + $0x80] sm:$0xf]
  %v50 = vld [vmem:[%s1 + $0x84] sm:$0xf]
  %v51 = vld [vmem:[%s1 + $0x88] sm:$0xf]
  %v52 = vld [vmem:[%s1 + $0x8c] sm:$0xf]
  %v53 = vld [vmem:[%s1 + $0x90] sm:$0xf]
  %v54 = vld [vmem:[%s1 + $0x94] sm:$0xf]
  %v55 = vld [vmem:[%s1 + $0x98] sm:$0xf]
  %v56 = vld [vmem:[%s1 + $0x9c] sm:$0xf]
  %v57 = vld [vmem:[%s1 + $0xa0] sm:$0xf]
  %v58 = vld [vmem:[%s1 + $0xa4] sm:$0xf]
  %v59 = vld [vmem:[%s1 + $0xa8] sm:$0xf]
  %v60 = vld [vmem:[%s1 + $0xac] sm:$0xf]
  %v61 = vld [vmem:[%s1 + $0xb0] sm:$0xf]
  %v62 = vld [vmem:[%s1 + $0xb4] sm:$0xf]
  %v63 = vld [vmem:[%s1 + $0xb8] sm:$0xf]
  %v64 = vld [vmem:[%s1 + $0xbc] sm:$0xf]
  %v65 = vld [vmem:[%s1 + $0xc0] sm:$0xf]
  %v66 = vld [vmem:[%s1 + $0xc4] sm:$0xf]
  %v67 = vld [vmem:[%s1 + $0xc8] sm:$0xf]
  %v68 = vld [vmem:[%s1 + $0xcc] sm:$0xf]
  %v69 = vld [vmem:[%s1 + $0xd0] sm:$0xf]
  %v70 = vld [vmem:[%s1 + $0xd4] sm:$0xf]
  %v71 = vld [vmem:[%s1 + $0xd8] sm:$0xf]
  %v72 = vld [vmem:[%s1 + $0xdc] sm:$0xf]
  %v73 = vld [vmem:[%s1 + $0xe0] sm:$0xf]
  %v74 = vld [vmem:[%s1 + $0xe4] sm:$0xf]
  %v75 = vld [vmem:[%s1 + $0xe8] sm:$0xf]
  %v76 = vld [vmem:[%s1 + $0xec] sm:$0xf]
  %v77 = vld [vmem:[%s1 + $0xf0] sm:$0xf]
  %v78 = vld [vmem:[%s1 + $0xf4] sm:$0xf]
  %v79 = vld [vmem:[%s1 + $0xf8] sm:$0xf]
  %v80 = vld [vmem:[%s1 + $0xfc] sm:$0xf]
  %v81 = vld [vmem:[%s1 + $0x100] sm:$0xf]
  %v82 = vld [vmem:[%s1 + $0x104] sm:$0xf]
  %v83 = vld [vmem:[%s1 + $0x108] sm:$0xf]
  %v84 = vld [vmem:[%s1 + $0x10c] sm:$0xf]
  %v85 = vld [vmem:[%s1 + $0x110] sm:$0xf]
  %v86 = vld [vmem:[%s1 + $0x114] sm:$0xf]
  %v87 = vld [vmem:[%s1 + $0x118] sm:$0xf]
  %v88 = vld [vmem:[%s1 + $0x11c] sm:$0xf]
  %v89 = vld [vmem:[%s1 + $0x120] sm:$0xf]
  %v90 = vld [vmem:[%s1 + $0x124] sm:$0xf]
  %v91 = vld [vmem:[%s1 + $0x128] sm:$0xf]
  %v92 = vld [vmem:[%s1 + $0x12c] sm:$0xf]
  %v93 = vld [vmem:[%s1 + $0x130] sm:$0xf]
  %v94 = vld [vmem:[%s1 + $0x134] sm:$0xf]
  %v95 = vld [vmem:[%s1 + $0x138] sm:$0xf]
  %v96 = vld [vmem:[%s1 + $0x13c] sm:$0xf]
  %v97 = vld [vmem:[%s1 + $0x140] sm:$0xf]
  %v98 = vld [vmem:[%s1 + $0x144] sm:$0xf]
  %v99 = vld [vmem:[%s1 + $0x148] sm:$0xf]
  %v100 = vld [vmem:[%s1 + $0x14c] sm:$0xf]
  %v101 = vld [vmem:[%s1 + $0x150] sm:$0xf]
  %v102 = vld [vmem:[%s1 + $0x154] sm:$0xf]
  %v103 = vld [vmem:[%s1 + $0x158] sm:$0xf]
  %v104 = vld [vmem:[%s1 + $0x15c] sm:$0xf]
  %v105 = vld [vmem:[%s1 + $0x160] sm:$0xf]
  %v106 = vld [vmem:[%s1 + $0x164] sm:$0xf]
  %v107 = vld [vmem:[%s1 + $0x168] sm:$0xf]
  %v108 = vld [vmem:[%s1 + $0x16c] sm:$0xf]
  %v109 = vld [vmem:[%s1 + $0x170] sm:$0xf]
  %v110 = vld [vmem:[%s1 + $0x174] sm:$0xf]
  %v111 = vld [vmem:[%s1 + $0x178] sm:$0xf]
  %v112 = vld [vmem:[%s1 + $0x17c] sm:$0xf]
  %v113 = vld [vmem:[%s1 + $0x180] sm:$0xf]
  %v114 = vld [vmem:[%s1 + $0x184] sm:$0xf]
  %v115 = vld [vmem:[%s1 + $0x188] sm:$0xf]
  %v116 = vld [vmem:[%s1 + $0x18c] sm:$0xf]
  %v117 = vld [vmem:[%s1 + $0x190] sm:$0xf]
  %v118 = vld [vmem:[%s1 + $0x194] sm:$0xf]
  %v119 = vld [vmem:[%s1 + $0x198] sm:$0xf]
  %v120 = vld [vmem:[%s1 + $0x19c] sm:$0xf]
  %v121 = vld [vmem:[%s1 + $0x1a0] sm:$0xf]
  %v122 = vld [vmem:[%s1 + $0x1a4] sm:$0xf]
  %v123 = vld [vmem:[%s1 + $0x1a8] sm:$0xf]
  %v124 = vld [vmem:[%s1 + $0x1ac] sm:$0xf]
  %v125 = vld [vmem:[%s1 + $0x1b0] sm:$0xf]
  %v126 = vld [vmem:[%s1 + $0x1b4] sm:$0xf]
  %v127 = vld [vmem:[%s1 + $0x1b8] sm:$0xf]
  %v128 = vld [vmem:[%s1 + $0x1bc] sm:$0xf]
  %v129 = vld [vmem:[%s1 + $0x1c0] sm:$0xf]
  %v130 = vld [vmem:[%s1 + $0x1c4] sm:$0xf]
  %v131 = vld [vmem:[%s1 + $0x1c8] sm:$0xf]
  %v132 = vld [vmem:[%s1 + $0x1cc] sm:$0xf]
  %v133 = vld [vmem:[%s1 + $0x1d0] sm:$0xf]
  %v134 = vld [vmem:[%s1 + $0x1d4] sm:$0xf]
  %v135 = vld [vmem:[%s1 + $0x1d8] sm:$0xf]
  %v136 = vld [vmem:[%s1 + $0x1dc] sm:$0xf]
  %v137 = vld [vmem:[%s1 + $0x1e0] sm:$0xf]
  %v138 = vld [vmem:[%s1 + $0x1e4] sm:$0xf]
  %v139 = vld [vmem:[%s1 + $0x1e8] sm:$0xf]
  %v140 = vld [vmem:[%s1 + $0x1ec] sm:$0xf]
  %v141 = vld [vmem:[%s1 + $0x1f0] sm:$0xf]
  %v142 = vld [vmem:[%s1 + $0x1f4] sm:$0xf]
  %v143 = vld [vmem:[%s1 + $0x1f8] sm:$0xf]
  %v144 = vld [vmem:[%s1 + $0x1fc] sm:$0xf]
  %v145 = vld [vmem:[#allocation2] sm:$0x1]
  %v147 = vperm.slane %v145, 0
  %150 = vst [vmem:[#allocation1] ss:$9 sm:$0xff] %v16
  %v151 = vld [vmem:[#allocation1] sm:$0xff]
  %v152 = vld [vmem:[#allocation1 + $0x9] sm:$0xff]
  %v153 = vld [vmem:[#allocation1 + $0x12] sm:$0xff]
  %v154 = vld [vmem:[#allocation1 + $0x1b] sm:$0xff]
  %v155 = vld [vmem:[#allocation1 + $0x24] sm:$0xff]
  %v156 = vld [vmem:[#allocation1 + $0x2d] sm:$0xff]
  %v157 = vld [vmem:[#allocation1 + $0x36] sm:$0xff]
  %v158 = vld [vmem:[#allocation1 + $0x3f] sm:$0xff]
  %v295 = vunpack.c.l.b16 %v17
  %v296 = vunpack.c.l.b16 %v18
  %v297 = vunpack.c.l.b16 %v19
  %v298 = vunpack.c.l.b16 %v20
  %v299 = vunpack.c.l.b16 %v21
  %v300 = vunpack.c.l.b16 %v22
  %v301 = vunpack.c.l.b16 %v23
  %v302 = vunpack.c.l.b16 %v24
  %v303 = vunpack.c.l.b16 %v25
  %v304 = vunpack.c.l.b16 %v26
  %v305 = vunpack.c.l.b16 %v27
  %v306 = vunpack.c.l.b16 %v28
  %v307 = vunpack.c.l.b16 %v29
  %v308 = vunpack.c.l.b16 %v30
  %v309 = vunpack.c.l.b16 %v31
  %v310 = vunpack.c.l.b16 %v32
  %v311 = vunpack.c.l.b16 %v33
  %v312 = vunpack.c.l.b16 %v34
  %v313 = vunpack.c.l.b16 %v35
  %v314 = vunpack.c.l.b16 %v36
  %v315 = vunpack.c.l.b16 %v37
  %v316 = vunpack.c.l.b16 %v38
  %v317 = vunpack.c.l.b16 %v39
  %v318 = vunpack.c.l.b16 %v40
  %v319 = vunpack.c.l.b16 %v41
  %v320 = vunpack.c.l.b16 %v42
  %v321 = vunpack.c.l.b16 %v43
  %v322 = vunpack.c.l.b16 %v44
  %v323 = vunpack.c.l.b16 %v45
  %v324 = vunpack.c.l.b16 %v46
  %v325 = vunpack.c.l.b16 %v47
  %v326 = vunpack.c.l.b16 %v48
  %v327 = vunpack.c.l.b16 %v49
  %v328 = vunpack.c.l.b16 %v50
  %v329 = vunpack.c.l.b16 %v51
  %v330 = vunpack.c.l.b16 %v52
  %v331 = vunpack.c.l.b16 %v53
  %v332 = vunpack.c.l.b16 %v54
  %v333 = vunpack.c.l.b16 %v55
  %v334 = vunpack.c.l.b16 %v56
  %v335 = vunpack.c.l.b16 %v57
  %v336 = vunpack.c.l.b16 %v58
  %v337 = vunpack.c.l.b16 %v59
  %v338 = vunpack.c.l.b16 %v60
  %v339 = vunpack.c.l.b16 %v61
  %v340 = vunpack.c.l.b16 %v62
  %v341 = vunpack.c.l.b16 %v63
  %v342 = vunpack.c.l.b16 %v64
  %v343 = vunpack.c.l.b16 %v65
  %v344 = vunpack.c.l.b16 %v66
  %v345 = vunpack.c.l.b16 %v67
  %v346 = vunpack.c.l.b16 %v68
  %v347 = vunpack.c.l.b16 %v69
  %v348 = vunpack.c.l.b16 %v70
  %v349 = vunpack.c.l.b16 %v71
  %v350 = vunpack.c.l.b16 %v72
  %v351 = vunpack.c.l.b16 %v73
  %v352 = vunpack.c.l.b16 %v74
  %v353 = vunpack.c.l.b16 %v75
  %v354 = vunpack.c.l.b16 %v76
  %v355 = vunpack.c.l.b16 %v77
  %v356 = vunpack.c.l.b16 %v78
  %v357 = vunpack.c.l.b16 %v79
  %v358 = vunpack.c.l.b16 %v80
  %v359 = vunpack.c.l.b16 %v81
  %v360 = vunpack.c.l.b16 %v82
  %v361 = vunpack.c.l.b16 %v83
  %v362 = vunpack.c.l.b16 %v84
  %v363 = vunpack.c.l.b16 %v85
  %v364 = vunpack.c.l.b16 %v86
  %v365 = vunpack.c.l.b16 %v87
  %v366 = vunpack.c.l.b16 %v88
  %v367 = vunpack.c.l.b16 %v89
  %v368 = vunpack.c.l.b16 %v90
  %v369 = vunpack.c.l.b16 %v91
  %v370 = vunpack.c.l.b16 %v92
  %v371 = vunpack.c.l.b16 %v93
  %v372 = vunpack.c.l.b16 %v94
  %v373 = vunpack.c.l.b16 %v95
  %v374 = vunpack.c.l.b16 %v96
  %v375 = vunpack.c.l.b16 %v97
  %v376 = vunpack.c.l.b16 %v98
  %v377 = vunpack.c.l.b16 %v99
  %v378 = vunpack.c.l.b16 %v100
  %v379 = vunpack.c.l.b16 %v101
  %v380 = vunpack.c.l.b16 %v102
  %v381 = vunpack.c.l.b16 %v103
  %v382 = vunpack.c.l.b16 %v104
  %v383 = vunpack.c.l.b16 %v105
  %v384 = vunpack.c.l.b16 %v106
  %v385 = vunpack.c.l.b16 %v107
  %v386 = vunpack.c.l.b16 %v108
  %v387 = vunpack.c.l.b16 %v109
  %v388 = vunpack.c.l.b16 %v110
  %v389 = vunpack.c.l.b16 %v111
  %v390 = vunpack.c.l.b16 %v112
  %v391 = vunpack.c.l.b16 %v113
  %v392 = vunpack.c.l.b16 %v114
  %v393 = vunpack.c.l.b16 %v115
  %v394 = vunpack.c.l.b16 %v116
  %v395 = vunpack.c.l.b16 %v117
  %v396 = vunpack.c.l.b16 %v118
  %v397 = vunpack.c.l.b16 %v119
  %v398 = vunpack.c.l.b16 %v120
  %v399 = vunpack.c.l.b16 %v121
  %v400 = vunpack.c.l.b16 %v122
  %v401 = vunpack.c.l.b16 %v123
  %v402 = vunpack.c.l.b16 %v124
  %v403 = vunpack.c.l.b16 %v125
  %v404 = vunpack.c.l.b16 %v126
  %v405 = vunpack.c.l.b16 %v127
  %v406 = vunpack.c.l.b16 %v128
  %v407 = vunpack.c.l.b16 %v129
  %v408 = vunpack.c.l.b16 %v130
  %v409 = vunpack.c.l.b16 %v131
  %v410 = vunpack.c.l.b16 %v132
  %v411 = vunpack.c.l.b16 %v133
  %v412 = vunpack.c.l.b16 %v134
  %v413 = vunpack.c.l.b16 %v135
  %v414 = vunpack.c.l.b16 %v136
  %v415 = vunpack.c.l.b16 %v137
  %v416 = vunpack.c.l.b16 %v138
  %v417 = vunpack.c.l.b16 %v139
  %v418 = vunpack.c.l.b16 %v140
  %v419 = vunpack.c.l.b16 %v141
  %v420 = vunpack.c.l.b16 %v142
  %v421 = vunpack.c.l.b16 %v143
  %v422 = vunpack.c.l.b16 %v144
  %v423 = vpack.c.b16 %v296, %v295
  %v424 = vpack.c.b16 %v298, %v297
  %v425 = vpack.c.b16 %v300, %v299
  %v426 = vpack.c.b16 %v302, %v301
  %v427 = vpack.c.b16 %v304, %v303
  %v428 = vpack.c.b16 %v306, %v305
  %v429 = vpack.c.b16 %v308, %v307
  %v430 = vpack.c.b16 %v310, %v309
  %v431 = vpack.c.b16 %v312, %v311
  %v432 = vpack.c.b16 %v314, %v313
  %v433 = vpack.c.b16 %v316, %v315
  %v434 = vpack.c.b16 %v318, %v317
  %v435 = vpack.c.b16 %v320, %v319
  %v436 = vpack.c.b16 %v322, %v321
  %v437 = vpack.c.b16 %v324, %v323
  %v438 = vpack.c.b16 %v326, %v325
  %v439 = vpack.c.b16 %v328, %v327
  %v440 = vpack.c.b16 %v330, %v329
  %v441 = vpack.c.b16 %v332, %v331
  %v442 = vpack.c.b16 %v334, %v333
  %v443 = vpack.c.b16 %v336, %v335
  %v444 = vpack.c.b16 %v338, %v337
  %v445 = vpack.c.b16 %v340, %v339
  %v446 = vpack.c.b16 %v342, %v341
  %v447 = vpack.c.b16 %v344, %v343
  %v448 = vpack.c.b16 %v346, %v345
  %v449 = vpack.c.b16 %v348, %v347
  %v450 = vpack.c.b16 %v350, %v349
  %v451 = vpack.c.b16 %v352, %v351
  %v452 = vpack.c.b16 %v354, %v353
  %v453 = vpack.c.b16 %v356, %v355
  %v454 = vpack.c.b16 %v358, %v357
  %v455 = vpack.c.b16 %v360, %v359
  %v456 = vpack.c.b16 %v362, %v361
  %v457 = vpack.c.b16 %v364, %v363
  %v458 = vpack.c.b16 %v366, %v365
  %v459 = vpack.c.b16 %v368, %v367
  %v460 = vpack.c.b16 %v370, %v369
  %v461 = vpack.c.b16 %v372, %v371
  %v462 = vpack.c.b16 %v374, %v373
  %v463 = vpack.c.b16 %v376, %v375
  %v464 = vpack.c.b16 %v378, %v377
  %v465 = vpack.c.b16 %v380, %v379
  %v466 = vpack.c.b16 %v382, %v381
  %v467 = vpack.c.b16 %v384, %v383
  %v468 = vpack.c.b16 %v386, %v385
  %v469 = vpack.c.b16 %v388, %v387
  %v470 = vpack.c.b16 %v390, %v389
  %v471 = vpack.c.b16 %v392, %v391
  %v472 = vpack.c.b16 %v394, %v393
  %v473 = vpack.c.b16 %v396, %v395
  %v474 = vpack.c.b16 %v398, %v397
  %v475 = vpack.c.b16 %v400, %v399
  %v476 = vpack.c.b16 %v402, %v401
  %v477 = vpack.c.b16 %v404, %v403
  %v478 = vpack.c.b16 %v406, %v405
  %v479 = vpack.c.b16 %v408, %v407
  %v480 = vpack.c.b16 %v410, %v409
  %v481 = vpack.c.b16 %v412, %v411
  %v482 = vpack.c.b16 %v414, %v413
  %v483 = vpack.c.b16 %v416, %v415
  %v484 = vpack.c.b16 %v418, %v417
  %v485 = vpack.c.b16 %v420, %v419
  %v486 = vpack.c.b16 %v422, %v421
  %551 = vmatpush.bf16.msra.mxu0 %v430
  %552 = vmatpush.bf16.msra.mxu0 %v429
  %553 = vmatpush.bf16.msra.mxu0 %v428
  %554 = vmatpush.bf16.msra.mxu0 %v427
  %555 = vmatpush.bf16.msra.mxu0 %v426
  %556 = vmatpush.bf16.msra.mxu0 %v425
  %557 = vmatpush.bf16.msra.mxu0 %v424
  %558 = vmatpush.bf16.msra.mxu0 %v423
  %559 = vmatmul.bf16.gmra.mxu0 %v151
  %v560 = vpop.f32.mrf.mxu0
  %v561 = vadd.f32 %v147, %v560
  %v562 = vpop.f32.mrf.mxu0
  %563 = vdwg.mxu0
  %564 = vmatpush.bf16.msra.mxu0 %v438
  %565 = vmatpush.bf16.msra.mxu0 %v437
  %566 = vmatpush.bf16.msra.mxu0 %v436
  %567 = vmatpush.bf16.msra.mxu0 %v435
  %568 = vmatpush.bf16.msra.mxu0 %v434
  %569 = vmatpush.bf16.msra.mxu0 %v433
  %570 = vmatpush.bf16.msra.mxu0 %v432
  %571 = vmatpush.bf16.msra.mxu0 %v431
  %572 = vmatmul.bf16.gmra.mxu0 %v152
  %v573 = vpop.f32.mrf.mxu0
  %v574 = vadd.f32 %v561, %v573
  %v575 = vpop.f32.mrf.mxu0
  %576 = vdwg.mxu0
  %577 = vmatpush.bf16.msra.mxu0 %v446
  %578 = vmatpush.bf16.msra.mxu0 %v445
  %579 = vmatpush.bf16.msra.mxu0 %v444
  %580 = vmatpush.bf16.msra.mxu0 %v443
  %581 = vmatpush.bf16.msra.mxu0 %v442
  %582 = vmatpush.bf16.msra.mxu0 %v441
  %583 = vmatpush.bf16.msra.mxu0 %v440
  %584 = vmatpush.bf16.msra.mxu0 %v439
  %585 = vmatmul.bf16.gmra.mxu0 %v153
  %v586 = vpop.f32.mrf.mxu0
  %v587 = vadd.f32 %v574, %v586
  %v588 = vpop.f32.mrf.mxu0
  %589 = vdwg.mxu0
  %590 = vmatpush.bf16.msra.mxu0 %v454
  %591 = vmatpush.bf16.msra.mxu0 %v453
  %592 = vmatpush.bf16.msra.mxu0 %v452
  %593 = vmatpush.bf16.msra.mxu0 %v451
  %594 = vmatpush.bf16.msra.mxu0 %v450
  %595 = vmatpush.bf16.msra.mxu0 %v449
  %596 = vmatpush.bf16.msra.mxu0 %v448
  %597 = vmatpush.bf16.msra.mxu0 %v447
  %598 = vmatmul.bf16.gmra.mxu0 %v154
  %v599 = vpop.f32.mrf.mxu0
  %v600 = vadd.f32 %v587, %v599
  %v601 = vpop.f32.mrf.mxu0
  %602 = vdwg.mxu0
  %603 = vmatpush.bf16.msra.mxu0 %v462
  %604 = vmatpush.bf16.msra.mxu0 %v461
  %605 = vmatpush.bf16.msra.mxu0 %v460
  %606 = vmatpush.bf16.msra.mxu0 %v459
  %607 = vmatpush.bf16.msra.mxu0 %v458
  %608 = vmatpush.bf16.msra.mxu0 %v457
  %609 = vmatpush.bf16.msra.mxu0 %v456
  %610 = vmatpush.bf16.msra.mxu0 %v455
  %611 = vmatmul.bf16.gmra.mxu0 %v155
  %v612 = vpop.f32.mrf.mxu0
  %v613 = vadd.f32 %v600, %v612
  %v614 = vpop.f32.mrf.mxu0
  %615 = vdwg.mxu0
  %616 = vmatpush.bf16.msra.mxu0 %v470
  %617 = vmatpush.bf16.msra.mxu0 %v469
  %618 = vmatpush.bf16.msra.mxu0 %v468
  %619 = vmatpush.bf16.msra.mxu0 %v467
  %620 = vmatpush.bf16.msra.mxu0 %v466
  %621 = vmatpush.bf16.msra.mxu0 %v465
  %622 = vmatpush.bf16.msra.mxu0 %v464
  %623 = vmatpush.bf16.msra.mxu0 %v463
  %624 = vmatmul.bf16.gmra.mxu0 %v156
  %v625 = vpop.f32.mrf.mxu0
  %v626 = vadd.f32 %v613, %v625
  %v627 = vpop.f32.mrf.mxu0
  %628 = vdwg.mxu0
  %629 = vmatpush.bf16.msra.mxu0 %v478
  %630 = vmatpush.bf16.msra.mxu0 %v477
  %631 = vmatpush.bf16.msra.mxu0 %v476
  %632 = vmatpush.bf16.msra.mxu0 %v475
  %633 = vmatpush.bf16.msra.mxu0 %v474
  %634 = vmatpush.bf16.msra.mxu0 %v473
  %635 = vmatpush.bf16.msra.mxu0 %v472
  %636 = vmatpush.bf16.msra.mxu0 %v471
  %637 = vmatmul.bf16.gmra.mxu0 %v157
  %v638 = vpop.f32.mrf.mxu0
  %v639 = vadd.f32 %v626, %v638
  %v640 = vpop.f32.mrf.mxu0
  %641 = vdwg.mxu0
  %642 = vmatpush.bf16.msra.mxu0 %v486
  %643 = vmatpush.bf16.msra.mxu0 %v485
  %644 = vmatpush.bf16.msra.mxu0 %v484
  %645 = vmatpush.bf16.msra.mxu0 %v483
  %646 = vmatpush.bf16.msra.mxu0 %v482
  %647 = vmatpush.bf16.msra.mxu0 %v481
  %648 = vmatpush.bf16.msra.mxu0 %v480
  %649 = vmatpush.bf16.msra.mxu0 %v479
  %650 = vmatmul.bf16.gmra.mxu0 %v158
  %v651 = vpop.f32.mrf.mxu0
  %v652 = vadd.f32 %v639, %v651
  %v653 = vpop.f32.mrf.mxu0
  %654 = vdwg.mxu0
  %v655 = vsub.f32 0.0, %v652
  %v656 = vmul.f32 %v655, 1.442695
  %v657 = vpow.pop %v656
  %v658 = vadd.f32 %v657, 1.0
  %v659 = vrcp.pop %v658
  %v660 = vmul.f32 %v658, %v659
  %v661 = vsub.f32 1.0, %v660
  %v662 = vmul.f32 %v659, %v661
  %v663 = vadd.f32 %v659, %v662
  %vm664 = vweird.f32 %v658
  %vm665 = vweird.f32 %v659
  %vm666 = vmor %vm664, %vm665
  %v667 = vsel %vm666, %v659, %v663
  %v668 = vand.u32 2147483647, %v658
  %vm669 = vcmp.eq.f32.partialorder %v668, 8.507059e+37
  %v670 = vand.u32 %v658, 2147483648
  %v671 = vor.u32 1.1754944e-38, %v670
  %v672 = vsel %vm669, %v671, %v667
  %v673 = vmul.f32 1.0, %v672
  %vm674 = vcmask 1024
  %675 = vst.msk [vmem:[%s3] sm:$0x3] %vm674, %v673
  // Predicated region
  $region14: #{discriminator_forward.9} parent=0 // pred_check
    _
  $region15: #{discriminator_forward.9} parent=0 // pred_check_branch
    %677 = sbr.rel (0) target = $region17
  $region16: #{discriminator_forward.9} parent=0 // pred_region
    _
  $region17: #{discriminator_forward.9} parent=0 // pred_fallthru
    _
  // Predicated region
  $region18: #{discriminator_forward.9} parent=0 // pred_check
    _
  $region19: #{discriminator_forward.9} parent=0 // pred_check_branch
    %679 = sbr.rel (0) target = $region21
  $region20: #{discriminator_forward.9} parent=0 // pred_region
    _
  $region21: #{discriminator_forward.9} parent=0 // pred_fallthru
    _

</llo_original>
